<compile_context>
chip_gen: v6e
topology: v6e:2x2x1
jax: 0.10.0
libtpu: 0.0.40
codegen_flags: <defaults>
</compile_context>

<pallas_src>
import math
import jax
import jax.numpy as jnp
from jax.experimental import pallas as pl
from jax.experimental.pallas import tpu as pltpu

# ---------------- problem sizes (small, consistent with the module) ----------
B = 2          # batch
S = 8          # sequence length
D = 32         # embed_dim
H = 4          # n_heads
DH = D // H    # head dim
F = 64         # ff_hidden
EPS = 1e-5     # LayerNorm eps (PyTorch default)


def encoder_layer_kernel(
    x_ref, mask_ref,
    wq_ref, bq_ref, wk_ref, bk_ref, wv_ref, bv_ref, wo_ref, bo_ref,
    g1_ref, be1_ref, g2_ref, be2_ref,
    w1_ref, c1_ref, w2_ref, c2_ref,
    o_ref,
):
    f32 = jnp.float32
    x = x_ref[...].astype(f32)        # (B, S, D)
    mask = mask_ref[...].astype(f32)  # (B, 1, S)  1.0 = keep, 0.0 = pad

    # ---- additive attention-mask bias, computed once (hoisted) --------------
    bias = jnp.where(mask == 0.0, -1e9, 0.0)                           # (B, 1, S)
    bias_n = jnp.broadcast_to(bias[:, None], (B, H, 1, S)).reshape(B * H, 1, S)

    # ---- head-batched Q/K/V projections (one dot_general each) --------------
    # Weights arrive already split per head ((H, D, DH) / (H, 1, DH)); the
    # kernel only replicates them along cheap leading (major) dims -- the
    # lane axis is never sliced or shuffled.
    def rep(w):  # (H, ...) -> (B*H, ...)
        return jnp.broadcast_to(w[None], (B,) + w.shape).reshape((B * H,) + w.shape[1:])

    xb = jnp.broadcast_to(x[:, None], (B, H, S, D)).reshape(B * H, S, D)

    q = jnp.einsum("nsd,ndh->nsh", xb, rep(wq_ref[...]),
                   preferred_element_type=f32) + rep(bq_ref[...])       # (B*H, S, DH)
    k = jnp.einsum("nsd,ndh->nsh", xb, rep(wk_ref[...]),
                   preferred_element_type=f32) + rep(bk_ref[...])
    v = jnp.einsum("nsd,ndh->nsh", xb, rep(wv_ref[...]),
                   preferred_element_type=f32) + rep(bv_ref[...])

    # ---- scaled dot-product attention (contract on DH; no explicit .T) ------
    scale = 1.0 / math.sqrt(DH)
    scores = jnp.einsum("nqh,nkh->nqk", q, k,
                        preferred_element_type=f32) * scale             # (B*H, S, S)
    scores = scores + bias_n
    scores = scores - jnp.max(scores, axis=-1, keepdims=True)
    p = jnp.exp(scores)
    p = p * pl.reciprocal(jnp.sum(p, axis=-1, keepdims=True), approx=True)
    ctx = jnp.einsum("nqk,nkh->nqh", p, v,
                     preferred_element_type=f32)                        # (B*H, S, DH)

    # ---- output projection: per-head matmul, then sum over heads ------------
    proj = jnp.einsum("nsh,nhd->nsd", ctx, rep(wo_ref[...]),
                      preferred_element_type=f32)                       # (B*H, S, D)
    attn = jnp.sum(proj.reshape(B, H, S, D), axis=1) + bo_ref[...]      # (B, S, D)

    # ---- residual + LayerNorm 1 (rows flattened; lane reductions only) ------
    x2 = x.reshape(B * S, D)
    y = x2 + attn.reshape(B * S, D)
    mu = jnp.mean(y, axis=-1, keepdims=True)
    var = jnp.mean((y - mu) * (y - mu), axis=-1, keepdims=True)
    y = (y - mu) * jax.lax.rsqrt(var + EPS) * g1_ref[...] + be1_ref[...]

    # ---- position-wise feed forward ------------------------------------------
    h1 = jnp.dot(y, w1_ref[...], preferred_element_type=f32) + c1_ref[...]
    h1 = jnp.maximum(h1, 0.0)
    ff = jnp.dot(h1, w2_ref[...], preferred_element_type=f32) + c2_ref[...]

    # ---- residual + LayerNorm 2 + final ReLU ---------------------------------
    z = y + ff
    mu2 = jnp.mean(z, axis=-1, keepdims=True)
    var2 = jnp.mean((z - mu2) * (z - mu2), axis=-1, keepdims=True)
    z = (z - mu2) * jax.lax.rsqrt(var2 + EPS) * g2_ref[...] + be2_ref[...]
    z = jnp.maximum(z, 0.0)

    o_ref[...] = z.reshape(B, S, D).astype(o_ref.dtype)


def encoder_layer(x, mask, params):
    (wq, bq, wk, bk, wv, bv, wo, bo, g1, be1, g2, be2, w1, c1, w2, c2) = params

    # Head-major weight re-layout done OUTSIDE the kernel (free XLA reshapes),
    # so the kernel never splits the lane (D) axis per head.
    def split_cols(w):   # (D, H*DH) -> (H, D, DH)
        return w.reshape(D, H, DH).transpose(1, 0, 2)

    def split_bias(b):   # (1, H*DH) -> (H, 1, DH)
        return b.reshape(1, H, DH).transpose(1, 0, 2)

    wq_h, wk_h, wv_h = split_cols(wq), split_cols(wk), split_cols(wv)
    bq_h, bk_h, bv_h = split_bias(bq), split_bias(bk), split_bias(bv)
    wo_h = wo.reshape(H, DH, D)      # rows of wo are head-major (concat order)

    inputs = (x, mask, wq_h, bq_h, wk_h, bk_h, wv_h, bv_h, wo_h, bo,
              g1, be1, g2, be2, w1, c1, w2, c2)

    def full_spec(a):
        zeros = (0,) * a.ndim
        return pl.BlockSpec(a.shape, lambda i: zeros)

    grid_spec = pltpu.PrefetchScalarGridSpec(
        num_scalar_prefetch=0,
        grid=(1,),   # single step: all B batches and H heads fused in one body
        in_specs=[full_spec(a) for a in inputs],
        out_specs=pl.BlockSpec((B, S, D), lambda i: (0, 0, 0)),
    )
    return pl.pallas_call(
        encoder_layer_kernel,
        out_shape=jax.ShapeDtypeStruct((B, S, D), jnp.float32),
        grid_spec=grid_spec,
        compiler_params=pltpu.CompilerParams(
            dimension_semantics=("arbitrary",)),
    )(*inputs)


# ---------------- pure-JAX reference (for correctness check) -----------------
def encoder_layer_ref(x, mask, params):
    (wq, bq, wk, bk, wv, bv, wo, bo, g1, be1, g2, be2, w1, c1, w2, c2) = params
    q = x @ wq + bq
    k = x @ wk + bk
    v = x @ wv + bv

    def split(t):  # (B,S,D) -> (B,H,S,DH)
        return t.reshape(B, S, H, DH).transpose(0, 2, 1, 3)

    qh, kh, vh = split(q), split(k), split(v)
    scores = jnp.einsum("bhqd,bhkd->bhqk", qh, kh) / math.sqrt(DH)
    m = mask[:, None, :, :]  # (B,1,1,S)
    scores = jnp.where(m == 0.0, -1e9, scores)
    p = jax.nn.softmax(scores, axis=-1)
    o = jnp.einsum("bhqk,bhkd->bhqd", p, vh).transpose(0, 2, 1, 3).reshape(B, S, D)
    attn = o @ wo + bo

    def ln(t, g, b):
        mu = jnp.mean(t, -1, keepdims=True)
        var = jnp.mean((t - mu) ** 2, -1, keepdims=True)
        return (t - mu) * jax.lax.rsqrt(var + EPS) * g + b

    y = ln(x + attn, g1, be1)
    ff = jnp.maximum(y @ w1 + c1, 0.0) @ w2 + c2
    z = ln(y + ff, g2, be2)
    return jnp.maximum(z, 0.0)


if __name__ == "__main__":
    key = jax.random.PRNGKey(0)
    ks = jax.random.split(key, 12)

    x = jax.random.normal(ks[0], (B, S, D), jnp.float32)
    mask = jnp.ones((B, 1, S), jnp.float32)
    mask = mask.at[1, 0, S - 2:].set(0.0)   # pad last two positions of batch 1

    scale = 0.02
    wq = jax.random.normal(ks[1], (D, D), jnp.float32) * scale
    wk = jax.random.normal(ks[2], (D, D), jnp.float32) * scale
    wv = jax.random.normal(ks[3], (D, D), jnp.float32) * scale
    wo = jax.random.normal(ks[4], (D, D), jnp.float32) * scale
    bq = jnp.zeros((1, D), jnp.float32)
    bk = jnp.zeros((1, D), jnp.float32)
    bv = jnp.zeros((1, D), jnp.float32)
    bo = jnp.zeros((1, D), jnp.float32)
    g1 = jnp.ones((1, D), jnp.float32)
    be1 = jnp.zeros((1, D), jnp.float32)
    g2 = jnp.ones((1, D), jnp.float32)
    be2 = jnp.zeros((1, D), jnp.float32)
    w1 = jax.random.normal(ks[5], (D, F), jnp.float32) * scale
    c1 = jax.random.normal(ks[6], (1, F), jnp.float32) * scale
    w2 = jax.random.normal(ks[7], (F, D), jnp.float32) * scale
    c2 = jax.random.normal(ks[8], (1, D), jnp.float32) * scale

    params = (wq, bq, wk, bk, wv, bv, wo, bo, g1, be1, g2, be2, w1, c1, w2, c2)

    out = encoder_layer(x, mask, params)
    out = jax.block_until_ready(out)

    ref = encoder_layer_ref(x, mask, params)
    assert out.shape == (B, S, D)
    # slight tolerance headroom for the approximate (EUP) softmax reciprocal
    assert jnp.allclose(out, ref, atol=2e-4, rtol=2e-4), "mismatch vs reference"

    print("KERNEL_OK")
</pallas_src>

<mosaic_0001>
module attributes {stable_mosaic.version = 11 : i64} {
  func.func @encoder_layer_kernel(%arg0: i32, %arg1: memref<2x8x32xf32, #tpu.memory_space<vmem>>, %arg2: memref<2x1x8xf32, #tpu.memory_space<vmem>>, %arg3: memref<4x32x8xf32, #tpu.memory_space<vmem>>, %arg4: memref<4x1x8xf32, #tpu.memory_space<vmem>>, %arg5: memref<4x32x8xf32, #tpu.memory_space<vmem>>, %arg6: memref<4x1x8xf32, #tpu.memory_space<vmem>>, %arg7: memref<4x32x8xf32, #tpu.memory_space<vmem>>, %arg8: memref<4x1x8xf32, #tpu.memory_space<vmem>>, %arg9: memref<4x8x32xf32, #tpu.memory_space<vmem>>, %arg10: memref<1x32xf32, #tpu.memory_space<vmem>>, %arg11: memref<1x32xf32, #tpu.memory_space<vmem>>, %arg12: memref<1x32xf32, #tpu.memory_space<vmem>>, %arg13: memref<1x32xf32, #tpu.memory_space<vmem>>, %arg14: memref<1x32xf32, #tpu.memory_space<vmem>>, %arg15: memref<32x64xf32, #tpu.memory_space<vmem>>, %arg16: memref<1x64xf32, #tpu.memory_space<vmem>>, %arg17: memref<64x32xf32, #tpu.memory_space<vmem>>, %arg18: memref<1x32xf32, #tpu.memory_space<vmem>>, %arg19: memref<2x8x32xf32, #tpu.memory_space<vmem>>) attributes {dimension_semantics = [#tpu.dimension_semantics<arbitrary>], iteration_bounds = array<i64: 1>, scalar_prefetch = 0 : i64, scratch_operands = 0 : i64, tpu.core_type = #tpu.core_type<tc>, window_params = [{pipeline_mode = #tpu.pipeline_mode<synchronous>, transform_indices = @transform_0, window_bounds = array<i64: 2, 8, 32>}, {pipeline_mode = #tpu.pipeline_mode<synchronous>, transform_indices = @transform_1, window_bounds = array<i64: 2, 1, 8>}, {pipeline_mode = #tpu.pipeline_mode<synchronous>, transform_indices = @transform_2, window_bounds = array<i64: 4, 32, 8>}, {pipeline_mode = #tpu.pipeline_mode<synchronous>, transform_indices = @transform_3, window_bounds = array<i64: 4, 1, 8>}, {pipeline_mode = #tpu.pipeline_mode<synchronous>, transform_indices = @transform_4, window_bounds = array<i64: 4, 32, 8>}, {pipeline_mode = #tpu.pipeline_mode<synchronous>, transform_indices = @transform_5, window_bounds = array<i64: 4, 1, 8>}, {pipeline_mode = #tpu.pipeline_mode<synchronous>, transform_indices = @transform_6, window_bounds = array<i64: 4, 32, 8>}, {pipeline_mode = #tpu.pipeline_mode<synchronous>, transform_indices = @transform_7, window_bounds = array<i64: 4, 1, 8>}, {pipeline_mode = #tpu.pipeline_mode<synchronous>, transform_indices = @transform_8, window_bounds = array<i64: 4, 8, 32>}, {pipeline_mode = #tpu.pipeline_mode<synchronous>, transform_indices = @transform_9, window_bounds = array<i64: 1, 32>}, {pipeline_mode = #tpu.pipeline_mode<synchronous>, transform_indices = @transform_10, window_bounds = array<i64: 1, 32>}, {pipeline_mode = #tpu.pipeline_mode<synchronous>, transform_indices = @transform_11, window_bounds = array<i64: 1, 32>}, {pipeline_mode = #tpu.pipeline_mode<synchronous>, transform_indices = @transform_12, window_bounds = array<i64: 1, 32>}, {pipeline_mode = #tpu.pipeline_mode<synchronous>, transform_indices = @transform_13, window_bounds = array<i64: 1, 32>}, {pipeline_mode = #tpu.pipeline_mode<synchronous>, transform_indices = @transform_14, window_bounds = array<i64: 32, 64>}, {pipeline_mode = #tpu.pipeline_mode<synchronous>, transform_indices = @transform_15, window_bounds = array<i64: 1, 64>}, {pipeline_mode = #tpu.pipeline_mode<synchronous>, transform_indices = @transform_16, window_bounds = array<i64: 64, 32>}, {pipeline_mode = #tpu.pipeline_mode<synchronous>, transform_indices = @transform_17, window_bounds = array<i64: 1, 32>}, {pipeline_mode = #tpu.pipeline_mode<synchronous>, transform_indices = @transform_18, window_bounds = array<i64: 2, 8, 32>}]} {
    %c0 = arith.constant 0 : index
    %c0_0 = arith.constant 0 : index
    %c0_1 = arith.constant 0 : index
    %0 = vector.load %arg1[%c0, %c0_0, %c0_1] : memref<2x8x32xf32, #tpu.memory_space<vmem>>, vector<2x8x32xf32>
    %c0_2 = arith.constant 0 : index
    %c0_3 = arith.constant 0 : index
    %c0_4 = arith.constant 0 : index
    %1 = vector.load %arg2[%c0_2, %c0_3, %c0_4] : memref<2x1x8xf32, #tpu.memory_space<vmem>>, vector<2x1x8xf32>
    %cst = arith.constant 0.000000e+00 : f32
    %2 = vector.broadcast %cst : f32 to vector<2x1x8xf32>
    %3 = arith.cmpf oeq, %1, %2 : vector<2x1x8xf32>
    %cst_5 = arith.constant -1.000000e+09 : f32
    %cst_6 = arith.constant 0.000000e+00 : f32
    %4 = vector.broadcast %cst_5 : f32 to vector<2x1x8xf32>
    %5 = vector.broadcast %cst_6 : f32 to vector<2x1x8xf32>
    %6 = arith.select %3, %4, %5 : vector<2x1x8xi1>, vector<2x1x8xf32>
    %7 = vector.shape_cast %6 : vector<2x1x8xf32> to vector<2x1x1x8xf32>
    %8 = vector.shape_cast %7 : vector<2x1x1x8xf32> to vector<2x1x1x8xf32>
    %9 = vector.broadcast %8 : vector<2x1x1x8xf32> to vector<2x4x1x8xf32>
    %10 = vector.shape_cast %9 : vector<2x4x1x8xf32> to vector<8x1x8xf32>
    %11 = vector.shape_cast %0 : vector<2x8x32xf32> to vector<2x1x8x32xf32>
    %12 = vector.shape_cast %11 : vector<2x1x8x32xf32> to vector<2x1x8x32xf32>
    %13 = vector.broadcast %12 : vector<2x1x8x32xf32> to vector<2x4x8x32xf32>
    %14 = vector.shape_cast %13 : vector<2x4x8x32xf32> to vector<8x8x32xf32>
    %c0_7 = arith.constant 0 : index
    %c0_8 = arith.constant 0 : index
    %c0_9 = arith.constant 0 : index
    %15 = vector.load %arg3[%c0_7, %c0_8, %c0_9] : memref<4x32x8xf32, #tpu.memory_space<vmem>>, vector<4x32x8xf32>
    %16 = vector.shape_cast %15 : vector<4x32x8xf32> to vector<1x4x32x8xf32>
    %17 = vector.shape_cast %16 : vector<1x4x32x8xf32> to vector<1x4x32x8xf32>
    %18 = vector.broadcast %17 : vector<1x4x32x8xf32> to vector<2x4x32x8xf32>
    %19 = vector.shape_cast %18 : vector<2x4x32x8xf32> to vector<8x32x8xf32>
    "tpu.trace_start"() <{level = 10 : i32, message = "nsd,ndh->nsh"}> : () -> ()
    %cst_10 = arith.constant dense<0.000000e+00> : vector<8x8x8xf32>
    %20 = tpu.matmul %14, %19, %cst_10 {dimension_numbers = #tpu.dot_dimension_numbers<[2], [1], [1], [2], [0, 0, 0, 1, 1, 2], [0], [0]>} : vector<8x8x32xf32>, vector<8x32x8xf32>, vector<8x8x8xf32> -> vector<8x8x8xf32>
    "tpu.trace_stop"() : () -> ()
    %c0_11 = arith.constant 0 : index
    %c0_12 = arith.constant 0 : index
    %c0_13 = arith.constant 0 : index
    %21 = vector.load %arg4[%c0_11, %c0_12, %c0_13] : memref<4x1x8xf32, #tpu.memory_space<vmem>>, vector<4x1x8xf32>
    %22 = vector.shape_cast %21 : vector<4x1x8xf32> to vector<1x4x1x8xf32>
    %23 = vector.shape_cast %22 : vector<1x4x1x8xf32> to vector<1x4x1x8xf32>
    %24 = vector.broadcast %23 : vector<1x4x1x8xf32> to vector<2x4x1x8xf32>
    %25 = vector.shape_cast %24 : vector<2x4x1x8xf32> to vector<8x1x8xf32>
    %26 = vector.broadcast %25 : vector<8x1x8xf32> to vector<8x8x8xf32>
    %27 = arith.addf %20, %26 : vector<8x8x8xf32>
    %c0_14 = arith.constant 0 : index
    %c0_15 = arith.constant 0 : index
    %c0_16 = arith.constant 0 : index
    %28 = vector.load %arg5[%c0_14, %c0_15, %c0_16] : memref<4x32x8xf32, #tpu.memory_space<vmem>>, vector<4x32x8xf32>
    %29 = vector.shape_cast %28 : vector<4x32x8xf32> to vector<1x4x32x8xf32>
    %30 = vector.shape_cast %29 : vector<1x4x32x8xf32> to vector<1x4x32x8xf32>
    %31 = vector.broadcast %30 : vector<1x4x32x8xf32> to vector<2x4x32x8xf32>
    %32 = vector.shape_cast %31 : vector<2x4x32x8xf32> to vector<8x32x8xf32>
    "tpu.trace_start"() <{level = 10 : i32, message = "nsd,ndh->nsh"}> : () -> ()
    %cst_17 = arith.constant dense<0.000000e+00> : vector<8x8x8xf32>
    %33 = tpu.matmul %14, %32, %cst_17 {dimension_numbers = #tpu.dot_dimension_numbers<[2], [1], [1], [2], [0, 0, 0, 1, 1, 2], [0], [0]>} : vector<8x8x32xf32>, vector<8x32x8xf32>, vector<8x8x8xf32> -> vector<8x8x8xf32>
    "tpu.trace_stop"() : () -> ()
    %c0_18 = arith.constant 0 : index
    %c0_19 = arith.constant 0 : index
    %c0_20 = arith.constant 0 : index
    %34 = vector.load %arg6[%c0_18, %c0_19, %c0_20] : memref<4x1x8xf32, #tpu.memory_space<vmem>>, vector<4x1x8xf32>
    %35 = vector.shape_cast %34 : vector<4x1x8xf32> to vector<1x4x1x8xf32>
    %36 = vector.shape_cast %35 : vector<1x4x1x8xf32> to vector<1x4x1x8xf32>
    %37 = vector.broadcast %36 : vector<1x4x1x8xf32> to vector<2x4x1x8xf32>
    %38 = vector.shape_cast %37 : vector<2x4x1x8xf32> to vector<8x1x8xf32>
    %39 = vector.broadcast %38 : vector<8x1x8xf32> to vector<8x8x8xf32>
    %40 = arith.addf %33, %39 : vector<8x8x8xf32>
    %c0_21 = arith.constant 0 : index
    %c0_22 = arith.constant 0 : index
    %c0_23 = arith.constant 0 : index
    %41 = vector.load %arg7[%c0_21, %c0_22, %c0_23] : memref<4x32x8xf32, #tpu.memory_space<vmem>>, vector<4x32x8xf32>
    %42 = vector.shape_cast %41 : vector<4x32x8xf32> to vector<1x4x32x8xf32>
    %43 = vector.shape_cast %42 : vector<1x4x32x8xf32> to vector<1x4x32x8xf32>
    %44 = vector.broadcast %43 : vector<1x4x32x8xf32> to vector<2x4x32x8xf32>
    %45 = vector.shape_cast %44 : vector<2x4x32x8xf32> to vector<8x32x8xf32>
    "tpu.trace_start"() <{level = 10 : i32, message = "nsd,ndh->nsh"}> : () -> ()
    %cst_24 = arith.constant dense<0.000000e+00> : vector<8x8x8xf32>
    %46 = tpu.matmul %14, %45, %cst_24 {dimension_numbers = #tpu.dot_dimension_numbers<[2], [1], [1], [2], [0, 0, 0, 1, 1, 2], [0], [0]>} : vector<8x8x32xf32>, vector<8x32x8xf32>, vector<8x8x8xf32> -> vector<8x8x8xf32>
    "tpu.trace_stop"() : () -> ()
    %c0_25 = arith.constant 0 : index
    %c0_26 = arith.constant 0 : index
    %c0_27 = arith.constant 0 : index
    %47 = vector.load %arg8[%c0_25, %c0_26, %c0_27] : memref<4x1x8xf32, #tpu.memory_space<vmem>>, vector<4x1x8xf32>
    %48 = vector.shape_cast %47 : vector<4x1x8xf32> to vector<1x4x1x8xf32>
    %49 = vector.shape_cast %48 : vector<1x4x1x8xf32> to vector<1x4x1x8xf32>
    %50 = vector.broadcast %49 : vector<1x4x1x8xf32> to vector<2x4x1x8xf32>
    %51 = vector.shape_cast %50 : vector<2x4x1x8xf32> to vector<8x1x8xf32>
    %52 = vector.broadcast %51 : vector<8x1x8xf32> to vector<8x8x8xf32>
    %53 = arith.addf %46, %52 : vector<8x8x8xf32>
    "tpu.trace_start"() <{level = 10 : i32, message = "nqh,nkh->nqk"}> : () -> ()
    %cst_28 = arith.constant dense<0.000000e+00> : vector<8x8x8xf32>
    %54 = tpu.matmul %27, %40, %cst_28 {dimension_numbers = #tpu.dot_dimension_numbers<[2], [2], [1], [1], [0, 0, 0, 1, 1, 1], [0], [0]>} : vector<8x8x8xf32>, vector<8x8x8xf32>, vector<8x8x8xf32> -> vector<8x8x8xf32>
    "tpu.trace_stop"() : () -> ()
    %cst_29 = arith.constant 0.353553385 : f32
    %55 = vector.broadcast %cst_29 : f32 to vector<8x8x8xf32>
    %56 = arith.mulf %54, %55 : vector<8x8x8xf32>
    %57 = vector.broadcast %10 : vector<8x1x8xf32> to vector<8x8x8xf32>
    %58 = arith.addf %56, %57 : vector<8x8x8xf32>
    %cst_30 = arith.constant dense<0xFF800000> : vector<8x8xf32>
    %59 = vector.multi_reduction <maximumf>, %58, %cst_30 [2] : vector<8x8x8xf32> to vector<8x8xf32>
    %60 = vector.shape_cast %59 : vector<8x8xf32> to vector<8x8x1xf32>
    %61 = vector.broadcast %60 : vector<8x8x1xf32> to vector<8x8x8xf32>
    %62 = arith.subf %58, %61 : vector<8x8x8xf32>
    %63 = math.exp %62 : vector<8x8x8xf32>
    %cst_31 = arith.constant dense<0.000000e+00> : vector<8x8xf32>
    %64 = vector.multi_reduction <add>, %63, %cst_31 [2] : vector<8x8x8xf32> to vector<8x8xf32>
    %65 = vector.shape_cast %64 : vector<8x8xf32> to vector<8x8x1xf32>
    %66 = tpu.reciprocal %65 {approx = true} : vector<8x8x1xf32> -> vector<8x8x1xf32>
    %67 = vector.broadcast %66 : vector<8x8x1xf32> to vector<8x8x8xf32>
    %68 = arith.mulf %63, %67 : vector<8x8x8xf32>
    "tpu.trace_start"() <{level = 10 : i32, message = "nqk,nkh->nqh"}> : () -> ()
    %cst_32 = arith.constant dense<0.000000e+00> : vector<8x8x8xf32>
    %69 = tpu.matmul %68, %53, %cst_32 {dimension_numbers = #tpu.dot_dimension_numbers<[2], [1], [1], [2], [0, 0, 0, 1, 1, 2], [0], [0]>} : vector<8x8x8xf32>, vector<8x8x8xf32>, vector<8x8x8xf32> -> vector<8x8x8xf32>
    "tpu.trace_stop"() : () -> ()
    %c0_33 = arith.constant 0 : index
    %c0_34 = arith.constant 0 : index
    %c0_35 = arith.constant 0 : index
    %70 = vector.load %arg9[%c0_33, %c0_34, %c0_35] : memref<4x8x32xf32, #tpu.memory_space<vmem>>, vector<4x8x32xf32>
    %71 = vector.shape_cast %70 : vector<4x8x32xf32> to vector<1x4x8x32xf32>
    %72 = vector.shape_cast %71 : vector<1x4x8x32xf32> to vector<1x4x8x32xf32>
    %73 = vector.broadcast %72 : vector<1x4x8x32xf32> to vector<2x4x8x32xf32>
    %74 = vector.shape_cast %73 : vector<2x4x8x32xf32> to vector<8x8x32xf32>
    "tpu.trace_start"() <{level = 10 : i32, message = "nsh,nhd->nsd"}> : () -> ()
    %cst_36 = arith.constant dense<0.000000e+00> : vector<8x8x32xf32>
    %75 = tpu.matmul %69, %74, %cst_36 {dimension_numbers = #tpu.dot_dimension_numbers<[2], [1], [1], [2], [0, 0, 0, 1, 1, 2], [0], [0]>} : vector<8x8x8xf32>, vector<8x8x32xf32>, vector<8x8x32xf32> -> vector<8x8x32xf32>
    "tpu.trace_stop"() : () -> ()
    %76 = vector.shape_cast %75 : vector<8x8x32xf32> to vector<2x4x8x32xf32>
    %cst_37 = arith.constant dense<0.000000e+00> : vector<2x8x32xf32>
    %77 = vector.multi_reduction <add>, %76, %cst_37 [1] : vector<2x4x8x32xf32> to vector<2x8x32xf32>
    %c0_38 = arith.constant 0 : index
    %c0_39 = arith.constant 0 : index
    %78 = vector.load %arg10[%c0_38, %c0_39] : memref<1x32xf32, #tpu.memory_space<vmem>>, vector<1x32xf32>
    %79 = vector.shape_cast %78 : vector<1x32xf32> to vector<1x1x32xf32>
    %80 = vector.broadcast %79 : vector<1x1x32xf32> to vector<2x8x32xf32>
    %81 = arith.addf %77, %80 : vector<2x8x32xf32>
    %82 = vector.shape_cast %0 : vector<2x8x32xf32> to vector<16x32xf32>
    %83 = vector.shape_cast %81 : vector<2x8x32xf32> to vector<16x32xf32>
    %84 = arith.addf %82, %83 : vector<16x32xf32>
    %cst_40 = arith.constant dense<0.000000e+00> : vector<16xf32>
    %85 = vector.multi_reduction <add>, %84, %cst_40 [1] : vector<16x32xf32> to vector<16xf32>
    %86 = vector.shape_cast %85 : vector<16xf32> to vector<16x1xf32>
    %cst_41 = arith.constant 3.200000e+01 : f32
    %87 = vector.broadcast %cst_41 : f32 to vector<16x1xf32>
    %88 = arith.divf %86, %87 : vector<16x1xf32>
    %89 = vector.broadcast %88 : vector<16x1xf32> to vector<16x32xf32>
    %90 = arith.subf %84, %89 : vector<16x32xf32>
    %91 = vector.broadcast %88 : vector<16x1xf32> to vector<16x32xf32>
    %92 = arith.subf %84, %91 : vector<16x32xf32>
    %93 = arith.mulf %90, %92 : vector<16x32xf32>
    %cst_42 = arith.constant dense<0.000000e+00> : vector<16xf32>
    %94 = vector.multi_reduction <add>, %93, %cst_42 [1] : vector<16x32xf32> to vector<16xf32>
    %95 = vector.shape_cast %94 : vector<16xf32> to vector<16x1xf32>
    %cst_43 = arith.constant 3.200000e+01 : f32
    %96 = vector.broadcast %cst_43 : f32 to vector<16x1xf32>
    %97 = arith.divf %95, %96 : vector<16x1xf32>
    %98 = vector.broadcast %88 : vector<16x1xf32> to vector<16x32xf32>
    %99 = arith.subf %84, %98 : vector<16x32xf32>
    %cst_44 = arith.constant 9.99999974E-6 : f32
    %100 = vector.broadcast %cst_44 : f32 to vector<16x1xf32>
    %101 = arith.addf %97, %100 : vector<16x1xf32>
    %102 = math.rsqrt %101 : vector<16x1xf32>
    %103 = vector.broadcast %102 : vector<16x1xf32> to vector<16x32xf32>
    %104 = arith.mulf %99, %103 : vector<16x32xf32>
    %c0_45 = arith.constant 0 : index
    %c0_46 = arith.constant 0 : index
    %105 = vector.load %arg11[%c0_45, %c0_46] : memref<1x32xf32, #tpu.memory_space<vmem>>, vector<1x32xf32>
    %106 = vector.broadcast %105 : vector<1x32xf32> to vector<16x32xf32>
    %107 = arith.mulf %104, %106 : vector<16x32xf32>
    %c0_47 = arith.constant 0 : index
    %c0_48 = arith.constant 0 : index
    %108 = vector.load %arg12[%c0_47, %c0_48] : memref<1x32xf32, #tpu.memory_space<vmem>>, vector<1x32xf32>
    %109 = vector.broadcast %108 : vector<1x32xf32> to vector<16x32xf32>
    %110 = arith.addf %107, %109 : vector<16x32xf32>
    %c0_49 = arith.constant 0 : index
    %c0_50 = arith.constant 0 : index
    %111 = vector.load %arg15[%c0_49, %c0_50] : memref<32x64xf32, #tpu.memory_space<vmem>>, vector<32x64xf32>
    %cst_51 = arith.constant dense<0.000000e+00> : vector<16x64xf32>
    %112 = tpu.matmul %110, %111, %cst_51 {dimension_numbers = #tpu.dot_dimension_numbers<[1], [0], [0], [1], [0, 0, 1, 1], [], []>} : vector<16x32xf32>, vector<32x64xf32>, vector<16x64xf32> -> vector<16x64xf32>
    %c0_52 = arith.constant 0 : index
    %c0_53 = arith.constant 0 : index
    %113 = vector.load %arg16[%c0_52, %c0_53] : memref<1x64xf32, #tpu.memory_space<vmem>>, vector<1x64xf32>
    %114 = vector.broadcast %113 : vector<1x64xf32> to vector<16x64xf32>
    %115 = arith.addf %112, %114 : vector<16x64xf32>
    %cst_54 = arith.constant 0.000000e+00 : f32
    %116 = vector.broadcast %cst_54 : f32 to vector<16x64xf32>
    %117 = arith.maximumf %115, %116 : vector<16x64xf32>
    %c0_55 = arith.constant 0 : index
    %c0_56 = arith.constant 0 : index
    %118 = vector.load %arg17[%c0_55, %c0_56] : memref<64x32xf32, #tpu.memory_space<vmem>>, vector<64x32xf32>
    %cst_57 = arith.constant dense<0.000000e+00> : vector<16x32xf32>
    %119 = tpu.matmul %117, %118, %cst_57 {dimension_numbers = #tpu.dot_dimension_numbers<[1], [0], [0], [1], [0, 0, 1, 1], [], []>} : vector<16x64xf32>, vector<64x32xf32>, vector<16x32xf32> -> vector<16x32xf32>
    %c0_58 = arith.constant 0 : index
    %c0_59 = arith.constant 0 : index
    %120 = vector.load %arg18[%c0_58, %c0_59] : memref<1x32xf32, #tpu.memory_space<vmem>>, vector<1x32xf32>
    %121 = vector.broadcast %120 : vector<1x32xf32> to vector<16x32xf32>
    %122 = arith.addf %119, %121 : vector<16x32xf32>
    %123 = arith.addf %110, %122 : vector<16x32xf32>
    %cst_60 = arith.constant dense<0.000000e+00> : vector<16xf32>
    %124 = vector.multi_reduction <add>, %123, %cst_60 [1] : vector<16x32xf32> to vector<16xf32>
    %125 = vector.shape_cast %124 : vector<16xf32> to vector<16x1xf32>
    %cst_61 = arith.constant 3.200000e+01 : f32
    %126 = vector.broadcast %cst_61 : f32 to vector<16x1xf32>
    %127 = arith.divf %125, %126 : vector<16x1xf32>
    %128 = vector.broadcast %127 : vector<16x1xf32> to vector<16x32xf32>
    %129 = arith.subf %123, %128 : vector<16x32xf32>
    %130 = vector.broadcast %127 : vector<16x1xf32> to vector<16x32xf32>
    %131 = arith.subf %123, %130 : vector<16x32xf32>
    %132 = arith.mulf %129, %131 : vector<16x32xf32>
    %cst_62 = arith.constant dense<0.000000e+00> : vector<16xf32>
    %133 = vector.multi_reduction <add>, %132, %cst_62 [1] : vector<16x32xf32> to vector<16xf32>
    %134 = vector.shape_cast %133 : vector<16xf32> to vector<16x1xf32>
    %cst_63 = arith.constant 3.200000e+01 : f32
    %135 = vector.broadcast %cst_63 : f32 to vector<16x1xf32>
    %136 = arith.divf %134, %135 : vector<16x1xf32>
    %137 = vector.broadcast %127 : vector<16x1xf32> to vector<16x32xf32>
    %138 = arith.subf %123, %137 : vector<16x32xf32>
    %cst_64 = arith.constant 9.99999974E-6 : f32
    %139 = vector.broadcast %cst_64 : f32 to vector<16x1xf32>
    %140 = arith.addf %136, %139 : vector<16x1xf32>
    %141 = math.rsqrt %140 : vector<16x1xf32>
    %142 = vector.broadcast %141 : vector<16x1xf32> to vector<16x32xf32>
    %143 = arith.mulf %138, %142 : vector<16x32xf32>
    %c0_65 = arith.constant 0 : index
    %c0_66 = arith.constant 0 : index
    %144 = vector.load %arg13[%c0_65, %c0_66] : memref<1x32xf32, #tpu.memory_space<vmem>>, vector<1x32xf32>
    %145 = vector.broadcast %144 : vector<1x32xf32> to vector<16x32xf32>
    %146 = arith.mulf %143, %145 : vector<16x32xf32>
    %c0_67 = arith.constant 0 : index
    %c0_68 = arith.constant 0 : index
    %147 = vector.load %arg14[%c0_67, %c0_68] : memref<1x32xf32, #tpu.memory_space<vmem>>, vector<1x32xf32>
    %148 = vector.broadcast %147 : vector<1x32xf32> to vector<16x32xf32>
    %149 = arith.addf %146, %148 : vector<16x32xf32>
    %cst_69 = arith.constant 0.000000e+00 : f32
    %150 = vector.broadcast %cst_69 : f32 to vector<16x32xf32>
    %151 = arith.maximumf %149, %150 : vector<16x32xf32>
    %152 = vector.shape_cast %151 : vector<16x32xf32> to vector<2x8x32xf32>
    %c0_70 = arith.constant 0 : index
    %c0_71 = arith.constant 0 : index
    %c0_72 = arith.constant 0 : index
    %153 = vector.load %arg19[%c0_70, %c0_71, %c0_72] : memref<2x8x32xf32, #tpu.memory_space<vmem>>, vector<2x8x32xf32>
    tpu.vector_store %arg19[%c0_70, %c0_71, %c0_72], %152 {strides = array<i32>} : memref<2x8x32xf32, #tpu.memory_space<vmem>>, vector<2x8x32xf32>,
    return
  }
  func.func @transform_0(%arg0: i32) -> (i32, i32, i32) {
    %c0_i32 = arith.constant 0 : i32
    %c0_i32_0 = arith.constant 0 : i32
    %c0_i32_1 = arith.constant 0 : i32
    %c0_i32_2 = arith.constant 0 : i32
    return %c0_i32, %c0_i32_0, %c0_i32_1 : i32, i32, i32
  }
  func.func @transform_1(%arg0: i32) -> (i32, i32, i32) {
    %c0_i32 = arith.constant 0 : i32
    %c0_i32_0 = arith.constant 0 : i32
    %c0_i32_1 = arith.constant 0 : i32
    %c0_i32_2 = arith.constant 0 : i32
    return %c0_i32, %c0_i32_0, %c0_i32_1 : i32, i32, i32
  }
  func.func @transform_2(%arg0: i32) -> (i32, i32, i32) {
    %c0_i32 = arith.constant 0 : i32
    %c0_i32_0 = arith.constant 0 : i32
    %c0_i32_1 = arith.constant 0 : i32
    %c0_i32_2 = arith.constant 0 : i32
    return %c0_i32, %c0_i32_0, %c0_i32_1 : i32, i32, i32
  }
  func.func @transform_3(%arg0: i32) -> (i32, i32, i32) {
    %c0_i32 = arith.constant 0 : i32
    %c0_i32_0 = arith.constant 0 : i32
    %c0_i32_1 = arith.constant 0 : i32
    %c0_i32_2 = arith.constant 0 : i32
    return %c0_i32, %c0_i32_0, %c0_i32_1 : i32, i32, i32
  }
  func.func @transform_4(%arg0: i32) -> (i32, i32, i32) {
    %c0_i32 = arith.constant 0 : i32
    %c0_i32_0 = arith.constant 0 : i32
    %c0_i32_1 = arith.constant 0 : i32
    %c0_i32_2 = arith.constant 0 : i32
    return %c0_i32, %c0_i32_0, %c0_i32_1 : i32, i32, i32
  }
  func.func @transform_5(%arg0: i32) -> (i32, i32, i32) {
    %c0_i32 = arith.constant 0 : i32
    %c0_i32_0 = arith.constant 0 : i32
    %c0_i32_1 = arith.constant 0 : i32
    %c0_i32_2 = arith.constant 0 : i32
    return %c0_i32, %c0_i32_0, %c0_i32_1 : i32, i32, i32
  }
  func.func @transform_6(%arg0: i32) -> (i32, i32, i32) {
    %c0_i32 = arith.constant 0 : i32
    %c0_i32_0 = arith.constant 0 : i32
    %c0_i32_1 = arith.constant 0 : i32
    %c0_i32_2 = arith.constant 0 : i32
    return %c0_i32, %c0_i32_0, %c0_i32_1 : i32, i32, i32
  }
  func.func @transform_7(%arg0: i32) -> (i32, i32, i32) {
    %c0_i32 = arith.constant 0 : i32
    %c0_i32_0 = arith.constant 0 : i32
    %c0_i32_1 = arith.constant 0 : i32
    %c0_i32_2 = arith.constant 0 : i32
    return %c0_i32, %c0_i32_0, %c0_i32_1 : i32, i32, i32
  }
  func.func @transform_8(%arg0: i32) -> (i32, i32, i32) {
    %c0_i32 = arith.constant 0 : i32
    %c0_i32_0 = arith.constant 0 : i32
    %c0_i32_1 = arith.constant 0 : i32
    %c0_i32_2 = arith.constant 0 : i32
    return %c0_i32, %c0_i32_0, %c0_i32_1 : i32, i32, i32
  }
  func.func @transform_9(%arg0: i32) -> (i32, i32) {
    %c0_i32 = arith.constant 0 : i32
    %c0_i32_0 = arith.constant 0 : i32
    %c0_i32_1 = arith.constant 0 : i32
    return %c0_i32, %c0_i32_0 : i32, i32
  }
  func.func @transform_10(%arg0: i32) -> (i32, i32) {
    %c0_i32 = arith.constant 0 : i32
    %c0_i32_0 = arith.constant 0 : i32
    %c0_i32_1 = arith.constant 0 : i32
    return %c0_i32, %c0_i32_0 : i32, i32
  }
  func.func @transform_11(%arg0: i32) -> (i32, i32) {
    %c0_i32 = arith.constant 0 : i32
    %c0_i32_0 = arith.constant 0 : i32
    %c0_i32_1 = arith.constant 0 : i32
    return %c0_i32, %c0_i32_0 : i32, i32
  }
  func.func @transform_12(%arg0: i32) -> (i32, i32) {
    %c0_i32 = arith.constant 0 : i32
    %c0_i32_0 = arith.constant 0 : i32
    %c0_i32_1 = arith.constant 0 : i32
    return %c0_i32, %c0_i32_0 : i32, i32
  }
  func.func @transform_13(%arg0: i32) -> (i32, i32) {
    %c0_i32 = arith.constant 0 : i32
    %c0_i32_0 = arith.constant 0 : i32
    %c0_i32_1 = arith.constant 0 : i32
    return %c0_i32, %c0_i32_0 : i32, i32
  }
  func.func @transform_14(%arg0: i32) -> (i32, i32) {
    %c0_i32 = arith.constant 0 : i32
    %c0_i32_0 = arith.constant 0 : i32
    %c0_i32_1 = arith.constant 0 : i32
    return %c0_i32, %c0_i32_0 : i32, i32
  }
  func.func @transform_15(%arg0: i32) -> (i32, i32) {
    %c0_i32 = arith.constant 0 : i32
    %c0_i32_0 = arith.constant 0 : i32
    %c0_i32_1 = arith.constant 0 : i32
    return %c0_i32, %c0_i32_0 : i32, i32
  }
  func.func @transform_16(%arg0: i32) -> (i32, i32) {
    %c0_i32 = arith.constant 0 : i32
    %c0_i32_0 = arith.constant 0 : i32
    %c0_i32_1 = arith.constant 0 : i32
    return %c0_i32, %c0_i32_0 : i32, i32
  }
  func.func @transform_17(%arg0: i32) -> (i32, i32) {
    %c0_i32 = arith.constant 0 : i32
    %c0_i32_0 = arith.constant 0 : i32
    %c0_i32_1 = arith.constant 0 : i32
    return %c0_i32, %c0_i32_0 : i32, i32
  }
  func.func @transform_18(%arg0: i32) -> (i32, i32, i32) {
    %c0_i32 = arith.constant 0 : i32
    %c0_i32_0 = arith.constant 0 : i32
    %c0_i32_1 = arith.constant 0 : i32
    %c0_i32_2 = arith.constant 0 : i32
    return %c0_i32, %c0_i32_0, %c0_i32_1 : i32, i32, i32
  }
}

</mosaic_0001>

<llo_original>
// kernel: tpu_custom_call.1
$region0: #{tpu_custom_call.1}
  #allocation0 [shape = 'u32[]', space=smem, size = 0x4, offset = 0x4, fixed_abs, tag = 'smem constant byte address 0x4 - core index']
  #allocation1 [shape = 'u32[144,128]{1,0:T(1,128)}', space=vmem, size = 0x12000, scoped, tag = 'internal scratch']
  %s0 = inlined_call_operand.vmem [shape: f32[2,8,32], index: 0, kind: input, shape index: {}]
  %s1 = inlined_call_operand.vmem [shape: f32[2,1,8], index: 1, kind: input, shape index: {}]
  %s2 = inlined_call_operand.vmem [shape: f32[4,32,8], index: 2, kind: input, shape index: {}]
  %s3 = inlined_call_operand.vmem [shape: f32[4,1,8], index: 3, kind: input, shape index: {}]
  %s4 = inlined_call_operand.vmem [shape: f32[4,32,8], index: 4, kind: input, shape index: {}]
  %s5 = inlined_call_operand.vmem [shape: f32[4,1,8], index: 5, kind: input, shape index: {}]
  %s6 = inlined_call_operand.vmem [shape: f32[4,32,8], index: 6, kind: input, shape index: {}]
  %s7 = inlined_call_operand.vmem [shape: f32[4,1,8], index: 7, kind: input, shape index: {}]
  %s8 = inlined_call_operand.vmem [shape: f32[4,8,32], index: 8, kind: input, shape index: {}]
  %s9 = inlined_call_operand.vmem [shape: f32[1,32], index: 9, kind: input, shape index: {}]
  %s10 = inlined_call_operand.vmem [shape: f32[1,32], index: 10, kind: input, shape index: {}]
  %s11 = inlined_call_operand.vmem [shape: f32[1,32], index: 11, kind: input, shape index: {}]
  %s12 = inlined_call_operand.vmem [shape: f32[1,32], index: 12, kind: input, shape index: {}]
  %s13 = inlined_call_operand.vmem [shape: f32[1,32], index: 13, kind: input, shape index: {}]
  %s14 = inlined_call_operand.vmem [shape: f32[32,64], index: 14, kind: input, shape index: {}]
  %s15 = inlined_call_operand.vmem [shape: f32[1,64], index: 15, kind: input, shape index: {}]
  %s16 = inlined_call_operand.vmem [shape: f32[64,32], index: 16, kind: input, shape index: {}]
  %s17 = inlined_call_operand.vmem [shape: f32[1,32], index: 17, kind: input, shape index: {}]
  %s18 = inlined_call_operand.hbm [shape: f32[2,8,32], index: 18, kind: output, shape index: {}]
  %s19 = sld [smem:[#allocation0]]
  $region82: #{tpu_custom_call.1} parent=0
    _
  %s21 = ssub.s32 1, %s19
  %s22 = scalar_select 0, %s21, %s19
  $region1: #{tpu_custom_call.1} parent=0
    #allocation2 [shape = 'u8[8192]{0}', space=vmem, size = 0x2000, scoped, tag = 'output window, operand 0, single buffered']
    #allocation3 [shape = 's32[1]{0}', space=sflag, size = 0x4, scoped, tag = 'scoped memory for tpu_custom_call.1']
    %23 = vsyncpa [#allocation3], 0
    // Predicated region
    $region2: #{tpu_custom_call.1} parent=1 // pred_check
      _
    $region3: #{tpu_custom_call.1} parent=1 // pred_check_branch
      %25 = sbr.rel (0) target = $region5
    $region4: #{tpu_custom_call.1} parent=1 // pred_region
      _
    $region5: #{tpu_custom_call.1} parent=1 // pred_fallthru
      _
    // Predicated region
    $region6: #{tpu_custom_call.1} parent=1 // pred_check
      _
    $region7: #{tpu_custom_call.1} parent=1 // pred_check_branch
      %27 = sbr.rel (0) target = $region9
    $region8: #{tpu_custom_call.1} parent=1 // pred_region
      _
    $region9: #{tpu_custom_call.1} parent=1 // pred_fallthru
      _
    // Predicated region
    $region10: #{tpu_custom_call.1} parent=1 // pred_check
      _
    $region11: #{tpu_custom_call.1} parent=1 // pred_check_branch
      %29 = sbr.rel (0) target = $region13
    $region12: #{tpu_custom_call.1} parent=1 // pred_region
      _
    $region13: #{tpu_custom_call.1} parent=1 // pred_fallthru
      _
    // Predicated region
    $region14: #{tpu_custom_call.1} parent=1 // pred_check
      _
    $region15: #{tpu_custom_call.1} parent=1 // pred_check_branch
      %31 = sbr.rel (0) target = $region17
    $region16: #{tpu_custom_call.1} parent=1 // pred_region
      _
    $region17: #{tpu_custom_call.1} parent=1 // pred_fallthru
      _
    // Predicated region
    $region18: #{tpu_custom_call.1} parent=1 // pred_check
      _
    $region19: #{tpu_custom_call.1} parent=1 // pred_check_branch
      %33 = sbr.rel (0) target = $region21
    $region20: #{tpu_custom_call.1} parent=1 // pred_region
      _
    $region21: #{tpu_custom_call.1} parent=1 // pred_fallthru
      _
    // Predicated region
    $region22: #{tpu_custom_call.1} parent=1 // pred_check
      _
    $region23: #{tpu_custom_call.1} parent=1 // pred_check_branch
      %35 = sbr.rel (0) target = $region25
    $region24: #{tpu_custom_call.1} parent=1 // pred_region
      _
    $region25: #{tpu_custom_call.1} parent=1 // pred_fallthru
      _
    // Predicated region
    $region26: #{tpu_custom_call.1} parent=1 // pred_check
      _
    $region27: #{tpu_custom_call.1} parent=1 // pred_check_branch
      %37 = sbr.rel (0) target = $region29
    $region28: #{tpu_custom_call.1} parent=1 // pred_region
      _
    $region29: #{tpu_custom_call.1} parent=1 // pred_fallthru
      _
    // Predicated region
    $region30: #{tpu_custom_call.1} parent=1 // pred_check
      _
    $region31: #{tpu_custom_call.1} parent=1 // pred_check_branch
      %39 = sbr.rel (0) target = $region33
    $region32: #{tpu_custom_call.1} parent=1 // pred_region
      _
    $region33: #{tpu_custom_call.1} parent=1 // pred_fallthru
      _
    // Predicated region
    $region34: #{tpu_custom_call.1} parent=1 // pred_check
      _
    $region35: #{tpu_custom_call.1} parent=1 // pred_check_branch
      %41 = sbr.rel (0) target = $region37
    $region36: #{tpu_custom_call.1} parent=1 // pred_region
      _
    $region37: #{tpu_custom_call.1} parent=1 // pred_fallthru
      _
    // Predicated region
    $region38: #{tpu_custom_call.1} parent=1 // pred_check
      _
    $region39: #{tpu_custom_call.1} parent=1 // pred_check_branch
      %43 = sbr.rel (0) target = $region41
    $region40: #{tpu_custom_call.1} parent=1 // pred_region
      _
    $region41: #{tpu_custom_call.1} parent=1 // pred_fallthru
      _
    // Predicated region
    $region42: #{tpu_custom_call.1} parent=1 // pred_check
      _
    $region43: #{tpu_custom_call.1} parent=1 // pred_check_branch
      %45 = sbr.rel (0) target = $region45
    $region44: #{tpu_custom_call.1} parent=1 // pred_region
      _
    $region45: #{tpu_custom_call.1} parent=1 // pred_fallthru
      _
    // Predicated region
    $region46: #{tpu_custom_call.1} parent=1 // pred_check
      _
    $region47: #{tpu_custom_call.1} parent=1 // pred_check_branch
      %47 = sbr.rel (0) target = $region49
    $region48: #{tpu_custom_call.1} parent=1 // pred_region
      _
    $region49: #{tpu_custom_call.1} parent=1 // pred_fallthru
      _
    // Predicated region
    $region50: #{tpu_custom_call.1} parent=1 // pred_check
      _
    $region51: #{tpu_custom_call.1} parent=1 // pred_check_branch
      %49 = sbr.rel (0) target = $region53
    $region52: #{tpu_custom_call.1} parent=1 // pred_region
      _
    $region53: #{tpu_custom_call.1} parent=1 // pred_fallthru
      _
    // Predicated region
    $region54: #{tpu_custom_call.1} parent=1 // pred_check
      _
    $region55: #{tpu_custom_call.1} parent=1 // pred_check_branch
      %51 = sbr.rel (0) target = $region57
    $region56: #{tpu_custom_call.1} parent=1 // pred_region
      _
    $region57: #{tpu_custom_call.1} parent=1 // pred_fallthru
      _
    // Predicated region
    $region58: #{tpu_custom_call.1} parent=1 // pred_check
      _
    $region59: #{tpu_custom_call.1} parent=1 // pred_check_branch
      %53 = sbr.rel (0) target = $region61
    $region60: #{tpu_custom_call.1} parent=1 // pred_region
      _
    $region61: #{tpu_custom_call.1} parent=1 // pred_fallthru
      _
    // Predicated region
    $region62: #{tpu_custom_call.1} parent=1 // pred_check
      _
    $region63: #{tpu_custom_call.1} parent=1 // pred_check_branch
      %55 = sbr.rel (0) target = $region65
    $region64: #{tpu_custom_call.1} parent=1 // pred_region
      _
    $region65: #{tpu_custom_call.1} parent=1 // pred_fallthru
      _
    // Predicated region
    $region66: #{tpu_custom_call.1} parent=1 // pred_check
      _
    $region67: #{tpu_custom_call.1} parent=1 // pred_check_branch
      %57 = sbr.rel (0) target = $region69
    $region68: #{tpu_custom_call.1} parent=1 // pred_region
      _
    $region69: #{tpu_custom_call.1} parent=1 // pred_fallthru
      _
    // Predicated region
    $region70: #{tpu_custom_call.1} parent=1 // pred_check
      _
    $region71: #{tpu_custom_call.1} parent=1 // pred_check_branch
      %59 = sbr.rel (0) target = $region73
    $region72: #{tpu_custom_call.1} parent=1 // pred_region
      _
    $region73: #{tpu_custom_call.1} parent=1 // pred_fallthru
      _
    %v60 = vld [vmem:[%s0] sm:$0xff]
    %v61 = vld [vmem:[%s0 + $0x8] sm:$0xff]
    %v62 = vld [vmem:[%s1] sm:$0x1]
    %v63 = vld [vmem:[%s1 + $0x1] sm:$0x1]
    %vm64 = vcmp.eq.f32.partialorder %v62, 0.0
    %vm65 = vcmp.eq.f32.partialorder %v63, 0.0
    %v66 = vsel %vm64, -1e+09, 0.0
    %v67 = vsel %vm65, -1e+09, 0.0
    %v68 = vld [vmem:[%s2] sm:$0xff]
    %v69 = vld [vmem:[%s2 + $0x8] sm:$0xff]
    %v70 = vld [vmem:[%s2 + $0x10] sm:$0xff]
    %v71 = vld [vmem:[%s2 + $0x18] sm:$0xff]
    %v72 = vld [vmem:[%s2 + $0x20] sm:$0xff]
    %v73 = vld [vmem:[%s2 + $0x28] sm:$0xff]
    %v74 = vld [vmem:[%s2 + $0x30] sm:$0xff]
    %v75 = vld [vmem:[%s2 + $0x38] sm:$0xff]
    %v76 = vld [vmem:[%s2 + $0x40] sm:$0xff]
    %v77 = vld [vmem:[%s2 + $0x48] sm:$0xff]
    %v78 = vld [vmem:[%s2 + $0x50] sm:$0xff]
    %v79 = vld [vmem:[%s2 + $0x58] sm:$0xff]
    %v80 = vld [vmem:[%s2 + $0x60] sm:$0xff]
    %v81 = vld [vmem:[%s2 + $0x68] sm:$0xff]
    %v82 = vld [vmem:[%s2 + $0x70] sm:$0xff]
    %v83 = vld [vmem:[%s2 + $0x78] sm:$0xff]
    %v84 = vld [vmem:[%s3] sm:$0x1]
    %v85 = vld [vmem:[%s3 + $0x1] sm:$0x1]
    %v86 = vld [vmem:[%s3 + $0x2] sm:$0x1]
    %v87 = vld [vmem:[%s3 + $0x3] sm:$0x1]
    %v92 = vlaneseq
    %v93 = vshrl.u32 %v92, 7
    %v94 = vsub.s32 0, %v93
    %v95 = vrot.slane %v84, %v94
    %v96 = vlaneseq
    %v97 = vshrl.u32 %v96, 7
    %v98 = vsub.s32 0, %v97
    %v99 = vrot.slane %v85, %v98
    %v100 = vlaneseq
    %v101 = vshrl.u32 %v100, 7
    %v102 = vsub.s32 0, %v101
    %v103 = vrot.slane %v86, %v102
    %v104 = vlaneseq
    %v105 = vshrl.u32 %v104, 7
    %v106 = vsub.s32 0, %v105
    %v107 = vrot.slane %v87, %v106
    %vm112 = vcmask 261120
    %v114 = vsel %vm112, %v60, 0
    %116 = vmatprep.subr.mxu0 0.0
    %117 = vmatpush1.msra.mxu0 0.0
    %118 = vmatprep.subr.mxu0 0.0
    %119 = vmatpush1.msra.mxu0 0.0
    %120 = vmatprep.subr.mxu0 0.0
    %121 = vmatpush1.msra.mxu0 0.0
    %122 = vmatprep.subr.mxu0 0.0
    %123 = vmatpush1.msra.mxu0 0.0
    %124 = vmatprep.subr.mxu0 0.0
    %125 = vmatpush1.msra.mxu0 0.0
    %126 = vmatprep.subr.mxu0 0.0
    %127 = vmatpush1.msra.mxu0 0.0
    %128 = vmatprep.subr.mxu0 0.0
    %129 = vmatpush1.msra.mxu0 0.0
    %130 = vmatprep.subr.mxu0 0.0
    %131 = vmatpush1.msra.mxu0 0.0
    %132 = vmatprep.subr.mxu0 0.0
    %133 = vmatpush1.msra.mxu0 0.0
    %134 = vmatprep.subr.mxu0 0.0
    %135 = vmatpush1.msra.mxu0 0.0
    %136 = vmatprep.subr.mxu0 0.0
    %137 = vmatpush1.msra.mxu0 0.0
    %138 = vmatprep.subr.mxu0 0.0
    %139 = vmatpush1.msra.mxu0 0.0
    %140 = vmatprep.subr.mxu0 0.0
    %141 = vmatpush1.msra.mxu0 %v71
    %142 = vmatprep.subr.mxu0 0.0
    %143 = vmatpush1.msra.mxu0 %v70
    %144 = vmatprep.subr.mxu0 0.0
    %145 = vmatpush1.msra.mxu0 %v69
    %146 = vmatprep.subr.mxu0 0.0
    %147 = vmatpush1.msra.mxu0 %v68
    %148 = vmatprep.subr.mxu0 0.0
    %149 = vmatpush2.msra.mxu0 0.0
    %150 = vmatprep.subr.mxu0 0.0
    %151 = vmatpush2.msra.mxu0 0.0
    %152 = vmatprep.subr.mxu0 0.0
    %153 = vmatpush2.msra.mxu0 0.0
    %154 = vmatprep.subr.mxu0 0.0
    %155 = vmatpush2.msra.mxu0 0.0
    %156 = vmatprep.subr.mxu0 0.0
    %157 = vmatpush2.msra.mxu0 0.0
    %158 = vmatprep.subr.mxu0 0.0
    %159 = vmatpush2.msra.mxu0 0.0
    %160 = vmatprep.subr.mxu0 0.0
    %161 = vmatpush2.msra.mxu0 0.0
    %162 = vmatprep.subr.mxu0 0.0
    %163 = vmatpush2.msra.mxu0 0.0
    %164 = vmatprep.subr.mxu0 0.0
    %165 = vmatpush2.msra.mxu0 0.0
    %166 = vmatprep.subr.mxu0 0.0
    %167 = vmatpush2.msra.mxu0 0.0
    %168 = vmatprep.subr.mxu0 0.0
    %169 = vmatpush2.msra.mxu0 0.0
    %170 = vmatprep.subr.mxu0 0.0
    %171 = vmatpush2.msra.mxu0 0.0
    %172 = vmatprep.subr.mxu0 0.0
    %173 = vmatpush2.msra.mxu0 0.0
    %174 = vmatprep.subr.mxu0 0.0
    %175 = vmatpush2.msra.mxu0 0.0
    %176 = vmatprep.subr.mxu0 0.0
    %177 = vmatpush2.msra.mxu0 0.0
    %178 = vmatprep.subr.mxu0 0.0
    %179 = vmatpush2.msra.mxu0 0.0
    %180 = vmatprep.mubr.f32.mxu0 0.0
    %181 = vmatmul.mubr.f32.gmra.mxu0 %v114
    %v182 = vpop.f32.mrf.mxu0
    %v183 = vadd.f32 %v95, %v182
    %v184 = vpop.f32.mrf.mxu0
    %185 = vdwg.mxu0
    %186 = vmatprep.subr.mxu0 0.0
    %187 = vmatpush1.msra.mxu0 0.0
    %188 = vmatprep.subr.mxu0 0.0
    %189 = vmatpush1.msra.mxu0 0.0
    %190 = vmatprep.subr.mxu0 0.0
    %191 = vmatpush1.msra.mxu0 0.0
    %192 = vmatprep.subr.mxu0 0.0
    %193 = vmatpush1.msra.mxu0 0.0
    %194 = vmatprep.subr.mxu0 0.0
    %195 = vmatpush1.msra.mxu0 0.0
    %196 = vmatprep.subr.mxu0 0.0
    %197 = vmatpush1.msra.mxu0 0.0
    %198 = vmatprep.subr.mxu0 0.0
    %199 = vmatpush1.msra.mxu0 0.0
    %200 = vmatprep.subr.mxu0 0.0
    %201 = vmatpush1.msra.mxu0 0.0
    %202 = vmatprep.subr.mxu0 0.0
    %203 = vmatpush1.msra.mxu0 0.0
    %204 = vmatprep.subr.mxu0 0.0
    %205 = vmatpush1.msra.mxu0 0.0
    %206 = vmatprep.subr.mxu0 0.0
    %207 = vmatpush1.msra.mxu0 0.0
    %208 = vmatprep.subr.mxu0 0.0
    %209 = vmatpush1.msra.mxu0 0.0
    %210 = vmatprep.subr.mxu0 0.0
    %211 = vmatpush1.msra.mxu0 %v75
    %212 = vmatprep.subr.mxu0 0.0
    %213 = vmatpush1.msra.mxu0 %v74
    %214 = vmatprep.subr.mxu0 0.0
    %215 = vmatpush1.msra.mxu0 %v73
    %216 = vmatprep.subr.mxu0 0.0
    %217 = vmatpush1.msra.mxu0 %v72
    %218 = vmatprep.subr.mxu0 0.0
    %219 = vmatpush2.msra.mxu0 0.0
    %220 = vmatprep.subr.mxu0 0.0
    %221 = vmatpush2.msra.mxu0 0.0
    %222 = vmatprep.subr.mxu0 0.0
    %223 = vmatpush2.msra.mxu0 0.0
    %224 = vmatprep.subr.mxu0 0.0
    %225 = vmatpush2.msra.mxu0 0.0
    %226 = vmatprep.subr.mxu0 0.0
    %227 = vmatpush2.msra.mxu0 0.0
    %228 = vmatprep.subr.mxu0 0.0
    %229 = vmatpush2.msra.mxu0 0.0
    %230 = vmatprep.subr.mxu0 0.0
    %231 = vmatpush2.msra.mxu0 0.0
    %232 = vmatprep.subr.mxu0 0.0
    %233 = vmatpush2.msra.mxu0 0.0
    %234 = vmatprep.subr.mxu0 0.0
    %235 = vmatpush2.msra.mxu0 0.0
    %236 = vmatprep.subr.mxu0 0.0
    %237 = vmatpush2.msra.mxu0 0.0
    %238 = vmatprep.subr.mxu0 0.0
    %239 = vmatpush2.msra.mxu0 0.0
    %240 = vmatprep.subr.mxu0 0.0
    %241 = vmatpush2.msra.mxu0 0.0
    %242 = vmatprep.subr.mxu0 0.0
    %243 = vmatpush2.msra.mxu0 0.0
    %244 = vmatprep.subr.mxu0 0.0
    %245 = vmatpush2.msra.mxu0 0.0
    %246 = vmatprep.subr.mxu0 0.0
    %247 = vmatpush2.msra.mxu0 0.0
    %248 = vmatprep.subr.mxu0 0.0
    %249 = vmatpush2.msra.mxu0 0.0
    %250 = vmatprep.mubr.f32.mxu0 0.0
    %251 = vmatmul.mubr.f32.gmra.mxu0 %v114
    %v252 = vpop.f32.mrf.mxu0
    %v253 = vadd.f32 %v99, %v252
    %v254 = vpop.f32.mrf.mxu0
    %255 = vdwg.mxu0
    %256 = vmatprep.subr.mxu0 0.0
    %257 = vmatpush1.msra.mxu0 0.0
    %258 = vmatprep.subr.mxu0 0.0
    %259 = vmatpush1.msra.mxu0 0.0
    %260 = vmatprep.subr.mxu0 0.0
    %261 = vmatpush1.msra.mxu0 0.0
    %262 = vmatprep.subr.mxu0 0.0
    %263 = vmatpush1.msra.mxu0 0.0
    %264 = vmatprep.subr.mxu0 0.0
    %265 = vmatpush1.msra.mxu0 0.0
    %266 = vmatprep.subr.mxu0 0.0
    %267 = vmatpush1.msra.mxu0 0.0
    %268 = vmatprep.subr.mxu0 0.0
    %269 = vmatpush1.msra.mxu0 0.0
    %270 = vmatprep.subr.mxu0 0.0
    %271 = vmatpush1.msra.mxu0 0.0
    %272 = vmatprep.subr.mxu0 0.0
    %273 = vmatpush1.msra.mxu0 0.0
    %274 = vmatprep.subr.mxu0 0.0
    %275 = vmatpush1.msra.mxu0 0.0
    %276 = vmatprep.subr.mxu0 0.0
    %277 = vmatpush1.msra.mxu0 0.0
    %278 = vmatprep.subr.mxu0 0.0
    %279 = vmatpush1.msra.mxu0 0.0
    %280 = vmatprep.subr.mxu0 0.0
    %281 = vmatpush1.msra.mxu0 %v79
    %282 = vmatprep.subr.mxu0 0.0
    %283 = vmatpush1.msra.mxu0 %v78
    %284 = vmatprep.subr.mxu0 0.0
    %285 = vmatpush1.msra.mxu0 %v77
    %286 = vmatprep.subr.mxu0 0.0
    %287 = vmatpush1.msra.mxu0 %v76
    %288 = vmatprep.subr.mxu0 0.0
    %289 = vmatpush2.msra.mxu0 0.0
    %290 = vmatprep.subr.mxu0 0.0
    %291 = vmatpush2.msra.mxu0 0.0
    %292 = vmatprep.subr.mxu0 0.0
    %293 = vmatpush2.msra.mxu0 0.0
    %294 = vmatprep.subr.mxu0 0.0
    %295 = vmatpush2.msra.mxu0 0.0
    %296 = vmatprep.subr.mxu0 0.0
    %297 = vmatpush2.msra.mxu0 0.0
    %298 = vmatprep.subr.mxu0 0.0
    %299 = vmatpush2.msra.mxu0 0.0
    %300 = vmatprep.subr.mxu0 0.0
    %301 = vmatpush2.msra.mxu0 0.0
    %302 = vmatprep.subr.mxu0 0.0
    %303 = vmatpush2.msra.mxu0 0.0
    %304 = vmatprep.subr.mxu0 0.0
    %305 = vmatpush2.msra.mxu0 0.0
    %306 = vmatprep.subr.mxu0 0.0
    %307 = vmatpush2.msra.mxu0 0.0
    %308 = vmatprep.subr.mxu0 0.0
    %309 = vmatpush2.msra.mxu0 0.0
    %310 = vmatprep.subr.mxu0 0.0
    %311 = vmatpush2.msra.mxu0 0.0
    %312 = vmatprep.subr.mxu0 0.0
    %313 = vmatpush2.msra.mxu0 0.0
    %314 = vmatprep.subr.mxu0 0.0
    %315 = vmatpush2.msra.mxu0 0.0
    %316 = vmatprep.subr.mxu0 0.0
    %317 = vmatpush2.msra.mxu0 0.0
    %318 = vmatprep.subr.mxu0 0.0
    %319 = vmatpush2.msra.mxu0 0.0
    %320 = vmatprep.mubr.f32.mxu0 0.0
    %321 = vmatmul.mubr.f32.gmra.mxu0 %v114
    %v322 = vpop.f32.mrf.mxu0
    %v323 = vadd.f32 %v103, %v322
    %v324 = vpop.f32.mrf.mxu0
    %325 = vdwg.mxu0
    %326 = vmatprep.subr.mxu0 0.0
    %327 = vmatpush1.msra.mxu0 0.0
    %328 = vmatprep.subr.mxu0 0.0
    %329 = vmatpush1.msra.mxu0 0.0
    %330 = vmatprep.subr.mxu0 0.0
    %331 = vmatpush1.msra.mxu0 0.0
    %332 = vmatprep.subr.mxu0 0.0
    %333 = vmatpush1.msra.mxu0 0.0
    %334 = vmatprep.subr.mxu0 0.0
    %335 = vmatpush1.msra.mxu0 0.0
    %336 = vmatprep.subr.mxu0 0.0
    %337 = vmatpush1.msra.mxu0 0.0
    %338 = vmatprep.subr.mxu0 0.0
    %339 = vmatpush1.msra.mxu0 0.0
    %340 = vmatprep.subr.mxu0 0.0
    %341 = vmatpush1.msra.mxu0 0.0
    %342 = vmatprep.subr.mxu0 0.0
    %343 = vmatpush1.msra.mxu0 0.0
    %344 = vmatprep.subr.mxu0 0.0
    %345 = vmatpush1.msra.mxu0 0.0
    %346 = vmatprep.subr.mxu0 0.0
    %347 = vmatpush1.msra.mxu0 0.0
    %348 = vmatprep.subr.mxu0 0.0
    %349 = vmatpush1.msra.mxu0 0.0
    %350 = vmatprep.subr.mxu0 0.0
    %351 = vmatpush1.msra.mxu0 %v83
    %352 = vmatprep.subr.mxu0 0.0
    %353 = vmatpush1.msra.mxu0 %v82
    %354 = vmatprep.subr.mxu0 0.0
    %355 = vmatpush1.msra.mxu0 %v81
    %356 = vmatprep.subr.mxu0 0.0
    %357 = vmatpush1.msra.mxu0 %v80
    %358 = vmatprep.subr.mxu0 0.0
    %359 = vmatpush2.msra.mxu0 0.0
    %360 = vmatprep.subr.mxu0 0.0
    %361 = vmatpush2.msra.mxu0 0.0
    %362 = vmatprep.subr.mxu0 0.0
    %363 = vmatpush2.msra.mxu0 0.0
    %364 = vmatprep.subr.mxu0 0.0
    %365 = vmatpush2.msra.mxu0 0.0
    %366 = vmatprep.subr.mxu0 0.0
    %367 = vmatpush2.msra.mxu0 0.0
    %368 = vmatprep.subr.mxu0 0.0
    %369 = vmatpush2.msra.mxu0 0.0
    %370 = vmatprep.subr.mxu0 0.0
    %371 = vmatpush2.msra.mxu0 0.0
    %372 = vmatprep.subr.mxu0 0.0
    %373 = vmatpush2.msra.mxu0 0.0
    %374 = vmatprep.subr.mxu0 0.0
    %375 = vmatpush2.msra.mxu0 0.0
    %376 = vmatprep.subr.mxu0 0.0
    %377 = vmatpush2.msra.mxu0 0.0
    %378 = vmatprep.subr.mxu0 0.0
    %379 = vmatpush2.msra.mxu0 0.0
    %380 = vmatprep.subr.mxu0 0.0
    %381 = vmatpush2.msra.mxu0 0.0
    %382 = vmatprep.subr.mxu0 0.0
    %383 = vmatpush2.msra.mxu0 0.0
    %384 = vmatprep.subr.mxu0 0.0
    %385 = vmatpush2.msra.mxu0 0.0
    %386 = vmatprep.subr.mxu0 0.0
    %387 = vmatpush2.msra.mxu0 0.0
    %388 = vmatprep.subr.mxu0 0.0
    %389 = vmatpush2.msra.mxu0 0.0
    %390 = vmatprep.mubr.f32.mxu0 0.0
    %391 = vmatmul.mubr.f32.gmra.mxu0 %v114
    %v392 = vpop.f32.mrf.mxu0
    %v393 = vadd.f32 %v107, %v392
    %v394 = vpop.f32.mrf.mxu0
    %395 = vdwg.mxu0
    %v397 = vsel %vm112, %v61, 0
    %399 = vmatprep.subr.mxu0 0.0
    %400 = vmatpush1.msra.mxu0 0.0
    %401 = vmatprep.subr.mxu0 0.0
    %402 = vmatpush1.msra.mxu0 0.0
    %403 = vmatprep.subr.mxu0 0.0
    %404 = vmatpush1.msra.mxu0 0.0
    %405 = vmatprep.subr.mxu0 0.0
    %406 = vmatpush1.msra.mxu0 0.0
    %407 = vmatprep.subr.mxu0 0.0
    %408 = vmatpush1.msra.mxu0 0.0
    %409 = vmatprep.subr.mxu0 0.0
    %410 = vmatpush1.msra.mxu0 0.0
    %411 = vmatprep.subr.mxu0 0.0
    %412 = vmatpush1.msra.mxu0 0.0
    %413 = vmatprep.subr.mxu0 0.0
    %414 = vmatpush1.msra.mxu0 0.0
    %415 = vmatprep.subr.mxu0 0.0
    %416 = vmatpush1.msra.mxu0 0.0
    %417 = vmatprep.subr.mxu0 0.0
    %418 = vmatpush1.msra.mxu0 0.0
    %419 = vmatprep.subr.mxu0 0.0
    %420 = vmatpush1.msra.mxu0 0.0
    %421 = vmatprep.subr.mxu0 0.0
    %422 = vmatpush1.msra.mxu0 0.0
    %423 = vmatprep.subr.mxu0 0.0
    %424 = vmatpush1.msra.mxu0 %v71
    %425 = vmatprep.subr.mxu0 0.0
    %426 = vmatpush1.msra.mxu0 %v70
    %427 = vmatprep.subr.mxu0 0.0
    %428 = vmatpush1.msra.mxu0 %v69
    %429 = vmatprep.subr.mxu0 0.0
    %430 = vmatpush1.msra.mxu0 %v68
    %431 = vmatprep.subr.mxu0 0.0
    %432 = vmatpush2.msra.mxu0 0.0
    %433 = vmatprep.subr.mxu0 0.0
    %434 = vmatpush2.msra.mxu0 0.0
    %435 = vmatprep.subr.mxu0 0.0
    %436 = vmatpush2.msra.mxu0 0.0
    %437 = vmatprep.subr.mxu0 0.0
    %438 = vmatpush2.msra.mxu0 0.0
    %439 = vmatprep.subr.mxu0 0.0
    %440 = vmatpush2.msra.mxu0 0.0
    %441 = vmatprep.subr.mxu0 0.0
    %442 = vmatpush2.msra.mxu0 0.0
    %443 = vmatprep.subr.mxu0 0.0
    %444 = vmatpush2.msra.mxu0 0.0
    %445 = vmatprep.subr.mxu0 0.0
    %446 = vmatpush2.msra.mxu0 0.0
    %447 = vmatprep.subr.mxu0 0.0
    %448 = vmatpush2.msra.mxu0 0.0
    %449 = vmatprep.subr.mxu0 0.0
    %450 = vmatpush2.msra.mxu0 0.0
    %451 = vmatprep.subr.mxu0 0.0
    %452 = vmatpush2.msra.mxu0 0.0
    %453 = vmatprep.subr.mxu0 0.0
    %454 = vmatpush2.msra.mxu0 0.0
    %455 = vmatprep.subr.mxu0 0.0
    %456 = vmatpush2.msra.mxu0 0.0
    %457 = vmatprep.subr.mxu0 0.0
    %458 = vmatpush2.msra.mxu0 0.0
    %459 = vmatprep.subr.mxu0 0.0
    %460 = vmatpush2.msra.mxu0 0.0
    %461 = vmatprep.subr.mxu0 0.0
    %462 = vmatpush2.msra.mxu0 0.0
    %463 = vmatprep.mubr.f32.mxu0 0.0
    %464 = vmatmul.mubr.f32.gmra.mxu0 %v397
    %v465 = vpop.f32.mrf.mxu0
    %v466 = vadd.f32 %v95, %v465
    %v467 = vpop.f32.mrf.mxu0
    %468 = vdwg.mxu0
    %469 = vmatprep.subr.mxu0 0.0
    %470 = vmatpush1.msra.mxu0 0.0
    %471 = vmatprep.subr.mxu0 0.0
    %472 = vmatpush1.msra.mxu0 0.0
    %473 = vmatprep.subr.mxu0 0.0
    %474 = vmatpush1.msra.mxu0 0.0
    %475 = vmatprep.subr.mxu0 0.0
    %476 = vmatpush1.msra.mxu0 0.0
    %477 = vmatprep.subr.mxu0 0.0
    %478 = vmatpush1.msra.mxu0 0.0
    %479 = vmatprep.subr.mxu0 0.0
    %480 = vmatpush1.msra.mxu0 0.0
    %481 = vmatprep.subr.mxu0 0.0
    %482 = vmatpush1.msra.mxu0 0.0
    %483 = vmatprep.subr.mxu0 0.0
    %484 = vmatpush1.msra.mxu0 0.0
    %485 = vmatprep.subr.mxu0 0.0
    %486 = vmatpush1.msra.mxu0 0.0
    %487 = vmatprep.subr.mxu0 0.0
    %488 = vmatpush1.msra.mxu0 0.0
    %489 = vmatprep.subr.mxu0 0.0
    %490 = vmatpush1.msra.mxu0 0.0
    %491 = vmatprep.subr.mxu0 0.0
    %492 = vmatpush1.msra.mxu0 0.0
    %493 = vmatprep.subr.mxu0 0.0
    %494 = vmatpush1.msra.mxu0 %v75
    %495 = vmatprep.subr.mxu0 0.0
    %496 = vmatpush1.msra.mxu0 %v74
    %497 = vmatprep.subr.mxu0 0.0
    %498 = vmatpush1.msra.mxu0 %v73
    %499 = vmatprep.subr.mxu0 0.0
    %500 = vmatpush1.msra.mxu0 %v72
    %501 = vmatprep.subr.mxu0 0.0
    %502 = vmatpush2.msra.mxu0 0.0
    %503 = vmatprep.subr.mxu0 0.0
    %504 = vmatpush2.msra.mxu0 0.0
    %505 = vmatprep.subr.mxu0 0.0
    %506 = vmatpush2.msra.mxu0 0.0
    %507 = vmatprep.subr.mxu0 0.0
    %508 = vmatpush2.msra.mxu0 0.0
    %509 = vmatprep.subr.mxu0 0.0
    %510 = vmatpush2.msra.mxu0 0.0
    %511 = vmatprep.subr.mxu0 0.0
    %512 = vmatpush2.msra.mxu0 0.0
    %513 = vmatprep.subr.mxu0 0.0
    %514 = vmatpush2.msra.mxu0 0.0
    %515 = vmatprep.subr.mxu0 0.0
    %516 = vmatpush2.msra.mxu0 0.0
    %517 = vmatprep.subr.mxu0 0.0
    %518 = vmatpush2.msra.mxu0 0.0
    %519 = vmatprep.subr.mxu0 0.0
    %520 = vmatpush2.msra.mxu0 0.0
    %521 = vmatprep.subr.mxu0 0.0
    %522 = vmatpush2.msra.mxu0 0.0
    %523 = vmatprep.subr.mxu0 0.0
    %524 = vmatpush2.msra.mxu0 0.0
    %525 = vmatprep.subr.mxu0 0.0
    %526 = vmatpush2.msra.mxu0 0.0
    %527 = vmatprep.subr.mxu0 0.0
    %528 = vmatpush2.msra.mxu0 0.0
    %529 = vmatprep.subr.mxu0 0.0
    %530 = vmatpush2.msra.mxu0 0.0
    %531 = vmatprep.subr.mxu0 0.0
    %532 = vmatpush2.msra.mxu0 0.0
    %533 = vmatprep.mubr.f32.mxu0 0.0
    %534 = vmatmul.mubr.f32.gmra.mxu0 %v397
    %v535 = vpop.f32.mrf.mxu0
    %v536 = vadd.f32 %v99, %v535
    %v537 = vpop.f32.mrf.mxu0
    %538 = vdwg.mxu0
    %539 = vmatprep.subr.mxu0 0.0
    %540 = vmatpush1.msra.mxu0 0.0
    %541 = vmatprep.subr.mxu0 0.0
    %542 = vmatpush1.msra.mxu0 0.0
    %543 = vmatprep.subr.mxu0 0.0
    %544 = vmatpush1.msra.mxu0 0.0
    %545 = vmatprep.subr.mxu0 0.0
    %546 = vmatpush1.msra.mxu0 0.0
    %547 = vmatprep.subr.mxu0 0.0
    %548 = vmatpush1.msra.mxu0 0.0
    %549 = vmatprep.subr.mxu0 0.0
    %550 = vmatpush1.msra.mxu0 0.0
    %551 = vmatprep.subr.mxu0 0.0
    %552 = vmatpush1.msra.mxu0 0.0
    %553 = vmatprep.subr.mxu0 0.0
    %554 = vmatpush1.msra.mxu0 0.0
    %555 = vmatprep.subr.mxu0 0.0
    %556 = vmatpush1.msra.mxu0 0.0
    %557 = vmatprep.subr.mxu0 0.0
    %558 = vmatpush1.msra.mxu0 0.0
    %559 = vmatprep.subr.mxu0 0.0
    %560 = vmatpush1.msra.mxu0 0.0
    %561 = vmatprep.subr.mxu0 0.0
    %562 = vmatpush1.msra.mxu0 0.0
    %563 = vmatprep.subr.mxu0 0.0
    %564 = vmatpush1.msra.mxu0 %v79
    %565 = vmatprep.subr.mxu0 0.0
    %566 = vmatpush1.msra.mxu0 %v78
    %567 = vmatprep.subr.mxu0 0.0
    %568 = vmatpush1.msra.mxu0 %v77
    %569 = vmatprep.subr.mxu0 0.0
    %570 = vmatpush1.msra.mxu0 %v76
    %571 = vmatprep.subr.mxu0 0.0
    %572 = vmatpush2.msra.mxu0 0.0
    %573 = vmatprep.subr.mxu0 0.0
    %574 = vmatpush2.msra.mxu0 0.0
    %575 = vmatprep.subr.mxu0 0.0
    %576 = vmatpush2.msra.mxu0 0.0
    %577 = vmatprep.subr.mxu0 0.0
    %578 = vmatpush2.msra.mxu0 0.0
    %579 = vmatprep.subr.mxu0 0.0
    %580 = vmatpush2.msra.mxu0 0.0
    %581 = vmatprep.subr.mxu0 0.0
    %582 = vmatpush2.msra.mxu0 0.0
    %583 = vmatprep.subr.mxu0 0.0
    %584 = vmatpush2.msra.mxu0 0.0
    %585 = vmatprep.subr.mxu0 0.0
    %586 = vmatpush2.msra.mxu0 0.0
    %587 = vmatprep.subr.mxu0 0.0
    %588 = vmatpush2.msra.mxu0 0.0
    %589 = vmatprep.subr.mxu0 0.0
    %590 = vmatpush2.msra.mxu0 0.0
    %591 = vmatprep.subr.mxu0 0.0
    %592 = vmatpush2.msra.mxu0 0.0
    %593 = vmatprep.subr.mxu0 0.0
    %594 = vmatpush2.msra.mxu0 0.0
    %595 = vmatprep.subr.mxu0 0.0
    %596 = vmatpush2.msra.mxu0 0.0
    %597 = vmatprep.subr.mxu0 0.0
    %598 = vmatpush2.msra.mxu0 0.0
    %599 = vmatprep.subr.mxu0 0.0
    %600 = vmatpush2.msra.mxu0 0.0
    %601 = vmatprep.subr.mxu0 0.0
    %602 = vmatpush2.msra.mxu0 0.0
    %603 = vmatprep.mubr.f32.mxu0 0.0
    %604 = vmatmul.mubr.f32.gmra.mxu0 %v397
    %v605 = vpop.f32.mrf.mxu0
    %v606 = vadd.f32 %v103, %v605
    %v607 = vpop.f32.mrf.mxu0
    %608 = vdwg.mxu0
    %609 = vmatprep.subr.mxu0 0.0
    %610 = vmatpush1.msra.mxu0 0.0
    %611 = vmatprep.subr.mxu0 0.0
    %612 = vmatpush1.msra.mxu0 0.0
    %613 = vmatprep.subr.mxu0 0.0
    %614 = vmatpush1.msra.mxu0 0.0
    %615 = vmatprep.subr.mxu0 0.0
    %616 = vmatpush1.msra.mxu0 0.0
    %617 = vmatprep.subr.mxu0 0.0
    %618 = vmatpush1.msra.mxu0 0.0
    %619 = vmatprep.subr.mxu0 0.0
    %620 = vmatpush1.msra.mxu0 0.0
    %621 = vmatprep.subr.mxu0 0.0
    %622 = vmatpush1.msra.mxu0 0.0
    %623 = vmatprep.subr.mxu0 0.0
    %624 = vmatpush1.msra.mxu0 0.0
    %625 = vmatprep.subr.mxu0 0.0
    %626 = vmatpush1.msra.mxu0 0.0
    %627 = vmatprep.subr.mxu0 0.0
    %628 = vmatpush1.msra.mxu0 0.0
    %629 = vmatprep.subr.mxu0 0.0
    %630 = vmatpush1.msra.mxu0 0.0
    %631 = vmatprep.subr.mxu0 0.0
    %632 = vmatpush1.msra.mxu0 0.0
    %633 = vmatprep.subr.mxu0 0.0
    %634 = vmatpush1.msra.mxu0 %v83
    %635 = vmatprep.subr.mxu0 0.0
    %636 = vmatpush1.msra.mxu0 %v82
    %637 = vmatprep.subr.mxu0 0.0
    %638 = vmatpush1.msra.mxu0 %v81
    %639 = vmatprep.subr.mxu0 0.0
    %640 = vmatpush1.msra.mxu0 %v80
    %641 = vmatprep.subr.mxu0 0.0
    %642 = vmatpush2.msra.mxu0 0.0
    %643 = vmatprep.subr.mxu0 0.0
    %644 = vmatpush2.msra.mxu0 0.0
    %645 = vmatprep.subr.mxu0 0.0
    %646 = vmatpush2.msra.mxu0 0.0
    %647 = vmatprep.subr.mxu0 0.0
    %648 = vmatpush2.msra.mxu0 0.0
    %649 = vmatprep.subr.mxu0 0.0
    %650 = vmatpush2.msra.mxu0 0.0
    %651 = vmatprep.subr.mxu0 0.0
    %652 = vmatpush2.msra.mxu0 0.0
    %653 = vmatprep.subr.mxu0 0.0
    %654 = vmatpush2.msra.mxu0 0.0
    %655 = vmatprep.subr.mxu0 0.0
    %656 = vmatpush2.msra.mxu0 0.0
    %657 = vmatprep.subr.mxu0 0.0
    %658 = vmatpush2.msra.mxu0 0.0
    %659 = vmatprep.subr.mxu0 0.0
    %660 = vmatpush2.msra.mxu0 0.0
    %661 = vmatprep.subr.mxu0 0.0
    %662 = vmatpush2.msra.mxu0 0.0
    %663 = vmatprep.subr.mxu0 0.0
    %664 = vmatpush2.msra.mxu0 0.0
    %665 = vmatprep.subr.mxu0 0.0
    %666 = vmatpush2.msra.mxu0 0.0
    %667 = vmatprep.subr.mxu0 0.0
    %668 = vmatpush2.msra.mxu0 0.0
    %669 = vmatprep.subr.mxu0 0.0
    %670 = vmatpush2.msra.mxu0 0.0
    %671 = vmatprep.subr.mxu0 0.0
    %672 = vmatpush2.msra.mxu0 0.0
    %673 = vmatprep.mubr.f32.mxu0 0.0
    %674 = vmatmul.mubr.f32.gmra.mxu0 %v397
    %v675 = vpop.f32.mrf.mxu0
    %v676 = vadd.f32 %v107, %v675
    %v677 = vpop.f32.mrf.mxu0
    %678 = vdwg.mxu0
    %v679 = vld [vmem:[%s4] sm:$0xff]
    %v680 = vld [vmem:[%s4 + $0x8] sm:$0xff]
    %v681 = vld [vmem:[%s4 + $0x10] sm:$0xff]
    %v682 = vld [vmem:[%s4 + $0x18] sm:$0xff]
    %v683 = vld [vmem:[%s4 + $0x20] sm:$0xff]
    %v684 = vld [vmem:[%s4 + $0x28] sm:$0xff]
    %v685 = vld [vmem:[%s4 + $0x30] sm:$0xff]
    %v686 = vld [vmem:[%s4 + $0x38] sm:$0xff]
    %v687 = vld [vmem:[%s4 + $0x40] sm:$0xff]
    %v688 = vld [vmem:[%s4 + $0x48] sm:$0xff]
    %v689 = vld [vmem:[%s4 + $0x50] sm:$0xff]
    %v690 = vld [vmem:[%s4 + $0x58] sm:$0xff]
    %v691 = vld [vmem:[%s4 + $0x60] sm:$0xff]
    %v692 = vld [vmem:[%s4 + $0x68] sm:$0xff]
    %v693 = vld [vmem:[%s4 + $0x70] sm:$0xff]
    %v694 = vld [vmem:[%s4 + $0x78] sm:$0xff]
    %v695 = vld [vmem:[%s5] sm:$0x1]
    %v696 = vld [vmem:[%s5 + $0x1] sm:$0x1]
    %v697 = vld [vmem:[%s5 + $0x2] sm:$0x1]
    %v698 = vld [vmem:[%s5 + $0x3] sm:$0x1]
    %v703 = vlaneseq
    %v704 = vshrl.u32 %v703, 7
    %v705 = vsub.s32 0, %v704
    %v706 = vrot.slane %v695, %v705
    %v707 = vlaneseq
    %v708 = vshrl.u32 %v707, 7
    %v709 = vsub.s32 0, %v708
    %v710 = vrot.slane %v696, %v709
    %v711 = vlaneseq
    %v712 = vshrl.u32 %v711, 7
    %v713 = vsub.s32 0, %v712
    %v714 = vrot.slane %v697, %v713
    %v715 = vlaneseq
    %v716 = vshrl.u32 %v715, 7
    %v717 = vsub.s32 0, %v716
    %v718 = vrot.slane %v698, %v717
    %723 = vmatprep.subr.mxu0 0.0
    %724 = vmatpush1.msra.mxu0 0.0
    %725 = vmatprep.subr.mxu0 0.0
    %726 = vmatpush1.msra.mxu0 0.0
    %727 = vmatprep.subr.mxu0 0.0
    %728 = vmatpush1.msra.mxu0 0.0
    %729 = vmatprep.subr.mxu0 0.0
    %730 = vmatpush1.msra.mxu0 0.0
    %731 = vmatprep.subr.mxu0 0.0
    %732 = vmatpush1.msra.mxu0 0.0
    %733 = vmatprep.subr.mxu0 0.0
    %734 = vmatpush1.msra.mxu0 0.0
    %735 = vmatprep.subr.mxu0 0.0
    %736 = vmatpush1.msra.mxu0 0.0
    %737 = vmatprep.subr.mxu0 0.0
    %738 = vmatpush1.msra.mxu0 0.0
    %739 = vmatprep.subr.mxu0 0.0
    %740 = vmatpush1.msra.mxu0 0.0
    %741 = vmatprep.subr.mxu0 0.0
    %742 = vmatpush1.msra.mxu0 0.0
    %743 = vmatprep.subr.mxu0 0.0
    %744 = vmatpush1.msra.mxu0 0.0
    %745 = vmatprep.subr.mxu0 0.0
    %746 = vmatpush1.msra.mxu0 0.0
    %747 = vmatprep.subr.mxu0 0.0
    %748 = vmatpush1.msra.mxu0 %v682
    %749 = vmatprep.subr.mxu0 0.0
    %750 = vmatpush1.msra.mxu0 %v681
    %751 = vmatprep.subr.mxu0 0.0
    %752 = vmatpush1.msra.mxu0 %v680
    %753 = vmatprep.subr.mxu0 0.0
    %754 = vmatpush1.msra.mxu0 %v679
    %755 = vmatprep.subr.mxu0 0.0
    %756 = vmatpush2.msra.mxu0 0.0
    %757 = vmatprep.subr.mxu0 0.0
    %758 = vmatpush2.msra.mxu0 0.0
    %759 = vmatprep.subr.mxu0 0.0
    %760 = vmatpush2.msra.mxu0 0.0
    %761 = vmatprep.subr.mxu0 0.0
    %762 = vmatpush2.msra.mxu0 0.0
    %763 = vmatprep.subr.mxu0 0.0
    %764 = vmatpush2.msra.mxu0 0.0
    %765 = vmatprep.subr.mxu0 0.0
    %766 = vmatpush2.msra.mxu0 0.0
    %767 = vmatprep.subr.mxu0 0.0
    %768 = vmatpush2.msra.mxu0 0.0
    %769 = vmatprep.subr.mxu0 0.0
    %770 = vmatpush2.msra.mxu0 0.0
    %771 = vmatprep.subr.mxu0 0.0
    %772 = vmatpush2.msra.mxu0 0.0
    %773 = vmatprep.subr.mxu0 0.0
    %774 = vmatpush2.msra.mxu0 0.0
    %775 = vmatprep.subr.mxu0 0.0
    %776 = vmatpush2.msra.mxu0 0.0
    %777 = vmatprep.subr.mxu0 0.0
    %778 = vmatpush2.msra.mxu0 0.0
    %779 = vmatprep.subr.mxu0 0.0
    %780 = vmatpush2.msra.mxu0 0.0
    %781 = vmatprep.subr.mxu0 0.0
    %782 = vmatpush2.msra.mxu0 0.0
    %783 = vmatprep.subr.mxu0 0.0
    %784 = vmatpush2.msra.mxu0 0.0
    %785 = vmatprep.subr.mxu0 0.0
    %786 = vmatpush2.msra.mxu0 0.0
    %787 = vmatprep.mubr.f32.mxu0 0.0
    %788 = vmatmul.mubr.f32.gmra.mxu0 %v114
    %v789 = vpop.f32.mrf.mxu0
    %v790 = vadd.f32 %v706, %v789
    %v791 = vpop.f32.mrf.mxu0
    %792 = vdwg.mxu0
    %793 = vmatprep.subr.mxu0 0.0
    %794 = vmatpush1.msra.mxu0 0.0
    %795 = vmatprep.subr.mxu0 0.0
    %796 = vmatpush1.msra.mxu0 0.0
    %797 = vmatprep.subr.mxu0 0.0
    %798 = vmatpush1.msra.mxu0 0.0
    %799 = vmatprep.subr.mxu0 0.0
    %800 = vmatpush1.msra.mxu0 0.0
    %801 = vmatprep.subr.mxu0 0.0
    %802 = vmatpush1.msra.mxu0 0.0
    %803 = vmatprep.subr.mxu0 0.0
    %804 = vmatpush1.msra.mxu0 0.0
    %805 = vmatprep.subr.mxu0 0.0
    %806 = vmatpush1.msra.mxu0 0.0
    %807 = vmatprep.subr.mxu0 0.0
    %808 = vmatpush1.msra.mxu0 0.0
    %809 = vmatprep.subr.mxu0 0.0
    %810 = vmatpush1.msra.mxu0 0.0
    %811 = vmatprep.subr.mxu0 0.0
    %812 = vmatpush1.msra.mxu0 0.0
    %813 = vmatprep.subr.mxu0 0.0
    %814 = vmatpush1.msra.mxu0 0.0
    %815 = vmatprep.subr.mxu0 0.0
    %816 = vmatpush1.msra.mxu0 0.0
    %817 = vmatprep.subr.mxu0 0.0
    %818 = vmatpush1.msra.mxu0 %v686
    %819 = vmatprep.subr.mxu0 0.0
    %820 = vmatpush1.msra.mxu0 %v685
    %821 = vmatprep.subr.mxu0 0.0
    %822 = vmatpush1.msra.mxu0 %v684
    %823 = vmatprep.subr.mxu0 0.0
    %824 = vmatpush1.msra.mxu0 %v683
    %825 = vmatprep.subr.mxu0 0.0
    %826 = vmatpush2.msra.mxu0 0.0
    %827 = vmatprep.subr.mxu0 0.0
    %828 = vmatpush2.msra.mxu0 0.0
    %829 = vmatprep.subr.mxu0 0.0
    %830 = vmatpush2.msra.mxu0 0.0
    %831 = vmatprep.subr.mxu0 0.0
    %832 = vmatpush2.msra.mxu0 0.0
    %833 = vmatprep.subr.mxu0 0.0
    %834 = vmatpush2.msra.mxu0 0.0
    %835 = vmatprep.subr.mxu0 0.0
    %836 = vmatpush2.msra.mxu0 0.0
    %837 = vmatprep.subr.mxu0 0.0
    %838 = vmatpush2.msra.mxu0 0.0
    %839 = vmatprep.subr.mxu0 0.0
    %840 = vmatpush2.msra.mxu0 0.0
    %841 = vmatprep.subr.mxu0 0.0
    %842 = vmatpush2.msra.mxu0 0.0
    %843 = vmatprep.subr.mxu0 0.0
    %844 = vmatpush2.msra.mxu0 0.0
    %845 = vmatprep.subr.mxu0 0.0
    %846 = vmatpush2.msra.mxu0 0.0
    %847 = vmatprep.subr.mxu0 0.0
    %848 = vmatpush2.msra.mxu0 0.0
    %849 = vmatprep.subr.mxu0 0.0
    %850 = vmatpush2.msra.mxu0 0.0
    %851 = vmatprep.subr.mxu0 0.0
    %852 = vmatpush2.msra.mxu0 0.0
    %853 = vmatprep.subr.mxu0 0.0
    %854 = vmatpush2.msra.mxu0 0.0
    %855 = vmatprep.subr.mxu0 0.0
    %856 = vmatpush2.msra.mxu0 0.0
    %857 = vmatprep.mubr.f32.mxu0 0.0
    %858 = vmatmul.mubr.f32.gmra.mxu0 %v114
    %v859 = vpop.f32.mrf.mxu0
    %v860 = vadd.f32 %v710, %v859
    %v861 = vpop.f32.mrf.mxu0
    %862 = vdwg.mxu0
    %863 = vmatprep.subr.mxu0 0.0
    %864 = vmatpush1.msra.mxu0 0.0
    %865 = vmatprep.subr.mxu0 0.0
    %866 = vmatpush1.msra.mxu0 0.0
    %867 = vmatprep.subr.mxu0 0.0
    %868 = vmatpush1.msra.mxu0 0.0
    %869 = vmatprep.subr.mxu0 0.0
    %870 = vmatpush1.msra.mxu0 0.0
    %871 = vmatprep.subr.mxu0 0.0
    %872 = vmatpush1.msra.mxu0 0.0
    %873 = vmatprep.subr.mxu0 0.0
    %874 = vmatpush1.msra.mxu0 0.0
    %875 = vmatprep.subr.mxu0 0.0
    %876 = vmatpush1.msra.mxu0 0.0
    %877 = vmatprep.subr.mxu0 0.0
    %878 = vmatpush1.msra.mxu0 0.0
    %879 = vmatprep.subr.mxu0 0.0
    %880 = vmatpush1.msra.mxu0 0.0
    %881 = vmatprep.subr.mxu0 0.0
    %882 = vmatpush1.msra.mxu0 0.0
    %883 = vmatprep.subr.mxu0 0.0
    %884 = vmatpush1.msra.mxu0 0.0
    %885 = vmatprep.subr.mxu0 0.0
    %886 = vmatpush1.msra.mxu0 0.0
    %887 = vmatprep.subr.mxu0 0.0
    %888 = vmatpush1.msra.mxu0 %v690
    %889 = vmatprep.subr.mxu0 0.0
    %890 = vmatpush1.msra.mxu0 %v689
    %891 = vmatprep.subr.mxu0 0.0
    %892 = vmatpush1.msra.mxu0 %v688
    %893 = vmatprep.subr.mxu0 0.0
    %894 = vmatpush1.msra.mxu0 %v687
    %895 = vmatprep.subr.mxu0 0.0
    %896 = vmatpush2.msra.mxu0 0.0
    %897 = vmatprep.subr.mxu0 0.0
    %898 = vmatpush2.msra.mxu0 0.0
    %899 = vmatprep.subr.mxu0 0.0
    %900 = vmatpush2.msra.mxu0 0.0
    %901 = vmatprep.subr.mxu0 0.0
    %902 = vmatpush2.msra.mxu0 0.0
    %903 = vmatprep.subr.mxu0 0.0
    %904 = vmatpush2.msra.mxu0 0.0
    %905 = vmatprep.subr.mxu0 0.0
    %906 = vmatpush2.msra.mxu0 0.0
    %907 = vmatprep.subr.mxu0 0.0
    %908 = vmatpush2.msra.mxu0 0.0
    %909 = vmatprep.subr.mxu0 0.0
    %910 = vmatpush2.msra.mxu0 0.0
    %911 = vmatprep.subr.mxu0 0.0
    %912 = vmatpush2.msra.mxu0 0.0
    %913 = vmatprep.subr.mxu0 0.0
    %914 = vmatpush2.msra.mxu0 0.0
    %915 = vmatprep.subr.mxu0 0.0
    %916 = vmatpush2.msra.mxu0 0.0
    %917 = vmatprep.subr.mxu0 0.0
    %918 = vmatpush2.msra.mxu0 0.0
    %919 = vmatprep.subr.mxu0 0.0
    %920 = vmatpush2.msra.mxu0 0.0
    %921 = vmatprep.subr.mxu0 0.0
    %922 = vmatpush2.msra.mxu0 0.0
    %923 = vmatprep.subr.mxu0 0.0
    %924 = vmatpush2.msra.mxu0 0.0
    %925 = vmatprep.subr.mxu0 0.0
    %926 = vmatpush2.msra.mxu0 0.0
    %927 = vmatprep.mubr.f32.mxu0 0.0
    %928 = vmatmul.mubr.f32.gmra.mxu0 %v114
    %v929 = vpop.f32.mrf.mxu0
    %v930 = vadd.f32 %v714, %v929
    %v931 = vpop.f32.mrf.mxu0
    %932 = vdwg.mxu0
    %933 = vmatprep.subr.mxu0 0.0
    %934 = vmatpush1.msra.mxu0 0.0
    %935 = vmatprep.subr.mxu0 0.0
    %936 = vmatpush1.msra.mxu0 0.0
    %937 = vmatprep.subr.mxu0 0.0
    %938 = vmatpush1.msra.mxu0 0.0
    %939 = vmatprep.subr.mxu0 0.0
    %940 = vmatpush1.msra.mxu0 0.0
    %941 = vmatprep.subr.mxu0 0.0
    %942 = vmatpush1.msra.mxu0 0.0
    %943 = vmatprep.subr.mxu0 0.0
    %944 = vmatpush1.msra.mxu0 0.0
    %945 = vmatprep.subr.mxu0 0.0
    %946 = vmatpush1.msra.mxu0 0.0
    %947 = vmatprep.subr.mxu0 0.0
    %948 = vmatpush1.msra.mxu0 0.0
    %949 = vmatprep.subr.mxu0 0.0
    %950 = vmatpush1.msra.mxu0 0.0
    %951 = vmatprep.subr.mxu0 0.0
    %952 = vmatpush1.msra.mxu0 0.0
    %953 = vmatprep.subr.mxu0 0.0
    %954 = vmatpush1.msra.mxu0 0.0
    %955 = vmatprep.subr.mxu0 0.0
    %956 = vmatpush1.msra.mxu0 0.0
    %957 = vmatprep.subr.mxu0 0.0
    %958 = vmatpush1.msra.mxu0 %v694
    %959 = vmatprep.subr.mxu0 0.0
    %960 = vmatpush1.msra.mxu0 %v693
    %961 = vmatprep.subr.mxu0 0.0
    %962 = vmatpush1.msra.mxu0 %v692
    %963 = vmatprep.subr.mxu0 0.0
    %964 = vmatpush1.msra.mxu0 %v691
    %965 = vmatprep.subr.mxu0 0.0
    %966 = vmatpush2.msra.mxu0 0.0
    %967 = vmatprep.subr.mxu0 0.0
    %968 = vmatpush2.msra.mxu0 0.0
    %969 = vmatprep.subr.mxu0 0.0
    %970 = vmatpush2.msra.mxu0 0.0
    %971 = vmatprep.subr.mxu0 0.0
    %972 = vmatpush2.msra.mxu0 0.0
    %973 = vmatprep.subr.mxu0 0.0
    %974 = vmatpush2.msra.mxu0 0.0
    %975 = vmatprep.subr.mxu0 0.0
    %976 = vmatpush2.msra.mxu0 0.0
    %977 = vmatprep.subr.mxu0 0.0
    %978 = vmatpush2.msra.mxu0 0.0
    %979 = vmatprep.subr.mxu0 0.0
    %980 = vmatpush2.msra.mxu0 0.0
    %981 = vmatprep.subr.mxu0 0.0
    %982 = vmatpush2.msra.mxu0 0.0
    %983 = vmatprep.subr.mxu0 0.0
    %984 = vmatpush2.msra.mxu0 0.0
    %985 = vmatprep.subr.mxu0 0.0
    %986 = vmatpush2.msra.mxu0 0.0
    %987 = vmatprep.subr.mxu0 0.0
    %988 = vmatpush2.msra.mxu0 0.0
    %989 = vmatprep.subr.mxu0 0.0
    %990 = vmatpush2.msra.mxu0 0.0
    %991 = vmatprep.subr.mxu0 0.0
    %992 = vmatpush2.msra.mxu0 0.0
    %993 = vmatprep.subr.mxu0 0.0
    %994 = vmatpush2.msra.mxu0 0.0
    %995 = vmatprep.subr.mxu0 0.0
    %996 = vmatpush2.msra.mxu0 0.0
    %997 = vmatprep.mubr.f32.mxu0 0.0
    %998 = vmatmul.mubr.f32.gmra.mxu0 %v114
    %v999 = vpop.f32.mrf.mxu0
    %v1000 = vadd.f32 %v718, %v999
    %v1001 = vpop.f32.mrf.mxu0
    %1002 = vdwg.mxu0
    %1003 = vmatprep.subr.mxu0 0.0
    %1004 = vmatpush1.msra.mxu0 0.0
    %1005 = vmatprep.subr.mxu0 0.0
    %1006 = vmatpush1.msra.mxu0 0.0
    %1007 = vmatprep.subr.mxu0 0.0
    %1008 = vmatpush1.msra.mxu0 0.0
    %1009 = vmatprep.subr.mxu0 0.0
    %1010 = vmatpush1.msra.mxu0 0.0
    %1011 = vmatprep.subr.mxu0 0.0
    %1012 = vmatpush1.msra.mxu0 0.0
    %1013 = vmatprep.subr.mxu0 0.0
    %1014 = vmatpush1.msra.mxu0 0.0
    %1015 = vmatprep.subr.mxu0 0.0
    %1016 = vmatpush1.msra.mxu0 0.0
    %1017 = vmatprep.subr.mxu0 0.0
    %1018 = vmatpush1.msra.mxu0 0.0
    %1019 = vmatprep.subr.mxu0 0.0
    %1020 = vmatpush1.msra.mxu0 0.0
    %1021 = vmatprep.subr.mxu0 0.0
    %1022 = vmatpush1.msra.mxu0 0.0
    %1023 = vmatprep.subr.mxu0 0.0
    %1024 = vmatpush1.msra.mxu0 0.0
    %1025 = vmatprep.subr.mxu0 0.0
    %1026 = vmatpush1.msra.mxu0 0.0
    %1027 = vmatprep.subr.mxu0 0.0
    %1028 = vmatpush1.msra.mxu0 %v682
    %1029 = vmatprep.subr.mxu0 0.0
    %1030 = vmatpush1.msra.mxu0 %v681
    %1031 = vmatprep.subr.mxu0 0.0
    %1032 = vmatpush1.msra.mxu0 %v680
    %1033 = vmatprep.subr.mxu0 0.0
    %1034 = vmatpush1.msra.mxu0 %v679
    %1035 = vmatprep.subr.mxu0 0.0
    %1036 = vmatpush2.msra.mxu0 0.0
    %1037 = vmatprep.subr.mxu0 0.0
    %1038 = vmatpush2.msra.mxu0 0.0
    %1039 = vmatprep.subr.mxu0 0.0
    %1040 = vmatpush2.msra.mxu0 0.0
    %1041 = vmatprep.subr.mxu0 0.0
    %1042 = vmatpush2.msra.mxu0 0.0
    %1043 = vmatprep.subr.mxu0 0.0
    %1044 = vmatpush2.msra.mxu0 0.0
    %1045 = vmatprep.subr.mxu0 0.0
    %1046 = vmatpush2.msra.mxu0 0.0
    %1047 = vmatprep.subr.mxu0 0.0
    %1048 = vmatpush2.msra.mxu0 0.0
    %1049 = vmatprep.subr.mxu0 0.0
    %1050 = vmatpush2.msra.mxu0 0.0
    %1051 = vmatprep.subr.mxu0 0.0
    %1052 = vmatpush2.msra.mxu0 0.0
    %1053 = vmatprep.subr.mxu0 0.0
    %1054 = vmatpush2.msra.mxu0 0.0
    %1055 = vmatprep.subr.mxu0 0.0
    %1056 = vmatpush2.msra.mxu0 0.0
    %1057 = vmatprep.subr.mxu0 0.0
    %1058 = vmatpush2.msra.mxu0 0.0
    %1059 = vmatprep.subr.mxu0 0.0
    %1060 = vmatpush2.msra.mxu0 0.0
    %1061 = vmatprep.subr.mxu0 0.0
    %1062 = vmatpush2.msra.mxu0 0.0
    %1063 = vmatprep.subr.mxu0 0.0
    %1064 = vmatpush2.msra.mxu0 0.0
    %1065 = vmatprep.subr.mxu0 0.0
    %1066 = vmatpush2.msra.mxu0 0.0
    %1067 = vmatprep.mubr.f32.mxu0 0.0
    %1068 = vmatmul.mubr.f32.gmra.mxu0 %v397
    %v1069 = vpop.f32.mrf.mxu0
    %v1070 = vadd.f32 %v706, %v1069
    %v1071 = vpop.f32.mrf.mxu0
    %1072 = vdwg.mxu0
    %1073 = vmatprep.subr.mxu0 0.0
    %1074 = vmatpush1.msra.mxu0 0.0
    %1075 = vmatprep.subr.mxu0 0.0
    %1076 = vmatpush1.msra.mxu0 0.0
    %1077 = vmatprep.subr.mxu0 0.0
    %1078 = vmatpush1.msra.mxu0 0.0
    %1079 = vmatprep.subr.mxu0 0.0
    %1080 = vmatpush1.msra.mxu0 0.0
    %1081 = vmatprep.subr.mxu0 0.0
    %1082 = vmatpush1.msra.mxu0 0.0
    %1083 = vmatprep.subr.mxu0 0.0
    %1084 = vmatpush1.msra.mxu0 0.0
    %1085 = vmatprep.subr.mxu0 0.0
    %1086 = vmatpush1.msra.mxu0 0.0
    %1087 = vmatprep.subr.mxu0 0.0
    %1088 = vmatpush1.msra.mxu0 0.0
    %1089 = vmatprep.subr.mxu0 0.0
    %1090 = vmatpush1.msra.mxu0 0.0
    %1091 = vmatprep.subr.mxu0 0.0
    %1092 = vmatpush1.msra.mxu0 0.0
    %1093 = vmatprep.subr.mxu0 0.0
    %1094 = vmatpush1.msra.mxu0 0.0
    %1095 = vmatprep.subr.mxu0 0.0
    %1096 = vmatpush1.msra.mxu0 0.0
    %1097 = vmatprep.subr.mxu0 0.0
    %1098 = vmatpush1.msra.mxu0 %v686
    %1099 = vmatprep.subr.mxu0 0.0
    %1100 = vmatpush1.msra.mxu0 %v685
    %1101 = vmatprep.subr.mxu0 0.0
    %1102 = vmatpush1.msra.mxu0 %v684
    %1103 = vmatprep.subr.mxu0 0.0
    %1104 = vmatpush1.msra.mxu0 %v683
    %1105 = vmatprep.subr.mxu0 0.0
    %1106 = vmatpush2.msra.mxu0 0.0
    %1107 = vmatprep.subr.mxu0 0.0
    %1108 = vmatpush2.msra.mxu0 0.0
    %1109 = vmatprep.subr.mxu0 0.0
    %1110 = vmatpush2.msra.mxu0 0.0
    %1111 = vmatprep.subr.mxu0 0.0
    %1112 = vmatpush2.msra.mxu0 0.0
    %1113 = vmatprep.subr.mxu0 0.0
    %1114 = vmatpush2.msra.mxu0 0.0
    %1115 = vmatprep.subr.mxu0 0.0
    %1116 = vmatpush2.msra.mxu0 0.0
    %1117 = vmatprep.subr.mxu0 0.0
    %1118 = vmatpush2.msra.mxu0 0.0
    %1119 = vmatprep.subr.mxu0 0.0
    %1120 = vmatpush2.msra.mxu0 0.0
    %1121 = vmatprep.subr.mxu0 0.0
    %1122 = vmatpush2.msra.mxu0 0.0
    %1123 = vmatprep.subr.mxu0 0.0
    %1124 = vmatpush2.msra.mxu0 0.0
    %1125 = vmatprep.subr.mxu0 0.0
    %1126 = vmatpush2.msra.mxu0 0.0
    %1127 = vmatprep.subr.mxu0 0.0
    %1128 = vmatpush2.msra.mxu0 0.0
    %1129 = vmatprep.subr.mxu0 0.0
    %1130 = vmatpush2.msra.mxu0 0.0
    %1131 = vmatprep.subr.mxu0 0.0
    %1132 = vmatpush2.msra.mxu0 0.0
    %1133 = vmatprep.subr.mxu0 0.0
    %1134 = vmatpush2.msra.mxu0 0.0
    %1135 = vmatprep.subr.mxu0 0.0
    %1136 = vmatpush2.msra.mxu0 0.0
    %1137 = vmatprep.mubr.f32.mxu0 0.0
    %1138 = vmatmul.mubr.f32.gmra.mxu0 %v397
    %v1139 = vpop.f32.mrf.mxu0
    %v1140 = vadd.f32 %v710, %v1139
    %v1141 = vpop.f32.mrf.mxu0
    %1142 = vdwg.mxu0
    %1143 = vmatprep.subr.mxu0 0.0
    %1144 = vmatpush1.msra.mxu0 0.0
    %1145 = vmatprep.subr.mxu0 0.0
    %1146 = vmatpush1.msra.mxu0 0.0
    %1147 = vmatprep.subr.mxu0 0.0
    %1148 = vmatpush1.msra.mxu0 0.0
    %1149 = vmatprep.subr.mxu0 0.0
    %1150 = vmatpush1.msra.mxu0 0.0
    %1151 = vmatprep.subr.mxu0 0.0
    %1152 = vmatpush1.msra.mxu0 0.0
    %1153 = vmatprep.subr.mxu0 0.0
    %1154 = vmatpush1.msra.mxu0 0.0
    %1155 = vmatprep.subr.mxu0 0.0
    %1156 = vmatpush1.msra.mxu0 0.0
    %1157 = vmatprep.subr.mxu0 0.0
    %1158 = vmatpush1.msra.mxu0 0.0
    %1159 = vmatprep.subr.mxu0 0.0
    %1160 = vmatpush1.msra.mxu0 0.0
    %1161 = vmatprep.subr.mxu0 0.0
    %1162 = vmatpush1.msra.mxu0 0.0
    %1163 = vmatprep.subr.mxu0 0.0
    %1164 = vmatpush1.msra.mxu0 0.0
    %1165 = vmatprep.subr.mxu0 0.0
    %1166 = vmatpush1.msra.mxu0 0.0
    %1167 = vmatprep.subr.mxu0 0.0
    %1168 = vmatpush1.msra.mxu0 %v690
    %1169 = vmatprep.subr.mxu0 0.0
    %1170 = vmatpush1.msra.mxu0 %v689
    %1171 = vmatprep.subr.mxu0 0.0
    %1172 = vmatpush1.msra.mxu0 %v688
    %1173 = vmatprep.subr.mxu0 0.0
    %1174 = vmatpush1.msra.mxu0 %v687
    %1175 = vmatprep.subr.mxu0 0.0
    %1176 = vmatpush2.msra.mxu0 0.0
    %1177 = vmatprep.subr.mxu0 0.0
    %1178 = vmatpush2.msra.mxu0 0.0
    %1179 = vmatprep.subr.mxu0 0.0
    %1180 = vmatpush2.msra.mxu0 0.0
    %1181 = vmatprep.subr.mxu0 0.0
    %1182 = vmatpush2.msra.mxu0 0.0
    %1183 = vmatprep.subr.mxu0 0.0
    %1184 = vmatpush2.msra.mxu0 0.0
    %1185 = vmatprep.subr.mxu0 0.0
    %1186 = vmatpush2.msra.mxu0 0.0
    %1187 = vmatprep.subr.mxu0 0.0
    %1188 = vmatpush2.msra.mxu0 0.0
    %1189 = vmatprep.subr.mxu0 0.0
    %1190 = vmatpush2.msra.mxu0 0.0
    %1191 = vmatprep.subr.mxu0 0.0
    %1192 = vmatpush2.msra.mxu0 0.0
    %1193 = vmatprep.subr.mxu0 0.0
    %1194 = vmatpush2.msra.mxu0 0.0
    %1195 = vmatprep.subr.mxu0 0.0
    %1196 = vmatpush2.msra.mxu0 0.0
    %1197 = vmatprep.subr.mxu0 0.0
    %1198 = vmatpush2.msra.mxu0 0.0
    %1199 = vmatprep.subr.mxu0 0.0
    %1200 = vmatpush2.msra.mxu0 0.0
    %1201 = vmatprep.subr.mxu0 0.0
    %1202 = vmatpush2.msra.mxu0 0.0
    %1203 = vmatprep.subr.mxu0 0.0
    %1204 = vmatpush2.msra.mxu0 0.0
    %1205 = vmatprep.subr.mxu0 0.0
    %1206 = vmatpush2.msra.mxu0 0.0
    %1207 = vmatprep.mubr.f32.mxu0 0.0
    %1208 = vmatmul.mubr.f32.gmra.mxu0 %v397
    %v1209 = vpop.f32.mrf.mxu0
    %v1210 = vadd.f32 %v714, %v1209
    %v1211 = vpop.f32.mrf.mxu0
    %1212 = vdwg.mxu0
    %1213 = vmatprep.subr.mxu0 0.0
    %1214 = vmatpush1.msra.mxu0 0.0
    %1215 = vmatprep.subr.mxu0 0.0
    %1216 = vmatpush1.msra.mxu0 0.0
    %1217 = vmatprep.subr.mxu0 0.0
    %1218 = vmatpush1.msra.mxu0 0.0
    %1219 = vmatprep.subr.mxu0 0.0
    %1220 = vmatpush1.msra.mxu0 0.0
    %1221 = vmatprep.subr.mxu0 0.0
    %1222 = vmatpush1.msra.mxu0 0.0
    %1223 = vmatprep.subr.mxu0 0.0
    %1224 = vmatpush1.msra.mxu0 0.0
    %1225 = vmatprep.subr.mxu0 0.0
    %1226 = vmatpush1.msra.mxu0 0.0
    %1227 = vmatprep.subr.mxu0 0.0
    %1228 = vmatpush1.msra.mxu0 0.0
    %1229 = vmatprep.subr.mxu0 0.0
    %1230 = vmatpush1.msra.mxu0 0.0
    %1231 = vmatprep.subr.mxu0 0.0
    %1232 = vmatpush1.msra.mxu0 0.0
    %1233 = vmatprep.subr.mxu0 0.0
    %1234 = vmatpush1.msra.mxu0 0.0
    %1235 = vmatprep.subr.mxu0 0.0
    %1236 = vmatpush1.msra.mxu0 0.0
    %1237 = vmatprep.subr.mxu0 0.0
    %1238 = vmatpush1.msra.mxu0 %v694
    %1239 = vmatprep.subr.mxu0 0.0
    %1240 = vmatpush1.msra.mxu0 %v693
    %1241 = vmatprep.subr.mxu0 0.0
    %1242 = vmatpush1.msra.mxu0 %v692
    %1243 = vmatprep.subr.mxu0 0.0
    %1244 = vmatpush1.msra.mxu0 %v691
    %1245 = vmatprep.subr.mxu0 0.0
    %1246 = vmatpush2.msra.mxu0 0.0
    %1247 = vmatprep.subr.mxu0 0.0
    %1248 = vmatpush2.msra.mxu0 0.0
    %1249 = vmatprep.subr.mxu0 0.0
    %1250 = vmatpush2.msra.mxu0 0.0
    %1251 = vmatprep.subr.mxu0 0.0
    %1252 = vmatpush2.msra.mxu0 0.0
    %1253 = vmatprep.subr.mxu0 0.0
    %1254 = vmatpush2.msra.mxu0 0.0
    %1255 = vmatprep.subr.mxu0 0.0
    %1256 = vmatpush2.msra.mxu0 0.0
    %1257 = vmatprep.subr.mxu0 0.0
    %1258 = vmatpush2.msra.mxu0 0.0
    %1259 = vmatprep.subr.mxu0 0.0
    %1260 = vmatpush2.msra.mxu0 0.0
    %1261 = vmatprep.subr.mxu0 0.0
    %1262 = vmatpush2.msra.mxu0 0.0
    %1263 = vmatprep.subr.mxu0 0.0
    %1264 = vmatpush2.msra.mxu0 0.0
    %1265 = vmatprep.subr.mxu0 0.0
    %1266 = vmatpush2.msra.mxu0 0.0
    %1267 = vmatprep.subr.mxu0 0.0
    %1268 = vmatpush2.msra.mxu0 0.0
    %1269 = vmatprep.subr.mxu0 0.0
    %1270 = vmatpush2.msra.mxu0 0.0
    %1271 = vmatprep.subr.mxu0 0.0
    %1272 = vmatpush2.msra.mxu0 0.0
    %1273 = vmatprep.subr.mxu0 0.0
    %1274 = vmatpush2.msra.mxu0 0.0
    %1275 = vmatprep.subr.mxu0 0.0
    %1276 = vmatpush2.msra.mxu0 0.0
    %1277 = vmatprep.mubr.f32.mxu0 0.0
    %1278 = vmatmul.mubr.f32.gmra.mxu0 %v397
    %v1279 = vpop.f32.mrf.mxu0
    %v1280 = vadd.f32 %v718, %v1279
    %v1281 = vpop.f32.mrf.mxu0
    %1282 = vdwg.mxu0
    %v1283 = vld [vmem:[%s6] sm:$0xff]
    %v1284 = vld [vmem:[%s6 + $0x8] sm:$0xff]
    %v1285 = vld [vmem:[%s6 + $0x10] sm:$0xff]
    %v1286 = vld [vmem:[%s6 + $0x18] sm:$0xff]
    %v1287 = vld [vmem:[%s6 + $0x20] sm:$0xff]
    %v1288 = vld [vmem:[%s6 + $0x28] sm:$0xff]
    %v1289 = vld [vmem:[%s6 + $0x30] sm:$0xff]
    %v1290 = vld [vmem:[%s6 + $0x38] sm:$0xff]
    %v1291 = vld [vmem:[%s6 + $0x40] sm:$0xff]
    %v1292 = vld [vmem:[%s6 + $0x48] sm:$0xff]
    %v1293 = vld [vmem:[%s6 + $0x50] sm:$0xff]
    %v1294 = vld [vmem:[%s6 + $0x58] sm:$0xff]
    %v1295 = vld [vmem:[%s6 + $0x60] sm:$0xff]
    %v1296 = vld [vmem:[%s6 + $0x68] sm:$0xff]
    %v1297 = vld [vmem:[%s6 + $0x70] sm:$0xff]
    %v1298 = vld [vmem:[%s6 + $0x78] sm:$0xff]
    %v1299 = vld [vmem:[%s7] sm:$0x1]
    %v1300 = vld [vmem:[%s7 + $0x1] sm:$0x1]
    %v1301 = vld [vmem:[%s7 + $0x2] sm:$0x1]
    %v1302 = vld [vmem:[%s7 + $0x3] sm:$0x1]
    %v1307 = vlaneseq
    %v1308 = vshrl.u32 %v1307, 7
    %v1309 = vsub.s32 0, %v1308
    %v1310 = vrot.slane %v1299, %v1309
    %v1311 = vlaneseq
    %v1312 = vshrl.u32 %v1311, 7
    %v1313 = vsub.s32 0, %v1312
    %v1314 = vrot.slane %v1300, %v1313
    %v1315 = vlaneseq
    %v1316 = vshrl.u32 %v1315, 7
    %v1317 = vsub.s32 0, %v1316
    %v1318 = vrot.slane %v1301, %v1317
    %v1319 = vlaneseq
    %v1320 = vshrl.u32 %v1319, 7
    %v1321 = vsub.s32 0, %v1320
    %v1322 = vrot.slane %v1302, %v1321
    %1327 = vmatprep.subr.mxu0 0.0
    %1328 = vmatpush1.msra.mxu0 0.0
    %1329 = vmatprep.subr.mxu0 0.0
    %1330 = vmatpush1.msra.mxu0 0.0
    %1331 = vmatprep.subr.mxu0 0.0
    %1332 = vmatpush1.msra.mxu0 0.0
    %1333 = vmatprep.subr.mxu0 0.0
    %1334 = vmatpush1.msra.mxu0 0.0
    %1335 = vmatprep.subr.mxu0 0.0
    %1336 = vmatpush1.msra.mxu0 0.0
    %1337 = vmatprep.subr.mxu0 0.0
    %1338 = vmatpush1.msra.mxu0 0.0
    %1339 = vmatprep.subr.mxu0 0.0
    %1340 = vmatpush1.msra.mxu0 0.0
    %1341 = vmatprep.subr.mxu0 0.0
    %1342 = vmatpush1.msra.mxu0 0.0
    %1343 = vmatprep.subr.mxu0 0.0
    %1344 = vmatpush1.msra.mxu0 0.0
    %1345 = vmatprep.subr.mxu0 0.0
    %1346 = vmatpush1.msra.mxu0 0.0
    %1347 = vmatprep.subr.mxu0 0.0
    %1348 = vmatpush1.msra.mxu0 0.0
    %1349 = vmatprep.subr.mxu0 0.0
    %1350 = vmatpush1.msra.mxu0 0.0
    %1351 = vmatprep.subr.mxu0 0.0
    %1352 = vmatpush1.msra.mxu0 %v1286
    %1353 = vmatprep.subr.mxu0 0.0
    %1354 = vmatpush1.msra.mxu0 %v1285
    %1355 = vmatprep.subr.mxu0 0.0
    %1356 = vmatpush1.msra.mxu0 %v1284
    %1357 = vmatprep.subr.mxu0 0.0
    %1358 = vmatpush1.msra.mxu0 %v1283
    %1359 = vmatprep.subr.mxu0 0.0
    %1360 = vmatpush2.msra.mxu0 0.0
    %1361 = vmatprep.subr.mxu0 0.0
    %1362 = vmatpush2.msra.mxu0 0.0
    %1363 = vmatprep.subr.mxu0 0.0
    %1364 = vmatpush2.msra.mxu0 0.0
    %1365 = vmatprep.subr.mxu0 0.0
    %1366 = vmatpush2.msra.mxu0 0.0
    %1367 = vmatprep.subr.mxu0 0.0
    %1368 = vmatpush2.msra.mxu0 0.0
    %1369 = vmatprep.subr.mxu0 0.0
    %1370 = vmatpush2.msra.mxu0 0.0
    %1371 = vmatprep.subr.mxu0 0.0
    %1372 = vmatpush2.msra.mxu0 0.0
    %1373 = vmatprep.subr.mxu0 0.0
    %1374 = vmatpush2.msra.mxu0 0.0
    %1375 = vmatprep.subr.mxu0 0.0
    %1376 = vmatpush2.msra.mxu0 0.0
    %1377 = vmatprep.subr.mxu0 0.0
    %1378 = vmatpush2.msra.mxu0 0.0
    %1379 = vmatprep.subr.mxu0 0.0
    %1380 = vmatpush2.msra.mxu0 0.0
    %1381 = vmatprep.subr.mxu0 0.0
    %1382 = vmatpush2.msra.mxu0 0.0
    %1383 = vmatprep.subr.mxu0 0.0
    %1384 = vmatpush2.msra.mxu0 0.0
    %1385 = vmatprep.subr.mxu0 0.0
    %1386 = vmatpush2.msra.mxu0 0.0
    %1387 = vmatprep.subr.mxu0 0.0
    %1388 = vmatpush2.msra.mxu0 0.0
    %1389 = vmatprep.subr.mxu0 0.0
    %1390 = vmatpush2.msra.mxu0 0.0
    %1391 = vmatprep.mubr.f32.mxu0 0.0
    %1392 = vmatmul.mubr.f32.gmra.mxu0 %v114
    %v1393 = vpop.f32.mrf.mxu0
    %v1394 = vadd.f32 %v1310, %v1393
    %v1395 = vpop.f32.mrf.mxu0
    %1396 = vdwg.mxu0
    %1397 = vmatprep.subr.mxu0 0.0
    %1398 = vmatpush1.msra.mxu0 0.0
    %1399 = vmatprep.subr.mxu0 0.0
    %1400 = vmatpush1.msra.mxu0 0.0
    %1401 = vmatprep.subr.mxu0 0.0
    %1402 = vmatpush1.msra.mxu0 0.0
    %1403 = vmatprep.subr.mxu0 0.0
    %1404 = vmatpush1.msra.mxu0 0.0
    %1405 = vmatprep.subr.mxu0 0.0
    %1406 = vmatpush1.msra.mxu0 0.0
    %1407 = vmatprep.subr.mxu0 0.0
    %1408 = vmatpush1.msra.mxu0 0.0
    %1409 = vmatprep.subr.mxu0 0.0
    %1410 = vmatpush1.msra.mxu0 0.0
    %1411 = vmatprep.subr.mxu0 0.0
    %1412 = vmatpush1.msra.mxu0 0.0
    %1413 = vmatprep.subr.mxu0 0.0
    %1414 = vmatpush1.msra.mxu0 0.0
    %1415 = vmatprep.subr.mxu0 0.0
    %1416 = vmatpush1.msra.mxu0 0.0
    %1417 = vmatprep.subr.mxu0 0.0
    %1418 = vmatpush1.msra.mxu0 0.0
    %1419 = vmatprep.subr.mxu0 0.0
    %1420 = vmatpush1.msra.mxu0 0.0
    %1421 = vmatprep.subr.mxu0 0.0
    %1422 = vmatpush1.msra.mxu0 %v1290
    %1423 = vmatprep.subr.mxu0 0.0
    %1424 = vmatpush1.msra.mxu0 %v1289
    %1425 = vmatprep.subr.mxu0 0.0
    %1426 = vmatpush1.msra.mxu0 %v1288
    %1427 = vmatprep.subr.mxu0 0.0
    %1428 = vmatpush1.msra.mxu0 %v1287
    %1429 = vmatprep.subr.mxu0 0.0
    %1430 = vmatpush2.msra.mxu0 0.0
    %1431 = vmatprep.subr.mxu0 0.0
    %1432 = vmatpush2.msra.mxu0 0.0
    %1433 = vmatprep.subr.mxu0 0.0
    %1434 = vmatpush2.msra.mxu0 0.0
    %1435 = vmatprep.subr.mxu0 0.0
    %1436 = vmatpush2.msra.mxu0 0.0
    %1437 = vmatprep.subr.mxu0 0.0
    %1438 = vmatpush2.msra.mxu0 0.0
    %1439 = vmatprep.subr.mxu0 0.0
    %1440 = vmatpush2.msra.mxu0 0.0
    %1441 = vmatprep.subr.mxu0 0.0
    %1442 = vmatpush2.msra.mxu0 0.0
    %1443 = vmatprep.subr.mxu0 0.0
    %1444 = vmatpush2.msra.mxu0 0.0
    %1445 = vmatprep.subr.mxu0 0.0
    %1446 = vmatpush2.msra.mxu0 0.0
    %1447 = vmatprep.subr.mxu0 0.0
    %1448 = vmatpush2.msra.mxu0 0.0
    %1449 = vmatprep.subr.mxu0 0.0
    %1450 = vmatpush2.msra.mxu0 0.0
    %1451 = vmatprep.subr.mxu0 0.0
    %1452 = vmatpush2.msra.mxu0 0.0
    %1453 = vmatprep.subr.mxu0 0.0
    %1454 = vmatpush2.msra.mxu0 0.0
    %1455 = vmatprep.subr.mxu0 0.0
    %1456 = vmatpush2.msra.mxu0 0.0
    %1457 = vmatprep.subr.mxu0 0.0
    %1458 = vmatpush2.msra.mxu0 0.0
    %1459 = vmatprep.subr.mxu0 0.0
    %1460 = vmatpush2.msra.mxu0 0.0
    %1461 = vmatprep.mubr.f32.mxu0 0.0
    %1462 = vmatmul.mubr.f32.gmra.mxu0 %v114
    %v1463 = vpop.f32.mrf.mxu0
    %v1464 = vadd.f32 %v1314, %v1463
    %v1465 = vpop.f32.mrf.mxu0
    %1466 = vdwg.mxu0
    %1467 = vmatprep.subr.mxu0 0.0
    %1468 = vmatpush1.msra.mxu0 0.0
    %1469 = vmatprep.subr.mxu0 0.0
    %1470 = vmatpush1.msra.mxu0 0.0
    %1471 = vmatprep.subr.mxu0 0.0
    %1472 = vmatpush1.msra.mxu0 0.0
    %1473 = vmatprep.subr.mxu0 0.0
    %1474 = vmatpush1.msra.mxu0 0.0
    %1475 = vmatprep.subr.mxu0 0.0
    %1476 = vmatpush1.msra.mxu0 0.0
    %1477 = vmatprep.subr.mxu0 0.0
    %1478 = vmatpush1.msra.mxu0 0.0
    %1479 = vmatprep.subr.mxu0 0.0
    %1480 = vmatpush1.msra.mxu0 0.0
    %1481 = vmatprep.subr.mxu0 0.0
    %1482 = vmatpush1.msra.mxu0 0.0
    %1483 = vmatprep.subr.mxu0 0.0
    %1484 = vmatpush1.msra.mxu0 0.0
    %1485 = vmatprep.subr.mxu0 0.0
    %1486 = vmatpush1.msra.mxu0 0.0
    %1487 = vmatprep.subr.mxu0 0.0
    %1488 = vmatpush1.msra.mxu0 0.0
    %1489 = vmatprep.subr.mxu0 0.0
    %1490 = vmatpush1.msra.mxu0 0.0
    %1491 = vmatprep.subr.mxu0 0.0
    %1492 = vmatpush1.msra.mxu0 %v1294
    %1493 = vmatprep.subr.mxu0 0.0
    %1494 = vmatpush1.msra.mxu0 %v1293
    %1495 = vmatprep.subr.mxu0 0.0
    %1496 = vmatpush1.msra.mxu0 %v1292
    %1497 = vmatprep.subr.mxu0 0.0
    %1498 = vmatpush1.msra.mxu0 %v1291
    %1499 = vmatprep.subr.mxu0 0.0
    %1500 = vmatpush2.msra.mxu0 0.0
    %1501 = vmatprep.subr.mxu0 0.0
    %1502 = vmatpush2.msra.mxu0 0.0
    %1503 = vmatprep.subr.mxu0 0.0
    %1504 = vmatpush2.msra.mxu0 0.0
    %1505 = vmatprep.subr.mxu0 0.0
    %1506 = vmatpush2.msra.mxu0 0.0
    %1507 = vmatprep.subr.mxu0 0.0
    %1508 = vmatpush2.msra.mxu0 0.0
    %1509 = vmatprep.subr.mxu0 0.0
    %1510 = vmatpush2.msra.mxu0 0.0
    %1511 = vmatprep.subr.mxu0 0.0
    %1512 = vmatpush2.msra.mxu0 0.0
    %1513 = vmatprep.subr.mxu0 0.0
    %1514 = vmatpush2.msra.mxu0 0.0
    %1515 = vmatprep.subr.mxu0 0.0
    %1516 = vmatpush2.msra.mxu0 0.0
    %1517 = vmatprep.subr.mxu0 0.0
    %1518 = vmatpush2.msra.mxu0 0.0
    %1519 = vmatprep.subr.mxu0 0.0
    %1520 = vmatpush2.msra.mxu0 0.0
    %1521 = vmatprep.subr.mxu0 0.0
    %1522 = vmatpush2.msra.mxu0 0.0
    %1523 = vmatprep.subr.mxu0 0.0
    %1524 = vmatpush2.msra.mxu0 0.0
    %1525 = vmatprep.subr.mxu0 0.0
    %1526 = vmatpush2.msra.mxu0 0.0
    %1527 = vmatprep.subr.mxu0 0.0
    %1528 = vmatpush2.msra.mxu0 0.0
    %1529 = vmatprep.subr.mxu0 0.0
    %1530 = vmatpush2.msra.mxu0 0.0
    %1531 = vmatprep.mubr.f32.mxu0 0.0
    %1532 = vmatmul.mubr.f32.gmra.mxu0 %v114
    %v1533 = vpop.f32.mrf.mxu0
    %v1534 = vadd.f32 %v1318, %v1533
    %v1535 = vpop.f32.mrf.mxu0
    %1536 = vdwg.mxu0
    %1537 = vmatprep.subr.mxu0 0.0
    %1538 = vmatpush1.msra.mxu0 0.0
    %1539 = vmatprep.subr.mxu0 0.0
    %1540 = vmatpush1.msra.mxu0 0.0
    %1541 = vmatprep.subr.mxu0 0.0
    %1542 = vmatpush1.msra.mxu0 0.0
    %1543 = vmatprep.subr.mxu0 0.0
    %1544 = vmatpush1.msra.mxu0 0.0
    %1545 = vmatprep.subr.mxu0 0.0
    %1546 = vmatpush1.msra.mxu0 0.0
    %1547 = vmatprep.subr.mxu0 0.0
    %1548 = vmatpush1.msra.mxu0 0.0
    %1549 = vmatprep.subr.mxu0 0.0
    %1550 = vmatpush1.msra.mxu0 0.0
    %1551 = vmatprep.subr.mxu0 0.0
    %1552 = vmatpush1.msra.mxu0 0.0
    %1553 = vmatprep.subr.mxu0 0.0
    %1554 = vmatpush1.msra.mxu0 0.0
    %1555 = vmatprep.subr.mxu0 0.0
    %1556 = vmatpush1.msra.mxu0 0.0
    %1557 = vmatprep.subr.mxu0 0.0
    %1558 = vmatpush1.msra.mxu0 0.0
    %1559 = vmatprep.subr.mxu0 0.0
    %1560 = vmatpush1.msra.mxu0 0.0
    %1561 = vmatprep.subr.mxu0 0.0
    %1562 = vmatpush1.msra.mxu0 %v1298
    %1563 = vmatprep.subr.mxu0 0.0
    %1564 = vmatpush1.msra.mxu0 %v1297
    %1565 = vmatprep.subr.mxu0 0.0
    %1566 = vmatpush1.msra.mxu0 %v1296
    %1567 = vmatprep.subr.mxu0 0.0
    %1568 = vmatpush1.msra.mxu0 %v1295
    %1569 = vmatprep.subr.mxu0 0.0
    %1570 = vmatpush2.msra.mxu0 0.0
    %1571 = vmatprep.subr.mxu0 0.0
    %1572 = vmatpush2.msra.mxu0 0.0
    %1573 = vmatprep.subr.mxu0 0.0
    %1574 = vmatpush2.msra.mxu0 0.0
    %1575 = vmatprep.subr.mxu0 0.0
    %1576 = vmatpush2.msra.mxu0 0.0
    %1577 = vmatprep.subr.mxu0 0.0
    %1578 = vmatpush2.msra.mxu0 0.0
    %1579 = vmatprep.subr.mxu0 0.0
    %1580 = vmatpush2.msra.mxu0 0.0
    %1581 = vmatprep.subr.mxu0 0.0
    %1582 = vmatpush2.msra.mxu0 0.0
    %1583 = vmatprep.subr.mxu0 0.0
    %1584 = vmatpush2.msra.mxu0 0.0
    %1585 = vmatprep.subr.mxu0 0.0
    %1586 = vmatpush2.msra.mxu0 0.0
    %1587 = vmatprep.subr.mxu0 0.0
    %1588 = vmatpush2.msra.mxu0 0.0
    %1589 = vmatprep.subr.mxu0 0.0
    %1590 = vmatpush2.msra.mxu0 0.0
    %1591 = vmatprep.subr.mxu0 0.0
    %1592 = vmatpush2.msra.mxu0 0.0
    %1593 = vmatprep.subr.mxu0 0.0
    %1594 = vmatpush2.msra.mxu0 0.0
    %1595 = vmatprep.subr.mxu0 0.0
    %1596 = vmatpush2.msra.mxu0 0.0
    %1597 = vmatprep.subr.mxu0 0.0
    %1598 = vmatpush2.msra.mxu0 0.0
    %1599 = vmatprep.subr.mxu0 0.0
    %1600 = vmatpush2.msra.mxu0 0.0
    %1601 = vmatprep.mubr.f32.mxu0 0.0
    %1602 = vmatmul.mubr.f32.gmra.mxu0 %v114
    %v1603 = vpop.f32.mrf.mxu0
    %v1604 = vadd.f32 %v1322, %v1603
    %v1605 = vpop.f32.mrf.mxu0
    %1606 = vdwg.mxu0
    %1607 = vmatprep.subr.mxu0 0.0
    %1608 = vmatpush1.msra.mxu0 0.0
    %1609 = vmatprep.subr.mxu0 0.0
    %1610 = vmatpush1.msra.mxu0 0.0
    %1611 = vmatprep.subr.mxu0 0.0
    %1612 = vmatpush1.msra.mxu0 0.0
    %1613 = vmatprep.subr.mxu0 0.0
    %1614 = vmatpush1.msra.mxu0 0.0
    %1615 = vmatprep.subr.mxu0 0.0
    %1616 = vmatpush1.msra.mxu0 0.0
    %1617 = vmatprep.subr.mxu0 0.0
    %1618 = vmatpush1.msra.mxu0 0.0
    %1619 = vmatprep.subr.mxu0 0.0
    %1620 = vmatpush1.msra.mxu0 0.0
    %1621 = vmatprep.subr.mxu0 0.0
    %1622 = vmatpush1.msra.mxu0 0.0
    %1623 = vmatprep.subr.mxu0 0.0
    %1624 = vmatpush1.msra.mxu0 0.0
    %1625 = vmatprep.subr.mxu0 0.0
    %1626 = vmatpush1.msra.mxu0 0.0
    %1627 = vmatprep.subr.mxu0 0.0
    %1628 = vmatpush1.msra.mxu0 0.0
    %1629 = vmatprep.subr.mxu0 0.0
    %1630 = vmatpush1.msra.mxu0 0.0
    %1631 = vmatprep.subr.mxu0 0.0
    %1632 = vmatpush1.msra.mxu0 %v1286
    %1633 = vmatprep.subr.mxu0 0.0
    %1634 = vmatpush1.msra.mxu0 %v1285
    %1635 = vmatprep.subr.mxu0 0.0
    %1636 = vmatpush1.msra.mxu0 %v1284
    %1637 = vmatprep.subr.mxu0 0.0
    %1638 = vmatpush1.msra.mxu0 %v1283
    %1639 = vmatprep.subr.mxu0 0.0
    %1640 = vmatpush2.msra.mxu0 0.0
    %1641 = vmatprep.subr.mxu0 0.0
    %1642 = vmatpush2.msra.mxu0 0.0
    %1643 = vmatprep.subr.mxu0 0.0
    %1644 = vmatpush2.msra.mxu0 0.0
    %1645 = vmatprep.subr.mxu0 0.0
    %1646 = vmatpush2.msra.mxu0 0.0
    %1647 = vmatprep.subr.mxu0 0.0
    %1648 = vmatpush2.msra.mxu0 0.0
    %1649 = vmatprep.subr.mxu0 0.0
    %1650 = vmatpush2.msra.mxu0 0.0
    %1651 = vmatprep.subr.mxu0 0.0
    %1652 = vmatpush2.msra.mxu0 0.0
    %1653 = vmatprep.subr.mxu0 0.0
    %1654 = vmatpush2.msra.mxu0 0.0
    %1655 = vmatprep.subr.mxu0 0.0
    %1656 = vmatpush2.msra.mxu0 0.0
    %1657 = vmatprep.subr.mxu0 0.0
    %1658 = vmatpush2.msra.mxu0 0.0
    %1659 = vmatprep.subr.mxu0 0.0
    %1660 = vmatpush2.msra.mxu0 0.0
    %1661 = vmatprep.subr.mxu0 0.0
    %1662 = vmatpush2.msra.mxu0 0.0
    %1663 = vmatprep.subr.mxu0 0.0
    %1664 = vmatpush2.msra.mxu0 0.0
    %1665 = vmatprep.subr.mxu0 0.0
    %1666 = vmatpush2.msra.mxu0 0.0
    %1667 = vmatprep.subr.mxu0 0.0
    %1668 = vmatpush2.msra.mxu0 0.0
    %1669 = vmatprep.subr.mxu0 0.0
    %1670 = vmatpush2.msra.mxu0 0.0
    %1671 = vmatprep.mubr.f32.mxu0 0.0
    %1672 = vmatmul.mubr.f32.gmra.mxu0 %v397
    %v1673 = vpop.f32.mrf.mxu0
    %v1674 = vadd.f32 %v1310, %v1673
    %v1675 = vpop.f32.mrf.mxu0
    %1676 = vdwg.mxu0
    %1677 = vmatprep.subr.mxu0 0.0
    %1678 = vmatpush1.msra.mxu0 0.0
    %1679 = vmatprep.subr.mxu0 0.0
    %1680 = vmatpush1.msra.mxu0 0.0
    %1681 = vmatprep.subr.mxu0 0.0
    %1682 = vmatpush1.msra.mxu0 0.0
    %1683 = vmatprep.subr.mxu0 0.0
    %1684 = vmatpush1.msra.mxu0 0.0
    %1685 = vmatprep.subr.mxu0 0.0
    %1686 = vmatpush1.msra.mxu0 0.0
    %1687 = vmatprep.subr.mxu0 0.0
    %1688 = vmatpush1.msra.mxu0 0.0
    %1689 = vmatprep.subr.mxu0 0.0
    %1690 = vmatpush1.msra.mxu0 0.0
    %1691 = vmatprep.subr.mxu0 0.0
    %1692 = vmatpush1.msra.mxu0 0.0
    %1693 = vmatprep.subr.mxu0 0.0
    %1694 = vmatpush1.msra.mxu0 0.0
    %1695 = vmatprep.subr.mxu0 0.0
    %1696 = vmatpush1.msra.mxu0 0.0
    %1697 = vmatprep.subr.mxu0 0.0
    %1698 = vmatpush1.msra.mxu0 0.0
    %1699 = vmatprep.subr.mxu0 0.0
    %1700 = vmatpush1.msra.mxu0 0.0
    %1701 = vmatprep.subr.mxu0 0.0
    %1702 = vmatpush1.msra.mxu0 %v1290
    %1703 = vmatprep.subr.mxu0 0.0
    %1704 = vmatpush1.msra.mxu0 %v1289
    %1705 = vmatprep.subr.mxu0 0.0
    %1706 = vmatpush1.msra.mxu0 %v1288
    %1707 = vmatprep.subr.mxu0 0.0
    %1708 = vmatpush1.msra.mxu0 %v1287
    %1709 = vmatprep.subr.mxu0 0.0
    %1710 = vmatpush2.msra.mxu0 0.0
    %1711 = vmatprep.subr.mxu0 0.0
    %1712 = vmatpush2.msra.mxu0 0.0
    %1713 = vmatprep.subr.mxu0 0.0
    %1714 = vmatpush2.msra.mxu0 0.0
    %1715 = vmatprep.subr.mxu0 0.0
    %1716 = vmatpush2.msra.mxu0 0.0
    %1717 = vmatprep.subr.mxu0 0.0
    %1718 = vmatpush2.msra.mxu0 0.0
    %1719 = vmatprep.subr.mxu0 0.0
    %1720 = vmatpush2.msra.mxu0 0.0
    %1721 = vmatprep.subr.mxu0 0.0
    %1722 = vmatpush2.msra.mxu0 0.0
    %1723 = vmatprep.subr.mxu0 0.0
    %1724 = vmatpush2.msra.mxu0 0.0
    %1725 = vmatprep.subr.mxu0 0.0
    %1726 = vmatpush2.msra.mxu0 0.0
    %1727 = vmatprep.subr.mxu0 0.0
    %1728 = vmatpush2.msra.mxu0 0.0
    %1729 = vmatprep.subr.mxu0 0.0
    %1730 = vmatpush2.msra.mxu0 0.0
    %1731 = vmatprep.subr.mxu0 0.0
    %1732 = vmatpush2.msra.mxu0 0.0
    %1733 = vmatprep.subr.mxu0 0.0
    %1734 = vmatpush2.msra.mxu0 0.0
    %1735 = vmatprep.subr.mxu0 0.0
    %1736 = vmatpush2.msra.mxu0 0.0
    %1737 = vmatprep.subr.mxu0 0.0
    %1738 = vmatpush2.msra.mxu0 0.0
    %1739 = vmatprep.subr.mxu0 0.0
    %1740 = vmatpush2.msra.mxu0 0.0
    %1741 = vmatprep.mubr.f32.mxu0 0.0
    %1742 = vmatmul.mubr.f32.gmra.mxu0 %v397
    %v1743 = vpop.f32.mrf.mxu0
    %v1744 = vadd.f32 %v1314, %v1743
    %v1745 = vpop.f32.mrf.mxu0
    %1746 = vdwg.mxu0
    %1747 = vmatprep.subr.mxu0 0.0
    %1748 = vmatpush1.msra.mxu0 0.0
    %1749 = vmatprep.subr.mxu0 0.0
    %1750 = vmatpush1.msra.mxu0 0.0
    %1751 = vmatprep.subr.mxu0 0.0
    %1752 = vmatpush1.msra.mxu0 0.0
    %1753 = vmatprep.subr.mxu0 0.0
    %1754 = vmatpush1.msra.mxu0 0.0
    %1755 = vmatprep.subr.mxu0 0.0
    %1756 = vmatpush1.msra.mxu0 0.0
    %1757 = vmatprep.subr.mxu0 0.0
    %1758 = vmatpush1.msra.mxu0 0.0
    %1759 = vmatprep.subr.mxu0 0.0
    %1760 = vmatpush1.msra.mxu0 0.0
    %1761 = vmatprep.subr.mxu0 0.0
    %1762 = vmatpush1.msra.mxu0 0.0
    %1763 = vmatprep.subr.mxu0 0.0
    %1764 = vmatpush1.msra.mxu0 0.0
    %1765 = vmatprep.subr.mxu0 0.0
    %1766 = vmatpush1.msra.mxu0 0.0
    %1767 = vmatprep.subr.mxu0 0.0
    %1768 = vmatpush1.msra.mxu0 0.0
    %1769 = vmatprep.subr.mxu0 0.0
    %1770 = vmatpush1.msra.mxu0 0.0
    %1771 = vmatprep.subr.mxu0 0.0
    %1772 = vmatpush1.msra.mxu0 %v1294
    %1773 = vmatprep.subr.mxu0 0.0
    %1774 = vmatpush1.msra.mxu0 %v1293
    %1775 = vmatprep.subr.mxu0 0.0
    %1776 = vmatpush1.msra.mxu0 %v1292
    %1777 = vmatprep.subr.mxu0 0.0
    %1778 = vmatpush1.msra.mxu0 %v1291
    %1779 = vmatprep.subr.mxu0 0.0
    %1780 = vmatpush2.msra.mxu0 0.0
    %1781 = vmatprep.subr.mxu0 0.0
    %1782 = vmatpush2.msra.mxu0 0.0
    %1783 = vmatprep.subr.mxu0 0.0
    %1784 = vmatpush2.msra.mxu0 0.0
    %1785 = vmatprep.subr.mxu0 0.0
    %1786 = vmatpush2.msra.mxu0 0.0
    %1787 = vmatprep.subr.mxu0 0.0
    %1788 = vmatpush2.msra.mxu0 0.0
    %1789 = vmatprep.subr.mxu0 0.0
    %1790 = vmatpush2.msra.mxu0 0.0
    %1791 = vmatprep.subr.mxu0 0.0
    %1792 = vmatpush2.msra.mxu0 0.0
    %1793 = vmatprep.subr.mxu0 0.0
    %1794 = vmatpush2.msra.mxu0 0.0
    %1795 = vmatprep.subr.mxu0 0.0
    %1796 = vmatpush2.msra.mxu0 0.0
    %1797 = vmatprep.subr.mxu0 0.0
    %1798 = vmatpush2.msra.mxu0 0.0
    %1799 = vmatprep.subr.mxu0 0.0
    %1800 = vmatpush2.msra.mxu0 0.0
    %1801 = vmatprep.subr.mxu0 0.0
    %1802 = vmatpush2.msra.mxu0 0.0
    %1803 = vmatprep.subr.mxu0 0.0
    %1804 = vmatpush2.msra.mxu0 0.0
    %1805 = vmatprep.subr.mxu0 0.0
    %1806 = vmatpush2.msra.mxu0 0.0
    %1807 = vmatprep.subr.mxu0 0.0
    %1808 = vmatpush2.msra.mxu0 0.0
    %1809 = vmatprep.subr.mxu0 0.0
    %1810 = vmatpush2.msra.mxu0 0.0
    %1811 = vmatprep.mubr.f32.mxu0 0.0
    %1812 = vmatmul.mubr.f32.gmra.mxu0 %v397
    %v1813 = vpop.f32.mrf.mxu0
    %v1814 = vadd.f32 %v1318, %v1813
    %v1815 = vpop.f32.mrf.mxu0
    %1816 = vdwg.mxu0
    %1817 = vmatprep.subr.mxu0 0.0
    %1818 = vmatpush1.msra.mxu0 0.0
    %1819 = vmatprep.subr.mxu0 0.0
    %1820 = vmatpush1.msra.mxu0 0.0
    %1821 = vmatprep.subr.mxu0 0.0
    %1822 = vmatpush1.msra.mxu0 0.0
    %1823 = vmatprep.subr.mxu0 0.0
    %1824 = vmatpush1.msra.mxu0 0.0
    %1825 = vmatprep.subr.mxu0 0.0
    %1826 = vmatpush1.msra.mxu0 0.0
    %1827 = vmatprep.subr.mxu0 0.0
    %1828 = vmatpush1.msra.mxu0 0.0
    %1829 = vmatprep.subr.mxu0 0.0
    %1830 = vmatpush1.msra.mxu0 0.0
    %1831 = vmatprep.subr.mxu0 0.0
    %1832 = vmatpush1.msra.mxu0 0.0
    %1833 = vmatprep.subr.mxu0 0.0
    %1834 = vmatpush1.msra.mxu0 0.0
    %1835 = vmatprep.subr.mxu0 0.0
    %1836 = vmatpush1.msra.mxu0 0.0
    %1837 = vmatprep.subr.mxu0 0.0
    %1838 = vmatpush1.msra.mxu0 0.0
    %1839 = vmatprep.subr.mxu0 0.0
    %1840 = vmatpush1.msra.mxu0 0.0
    %1841 = vmatprep.subr.mxu0 0.0
    %1842 = vmatpush1.msra.mxu0 %v1298
    %1843 = vmatprep.subr.mxu0 0.0
    %1844 = vmatpush1.msra.mxu0 %v1297
    %1845 = vmatprep.subr.mxu0 0.0
    %1846 = vmatpush1.msra.mxu0 %v1296
    %1847 = vmatprep.subr.mxu0 0.0
    %1848 = vmatpush1.msra.mxu0 %v1295
    %1849 = vmatprep.subr.mxu0 0.0
    %1850 = vmatpush2.msra.mxu0 0.0
    %1851 = vmatprep.subr.mxu0 0.0
    %1852 = vmatpush2.msra.mxu0 0.0
    %1853 = vmatprep.subr.mxu0 0.0
    %1854 = vmatpush2.msra.mxu0 0.0
    %1855 = vmatprep.subr.mxu0 0.0
    %1856 = vmatpush2.msra.mxu0 0.0
    %1857 = vmatprep.subr.mxu0 0.0
    %1858 = vmatpush2.msra.mxu0 0.0
    %1859 = vmatprep.subr.mxu0 0.0
    %1860 = vmatpush2.msra.mxu0 0.0
    %1861 = vmatprep.subr.mxu0 0.0
    %1862 = vmatpush2.msra.mxu0 0.0
    %1863 = vmatprep.subr.mxu0 0.0
    %1864 = vmatpush2.msra.mxu0 0.0
    %1865 = vmatprep.subr.mxu0 0.0
    %1866 = vmatpush2.msra.mxu0 0.0
    %1867 = vmatprep.subr.mxu0 0.0
    %1868 = vmatpush2.msra.mxu0 0.0
    %1869 = vmatprep.subr.mxu0 0.0
    %1870 = vmatpush2.msra.mxu0 0.0
    %1871 = vmatprep.subr.mxu0 0.0
    %1872 = vmatpush2.msra.mxu0 0.0
    %1873 = vmatprep.subr.mxu0 0.0
    %1874 = vmatpush2.msra.mxu0 0.0
    %1875 = vmatprep.subr.mxu0 0.0
    %1876 = vmatpush2.msra.mxu0 0.0
    %1877 = vmatprep.subr.mxu0 0.0
    %1878 = vmatpush2.msra.mxu0 0.0
    %1879 = vmatprep.subr.mxu0 0.0
    %1880 = vmatpush2.msra.mxu0 0.0
    %1881 = vmatprep.mubr.f32.mxu0 0.0
    %1882 = vmatmul.mubr.f32.gmra.mxu0 %v397
    %v1883 = vpop.f32.mrf.mxu0
    %v1884 = vadd.f32 %v1322, %v1883
    %v1885 = vpop.f32.mrf.mxu0
    %1886 = vdwg.mxu0
    %vm1887 = vcmask 64512
    %v1889 = vsel %vm1887, %v183, 0
    %v1892 = vsel %vm1887, %v790, 0
    %1894 = vmatprep.subr.mxu0 0.0
    %1895 = vmatpush1.xpose.msra.mxu0 0.0
    %1896 = vmatprep.subr.mxu0 0.0
    %1897 = vmatpush1.xpose.msra.mxu0 0.0
    %1898 = vmatprep.subr.mxu0 0.0
    %1899 = vmatpush1.xpose.msra.mxu0 0.0
    %1900 = vmatprep.subr.mxu0 0.0
    %1901 = vmatpush1.xpose.msra.mxu0 0.0
    %1902 = vmatprep.subr.mxu0 0.0
    %1903 = vmatpush1.xpose.msra.mxu0 0.0
    %1904 = vmatprep.subr.mxu0 0.0
    %1905 = vmatpush1.xpose.msra.mxu0 0.0
    %1906 = vmatprep.subr.mxu0 0.0
    %1907 = vmatpush1.xpose.msra.mxu0 0.0
    %1908 = vmatprep.subr.mxu0 0.0
    %1909 = vmatpush1.xpose.msra.mxu0 0.0
    %1910 = vmatprep.subr.mxu0 0.0
    %1911 = vmatpush1.xpose.msra.mxu0 0.0
    %1912 = vmatprep.subr.mxu0 0.0
    %1913 = vmatpush1.xpose.msra.mxu0 0.0
    %1914 = vmatprep.subr.mxu0 0.0
    %1915 = vmatpush1.xpose.msra.mxu0 0.0
    %1916 = vmatprep.subr.mxu0 0.0
    %1917 = vmatpush1.xpose.msra.mxu0 0.0
    %1918 = vmatprep.subr.mxu0 0.0
    %1919 = vmatpush1.xpose.msra.mxu0 0.0
    %1920 = vmatprep.subr.mxu0 0.0
    %1921 = vmatpush1.xpose.msra.mxu0 0.0
    %1922 = vmatprep.subr.mxu0 0.0
    %1923 = vmatpush1.xpose.msra.mxu0 0.0
    %1924 = vmatprep.subr.mxu0 0.0
    %1925 = vmatpush1.xpose.msra.mxu0 %v1892
    %1926 = vmatprep.subr.mxu0 0.0
    %1927 = vmatpush2.xpose.msra.mxu0 0.0
    %1928 = vmatprep.subr.mxu0 0.0
    %1929 = vmatpush2.xpose.msra.mxu0 0.0
    %1930 = vmatprep.subr.mxu0 0.0
    %1931 = vmatpush2.xpose.msra.mxu0 0.0
    %1932 = vmatprep.subr.mxu0 0.0
    %1933 = vmatpush2.xpose.msra.mxu0 0.0
    %1934 = vmatprep.subr.mxu0 0.0
    %1935 = vmatpush2.xpose.msra.mxu0 0.0
    %1936 = vmatprep.subr.mxu0 0.0
    %1937 = vmatpush2.xpose.msra.mxu0 0.0
    %1938 = vmatprep.subr.mxu0 0.0
    %1939 = vmatpush2.xpose.msra.mxu0 0.0
    %1940 = vmatprep.subr.mxu0 0.0
    %1941 = vmatpush2.xpose.msra.mxu0 0.0
    %1942 = vmatprep.subr.mxu0 0.0
    %1943 = vmatpush2.xpose.msra.mxu0 0.0
    %1944 = vmatprep.subr.mxu0 0.0
    %1945 = vmatpush2.xpose.msra.mxu0 0.0
    %1946 = vmatprep.subr.mxu0 0.0
    %1947 = vmatpush2.xpose.msra.mxu0 0.0
    %1948 = vmatprep.subr.mxu0 0.0
    %1949 = vmatpush2.xpose.msra.mxu0 0.0
    %1950 = vmatprep.subr.mxu0 0.0
    %1951 = vmatpush2.xpose.msra.mxu0 0.0
    %1952 = vmatprep.subr.mxu0 0.0
    %1953 = vmatpush2.xpose.msra.mxu0 0.0
    %1954 = vmatprep.subr.mxu0 0.0
    %1955 = vmatpush2.xpose.msra.mxu0 0.0
    %1956 = vmatprep.subr.mxu0 0.0
    %1957 = vmatpush2.xpose.msra.mxu0 0.0
    %1958 = vmatprep.mubr.f32.mxu0 0.0
    %1959 = vmatmul.mubr.f32.gmra.mxu0 %v1889
    %v1960 = vpop.f32.mrf.mxu0
    %v1961 = vadd.f32 0.0, %v1960
    %v1962 = vpop.f32.mrf.mxu0
    %1963 = vdwg.mxu0
    %v1965 = vsel %vm1887, %v253, 0
    %v1968 = vsel %vm1887, %v860, 0
    %1970 = vmatprep.subr.mxu0 0.0
    %1971 = vmatpush1.xpose.msra.mxu0 0.0
    %1972 = vmatprep.subr.mxu0 0.0
    %1973 = vmatpush1.xpose.msra.mxu0 0.0
    %1974 = vmatprep.subr.mxu0 0.0
    %1975 = vmatpush1.xpose.msra.mxu0 0.0
    %1976 = vmatprep.subr.mxu0 0.0
    %1977 = vmatpush1.xpose.msra.mxu0 0.0
    %1978 = vmatprep.subr.mxu0 0.0
    %1979 = vmatpush1.xpose.msra.mxu0 0.0
    %1980 = vmatprep.subr.mxu0 0.0
    %1981 = vmatpush1.xpose.msra.mxu0 0.0
    %1982 = vmatprep.subr.mxu0 0.0
    %1983 = vmatpush1.xpose.msra.mxu0 0.0
    %1984 = vmatprep.subr.mxu0 0.0
    %1985 = vmatpush1.xpose.msra.mxu0 0.0
    %1986 = vmatprep.subr.mxu0 0.0
    %1987 = vmatpush1.xpose.msra.mxu0 0.0
    %1988 = vmatprep.subr.mxu0 0.0
    %1989 = vmatpush1.xpose.msra.mxu0 0.0
    %1990 = vmatprep.subr.mxu0 0.0
    %1991 = vmatpush1.xpose.msra.mxu0 0.0
    %1992 = vmatprep.subr.mxu0 0.0
    %1993 = vmatpush1.xpose.msra.mxu0 0.0
    %1994 = vmatprep.subr.mxu0 0.0
    %1995 = vmatpush1.xpose.msra.mxu0 0.0
    %1996 = vmatprep.subr.mxu0 0.0
    %1997 = vmatpush1.xpose.msra.mxu0 0.0
    %1998 = vmatprep.subr.mxu0 0.0
    %1999 = vmatpush1.xpose.msra.mxu0 0.0
    %2000 = vmatprep.subr.mxu0 0.0
    %2001 = vmatpush1.xpose.msra.mxu0 %v1968
    %2002 = vmatprep.subr.mxu0 0.0
    %2003 = vmatpush2.xpose.msra.mxu0 0.0
    %2004 = vmatprep.subr.mxu0 0.0
    %2005 = vmatpush2.xpose.msra.mxu0 0.0
    %2006 = vmatprep.subr.mxu0 0.0
    %2007 = vmatpush2.xpose.msra.mxu0 0.0
    %2008 = vmatprep.subr.mxu0 0.0
    %2009 = vmatpush2.xpose.msra.mxu0 0.0
    %2010 = vmatprep.subr.mxu0 0.0
    %2011 = vmatpush2.xpose.msra.mxu0 0.0
    %2012 = vmatprep.subr.mxu0 0.0
    %2013 = vmatpush2.xpose.msra.mxu0 0.0
    %2014 = vmatprep.subr.mxu0 0.0
    %2015 = vmatpush2.xpose.msra.mxu0 0.0
    %2016 = vmatprep.subr.mxu0 0.0
    %2017 = vmatpush2.xpose.msra.mxu0 0.0
    %2018 = vmatprep.subr.mxu0 0.0
    %2019 = vmatpush2.xpose.msra.mxu0 0.0
    %2020 = vmatprep.subr.mxu0 0.0
    %2021 = vmatpush2.xpose.msra.mxu0 0.0
    %2022 = vmatprep.subr.mxu0 0.0
    %2023 = vmatpush2.xpose.msra.mxu0 0.0
    %2024 = vmatprep.subr.mxu0 0.0
    %2025 = vmatpush2.xpose.msra.mxu0 0.0
    %2026 = vmatprep.subr.mxu0 0.0
    %2027 = vmatpush2.xpose.msra.mxu0 0.0
    %2028 = vmatprep.subr.mxu0 0.0
    %2029 = vmatpush2.xpose.msra.mxu0 0.0
    %2030 = vmatprep.subr.mxu0 0.0
    %2031 = vmatpush2.xpose.msra.mxu0 0.0
    %2032 = vmatprep.subr.mxu0 0.0
    %2033 = vmatpush2.xpose.msra.mxu0 0.0
    %2034 = vmatprep.mubr.f32.mxu0 0.0
    %2035 = vmatmul.mubr.f32.gmra.mxu0 %v1965
    %v2036 = vpop.f32.mrf.mxu0
    %v2037 = vadd.f32 0.0, %v2036
    %v2038 = vpop.f32.mrf.mxu0
    %2039 = vdwg.mxu0
    %v2041 = vsel %vm1887, %v323, 0
    %v2044 = vsel %vm1887, %v930, 0
    %2046 = vmatprep.subr.mxu0 0.0
    %2047 = vmatpush1.xpose.msra.mxu0 0.0
    %2048 = vmatprep.subr.mxu0 0.0
    %2049 = vmatpush1.xpose.msra.mxu0 0.0
    %2050 = vmatprep.subr.mxu0 0.0
    %2051 = vmatpush1.xpose.msra.mxu0 0.0
    %2052 = vmatprep.subr.mxu0 0.0
    %2053 = vmatpush1.xpose.msra.mxu0 0.0
    %2054 = vmatprep.subr.mxu0 0.0
    %2055 = vmatpush1.xpose.msra.mxu0 0.0
    %2056 = vmatprep.subr.mxu0 0.0
    %2057 = vmatpush1.xpose.msra.mxu0 0.0
    %2058 = vmatprep.subr.mxu0 0.0
    %2059 = vmatpush1.xpose.msra.mxu0 0.0
    %2060 = vmatprep.subr.mxu0 0.0
    %2061 = vmatpush1.xpose.msra.mxu0 0.0
    %2062 = vmatprep.subr.mxu0 0.0
    %2063 = vmatpush1.xpose.msra.mxu0 0.0
    %2064 = vmatprep.subr.mxu0 0.0
    %2065 = vmatpush1.xpose.msra.mxu0 0.0
    %2066 = vmatprep.subr.mxu0 0.0
    %2067 = vmatpush1.xpose.msra.mxu0 0.0
    %2068 = vmatprep.subr.mxu0 0.0
    %2069 = vmatpush1.xpose.msra.mxu0 0.0
    %2070 = vmatprep.subr.mxu0 0.0
    %2071 = vmatpush1.xpose.msra.mxu0 0.0
    %2072 = vmatprep.subr.mxu0 0.0
    %2073 = vmatpush1.xpose.msra.mxu0 0.0
    %2074 = vmatprep.subr.mxu0 0.0
    %2075 = vmatpush1.xpose.msra.mxu0 0.0
    %2076 = vmatprep.subr.mxu0 0.0
    %2077 = vmatpush1.xpose.msra.mxu0 %v2044
    %2078 = vmatprep.subr.mxu0 0.0
    %2079 = vmatpush2.xpose.msra.mxu0 0.0
    %2080 = vmatprep.subr.mxu0 0.0
    %2081 = vmatpush2.xpose.msra.mxu0 0.0
    %2082 = vmatprep.subr.mxu0 0.0
    %2083 = vmatpush2.xpose.msra.mxu0 0.0
    %2084 = vmatprep.subr.mxu0 0.0
    %2085 = vmatpush2.xpose.msra.mxu0 0.0
    %2086 = vmatprep.subr.mxu0 0.0
    %2087 = vmatpush2.xpose.msra.mxu0 0.0
    %2088 = vmatprep.subr.mxu0 0.0
    %2089 = vmatpush2.xpose.msra.mxu0 0.0
    %2090 = vmatprep.subr.mxu0 0.0
    %2091 = vmatpush2.xpose.msra.mxu0 0.0
    %2092 = vmatprep.subr.mxu0 0.0
    %2093 = vmatpush2.xpose.msra.mxu0 0.0
    %2094 = vmatprep.subr.mxu0 0.0
    %2095 = vmatpush2.xpose.msra.mxu0 0.0
    %2096 = vmatprep.subr.mxu0 0.0
    %2097 = vmatpush2.xpose.msra.mxu0 0.0
    %2098 = vmatprep.subr.mxu0 0.0
    %2099 = vmatpush2.xpose.msra.mxu0 0.0
    %2100 = vmatprep.subr.mxu0 0.0
    %2101 = vmatpush2.xpose.msra.mxu0 0.0
    %2102 = vmatprep.subr.mxu0 0.0
    %2103 = vmatpush2.xpose.msra.mxu0 0.0
    %2104 = vmatprep.subr.mxu0 0.0
    %2105 = vmatpush2.xpose.msra.mxu0 0.0
    %2106 = vmatprep.subr.mxu0 0.0
    %2107 = vmatpush2.xpose.msra.mxu0 0.0
    %2108 = vmatprep.subr.mxu0 0.0
    %2109 = vmatpush2.xpose.msra.mxu0 0.0
    %2110 = vmatprep.mubr.f32.mxu0 0.0
    %2111 = vmatmul.mubr.f32.gmra.mxu0 %v2041
    %v2112 = vpop.f32.mrf.mxu0
    %v2113 = vadd.f32 0.0, %v2112
    %v2114 = vpop.f32.mrf.mxu0
    %2115 = vdwg.mxu0
    %v2117 = vsel %vm1887, %v393, 0
    %v2120 = vsel %vm1887, %v1000, 0
    %2122 = vmatprep.subr.mxu0 0.0
    %2123 = vmatpush1.xpose.msra.mxu0 0.0
    %2124 = vmatprep.subr.mxu0 0.0
    %2125 = vmatpush1.xpose.msra.mxu0 0.0
    %2126 = vmatprep.subr.mxu0 0.0
    %2127 = vmatpush1.xpose.msra.mxu0 0.0
    %2128 = vmatprep.subr.mxu0 0.0
    %2129 = vmatpush1.xpose.msra.mxu0 0.0
    %2130 = vmatprep.subr.mxu0 0.0
    %2131 = vmatpush1.xpose.msra.mxu0 0.0
    %2132 = vmatprep.subr.mxu0 0.0
    %2133 = vmatpush1.xpose.msra.mxu0 0.0
    %2134 = vmatprep.subr.mxu0 0.0
    %2135 = vmatpush1.xpose.msra.mxu0 0.0
    %2136 = vmatprep.subr.mxu0 0.0
    %2137 = vmatpush1.xpose.msra.mxu0 0.0
    %2138 = vmatprep.subr.mxu0 0.0
    %2139 = vmatpush1.xpose.msra.mxu0 0.0
    %2140 = vmatprep.subr.mxu0 0.0
    %2141 = vmatpush1.xpose.msra.mxu0 0.0
    %2142 = vmatprep.subr.mxu0 0.0
    %2143 = vmatpush1.xpose.msra.mxu0 0.0
    %2144 = vmatprep.subr.mxu0 0.0
    %2145 = vmatpush1.xpose.msra.mxu0 0.0
    %2146 = vmatprep.subr.mxu0 0.0
    %2147 = vmatpush1.xpose.msra.mxu0 0.0
    %2148 = vmatprep.subr.mxu0 0.0
    %2149 = vmatpush1.xpose.msra.mxu0 0.0
    %2150 = vmatprep.subr.mxu0 0.0
    %2151 = vmatpush1.xpose.msra.mxu0 0.0
    %2152 = vmatprep.subr.mxu0 0.0
    %2153 = vmatpush1.xpose.msra.mxu0 %v2120
    %2154 = vmatprep.subr.mxu0 0.0
    %2155 = vmatpush2.xpose.msra.mxu0 0.0
    %2156 = vmatprep.subr.mxu0 0.0
    %2157 = vmatpush2.xpose.msra.mxu0 0.0
    %2158 = vmatprep.subr.mxu0 0.0
    %2159 = vmatpush2.xpose.msra.mxu0 0.0
    %2160 = vmatprep.subr.mxu0 0.0
    %2161 = vmatpush2.xpose.msra.mxu0 0.0
    %2162 = vmatprep.subr.mxu0 0.0
    %2163 = vmatpush2.xpose.msra.mxu0 0.0
    %2164 = vmatprep.subr.mxu0 0.0
    %2165 = vmatpush2.xpose.msra.mxu0 0.0
    %2166 = vmatprep.subr.mxu0 0.0
    %2167 = vmatpush2.xpose.msra.mxu0 0.0
    %2168 = vmatprep.subr.mxu0 0.0
    %2169 = vmatpush2.xpose.msra.mxu0 0.0
    %2170 = vmatprep.subr.mxu0 0.0
    %2171 = vmatpush2.xpose.msra.mxu0 0.0
    %2172 = vmatprep.subr.mxu0 0.0
    %2173 = vmatpush2.xpose.msra.mxu0 0.0
    %2174 = vmatprep.subr.mxu0 0.0
    %2175 = vmatpush2.xpose.msra.mxu0 0.0
    %2176 = vmatprep.subr.mxu0 0.0
    %2177 = vmatpush2.xpose.msra.mxu0 0.0
    %2178 = vmatprep.subr.mxu0 0.0
    %2179 = vmatpush2.xpose.msra.mxu0 0.0
    %2180 = vmatprep.subr.mxu0 0.0
    %2181 = vmatpush2.xpose.msra.mxu0 0.0
    %2182 = vmatprep.subr.mxu0 0.0
    %2183 = vmatpush2.xpose.msra.mxu0 0.0
    %2184 = vmatprep.subr.mxu0 0.0
    %2185 = vmatpush2.xpose.msra.mxu0 0.0
    %2186 = vmatprep.mubr.f32.mxu0 0.0
    %2187 = vmatmul.mubr.f32.gmra.mxu0 %v2117
    %v2188 = vpop.f32.mrf.mxu0
    %v2189 = vadd.f32 0.0, %v2188
    %v2190 = vpop.f32.mrf.mxu0
    %2191 = vdwg.mxu0
    %v2193 = vsel %vm1887, %v466, 0
    %v2196 = vsel %vm1887, %v1070, 0
    %2198 = vmatprep.subr.mxu0 0.0
    %2199 = vmatpush1.xpose.msra.mxu0 0.0
    %2200 = vmatprep.subr.mxu0 0.0
    %2201 = vmatpush1.xpose.msra.mxu0 0.0
    %2202 = vmatprep.subr.mxu0 0.0
    %2203 = vmatpush1.xpose.msra.mxu0 0.0
    %2204 = vmatprep.subr.mxu0 0.0
    %2205 = vmatpush1.xpose.msra.mxu0 0.0
    %2206 = vmatprep.subr.mxu0 0.0
    %2207 = vmatpush1.xpose.msra.mxu0 0.0
    %2208 = vmatprep.subr.mxu0 0.0
    %2209 = vmatpush1.xpose.msra.mxu0 0.0
    %2210 = vmatprep.subr.mxu0 0.0
    %2211 = vmatpush1.xpose.msra.mxu0 0.0
    %2212 = vmatprep.subr.mxu0 0.0
    %2213 = vmatpush1.xpose.msra.mxu0 0.0
    %2214 = vmatprep.subr.mxu0 0.0
    %2215 = vmatpush1.xpose.msra.mxu0 0.0
    %2216 = vmatprep.subr.mxu0 0.0
    %2217 = vmatpush1.xpose.msra.mxu0 0.0
    %2218 = vmatprep.subr.mxu0 0.0
    %2219 = vmatpush1.xpose.msra.mxu0 0.0
    %2220 = vmatprep.subr.mxu0 0.0
    %2221 = vmatpush1.xpose.msra.mxu0 0.0
    %2222 = vmatprep.subr.mxu0 0.0
    %2223 = vmatpush1.xpose.msra.mxu0 0.0
    %2224 = vmatprep.subr.mxu0 0.0
    %2225 = vmatpush1.xpose.msra.mxu0 0.0
    %2226 = vmatprep.subr.mxu0 0.0
    %2227 = vmatpush1.xpose.msra.mxu0 0.0
    %2228 = vmatprep.subr.mxu0 0.0
    %2229 = vmatpush1.xpose.msra.mxu0 %v2196
    %2230 = vmatprep.subr.mxu0 0.0
    %2231 = vmatpush2.xpose.msra.mxu0 0.0
    %2232 = vmatprep.subr.mxu0 0.0
    %2233 = vmatpush2.xpose.msra.mxu0 0.0
    %2234 = vmatprep.subr.mxu0 0.0
    %2235 = vmatpush2.xpose.msra.mxu0 0.0
    %2236 = vmatprep.subr.mxu0 0.0
    %2237 = vmatpush2.xpose.msra.mxu0 0.0
    %2238 = vmatprep.subr.mxu0 0.0
    %2239 = vmatpush2.xpose.msra.mxu0 0.0
    %2240 = vmatprep.subr.mxu0 0.0
    %2241 = vmatpush2.xpose.msra.mxu0 0.0
    %2242 = vmatprep.subr.mxu0 0.0
    %2243 = vmatpush2.xpose.msra.mxu0 0.0
    %2244 = vmatprep.subr.mxu0 0.0
    %2245 = vmatpush2.xpose.msra.mxu0 0.0
    %2246 = vmatprep.subr.mxu0 0.0
    %2247 = vmatpush2.xpose.msra.mxu0 0.0
    %2248 = vmatprep.subr.mxu0 0.0
    %2249 = vmatpush2.xpose.msra.mxu0 0.0
    %2250 = vmatprep.subr.mxu0 0.0
    %2251 = vmatpush2.xpose.msra.mxu0 0.0
    %2252 = vmatprep.subr.mxu0 0.0
    %2253 = vmatpush2.xpose.msra.mxu0 0.0
    %2254 = vmatprep.subr.mxu0 0.0
    %2255 = vmatpush2.xpose.msra.mxu0 0.0
    %2256 = vmatprep.subr.mxu0 0.0
    %2257 = vmatpush2.xpose.msra.mxu0 0.0
    %2258 = vmatprep.subr.mxu0 0.0
    %2259 = vmatpush2.xpose.msra.mxu0 0.0
    %2260 = vmatprep.subr.mxu0 0.0
    %2261 = vmatpush2.xpose.msra.mxu0 0.0
    %2262 = vmatprep.mubr.f32.mxu0 0.0
    %2263 = vmatmul.mubr.f32.gmra.mxu0 %v2193
    %v2264 = vpop.f32.mrf.mxu0
    %v2265 = vadd.f32 0.0, %v2264
    %v2266 = vpop.f32.mrf.mxu0
    %2267 = vdwg.mxu0
    %v2269 = vsel %vm1887, %v536, 0
    %v2272 = vsel %vm1887, %v1140, 0
    %2274 = vmatprep.subr.mxu0 0.0
    %2275 = vmatpush1.xpose.msra.mxu0 0.0
    %2276 = vmatprep.subr.mxu0 0.0
    %2277 = vmatpush1.xpose.msra.mxu0 0.0
    %2278 = vmatprep.subr.mxu0 0.0
    %2279 = vmatpush1.xpose.msra.mxu0 0.0
    %2280 = vmatprep.subr.mxu0 0.0
    %2281 = vmatpush1.xpose.msra.mxu0 0.0
    %2282 = vmatprep.subr.mxu0 0.0
    %2283 = vmatpush1.xpose.msra.mxu0 0.0
    %2284 = vmatprep.subr.mxu0 0.0
    %2285 = vmatpush1.xpose.msra.mxu0 0.0
    %2286 = vmatprep.subr.mxu0 0.0
    %2287 = vmatpush1.xpose.msra.mxu0 0.0
    %2288 = vmatprep.subr.mxu0 0.0
    %2289 = vmatpush1.xpose.msra.mxu0 0.0
    %2290 = vmatprep.subr.mxu0 0.0
    %2291 = vmatpush1.xpose.msra.mxu0 0.0
    %2292 = vmatprep.subr.mxu0 0.0
    %2293 = vmatpush1.xpose.msra.mxu0 0.0
    %2294 = vmatprep.subr.mxu0 0.0
    %2295 = vmatpush1.xpose.msra.mxu0 0.0
    %2296 = vmatprep.subr.mxu0 0.0
    %2297 = vmatpush1.xpose.msra.mxu0 0.0
    %2298 = vmatprep.subr.mxu0 0.0
    %2299 = vmatpush1.xpose.msra.mxu0 0.0
    %2300 = vmatprep.subr.mxu0 0.0
    %2301 = vmatpush1.xpose.msra.mxu0 0.0
    %2302 = vmatprep.subr.mxu0 0.0
    %2303 = vmatpush1.xpose.msra.mxu0 0.0
    %2304 = vmatprep.subr.mxu0 0.0
    %2305 = vmatpush1.xpose.msra.mxu0 %v2272
    %2306 = vmatprep.subr.mxu0 0.0
    %2307 = vmatpush2.xpose.msra.mxu0 0.0
    %2308 = vmatprep.subr.mxu0 0.0
    %2309 = vmatpush2.xpose.msra.mxu0 0.0
    %2310 = vmatprep.subr.mxu0 0.0
    %2311 = vmatpush2.xpose.msra.mxu0 0.0
    %2312 = vmatprep.subr.mxu0 0.0
    %2313 = vmatpush2.xpose.msra.mxu0 0.0
    %2314 = vmatprep.subr.mxu0 0.0
    %2315 = vmatpush2.xpose.msra.mxu0 0.0
    %2316 = vmatprep.subr.mxu0 0.0
    %2317 = vmatpush2.xpose.msra.mxu0 0.0
    %2318 = vmatprep.subr.mxu0 0.0
    %2319 = vmatpush2.xpose.msra.mxu0 0.0
    %2320 = vmatprep.subr.mxu0 0.0
    %2321 = vmatpush2.xpose.msra.mxu0 0.0
    %2322 = vmatprep.subr.mxu0 0.0
    %2323 = vmatpush2.xpose.msra.mxu0 0.0
    %2324 = vmatprep.subr.mxu0 0.0
    %2325 = vmatpush2.xpose.msra.mxu0 0.0
    %2326 = vmatprep.subr.mxu0 0.0
    %2327 = vmatpush2.xpose.msra.mxu0 0.0
    %2328 = vmatprep.subr.mxu0 0.0
    %2329 = vmatpush2.xpose.msra.mxu0 0.0
    %2330 = vmatprep.subr.mxu0 0.0
    %2331 = vmatpush2.xpose.msra.mxu0 0.0
    %2332 = vmatprep.subr.mxu0 0.0
    %2333 = vmatpush2.xpose.msra.mxu0 0.0
    %2334 = vmatprep.subr.mxu0 0.0
    %2335 = vmatpush2.xpose.msra.mxu0 0.0
    %2336 = vmatprep.subr.mxu0 0.0
    %2337 = vmatpush2.xpose.msra.mxu0 0.0
    %2338 = vmatprep.mubr.f32.mxu0 0.0
    %2339 = vmatmul.mubr.f32.gmra.mxu0 %v2269
    %v2340 = vpop.f32.mrf.mxu0
    %v2341 = vadd.f32 0.0, %v2340
    %v2342 = vpop.f32.mrf.mxu0
    %2343 = vdwg.mxu0
    %v2345 = vsel %vm1887, %v606, 0
    %v2348 = vsel %vm1887, %v1210, 0
    %2350 = vmatprep.subr.mxu0 0.0
    %2351 = vmatpush1.xpose.msra.mxu0 0.0
    %2352 = vmatprep.subr.mxu0 0.0
    %2353 = vmatpush1.xpose.msra.mxu0 0.0
    %2354 = vmatprep.subr.mxu0 0.0
    %2355 = vmatpush1.xpose.msra.mxu0 0.0
    %2356 = vmatprep.subr.mxu0 0.0
    %2357 = vmatpush1.xpose.msra.mxu0 0.0
    %2358 = vmatprep.subr.mxu0 0.0
    %2359 = vmatpush1.xpose.msra.mxu0 0.0
    %2360 = vmatprep.subr.mxu0 0.0
    %2361 = vmatpush1.xpose.msra.mxu0 0.0
    %2362 = vmatprep.subr.mxu0 0.0
    %2363 = vmatpush1.xpose.msra.mxu0 0.0
    %2364 = vmatprep.subr.mxu0 0.0
    %2365 = vmatpush1.xpose.msra.mxu0 0.0
    %2366 = vmatprep.subr.mxu0 0.0
    %2367 = vmatpush1.xpose.msra.mxu0 0.0
    %2368 = vmatprep.subr.mxu0 0.0
    %2369 = vmatpush1.xpose.msra.mxu0 0.0
    %2370 = vmatprep.subr.mxu0 0.0
    %2371 = vmatpush1.xpose.msra.mxu0 0.0
    %2372 = vmatprep.subr.mxu0 0.0
    %2373 = vmatpush1.xpose.msra.mxu0 0.0
    %2374 = vmatprep.subr.mxu0 0.0
    %2375 = vmatpush1.xpose.msra.mxu0 0.0
    %2376 = vmatprep.subr.mxu0 0.0
    %2377 = vmatpush1.xpose.msra.mxu0 0.0
    %2378 = vmatprep.subr.mxu0 0.0
    %2379 = vmatpush1.xpose.msra.mxu0 0.0
    %2380 = vmatprep.subr.mxu0 0.0
    %2381 = vmatpush1.xpose.msra.mxu0 %v2348
    %2382 = vmatprep.subr.mxu0 0.0
    %2383 = vmatpush2.xpose.msra.mxu0 0.0
    %2384 = vmatprep.subr.mxu0 0.0
    %2385 = vmatpush2.xpose.msra.mxu0 0.0
    %2386 = vmatprep.subr.mxu0 0.0
    %2387 = vmatpush2.xpose.msra.mxu0 0.0
    %2388 = vmatprep.subr.mxu0 0.0
    %2389 = vmatpush2.xpose.msra.mxu0 0.0
    %2390 = vmatprep.subr.mxu0 0.0
    %2391 = vmatpush2.xpose.msra.mxu0 0.0
    %2392 = vmatprep.subr.mxu0 0.0
    %2393 = vmatpush2.xpose.msra.mxu0 0.0
    %2394 = vmatprep.subr.mxu0 0.0
    %2395 = vmatpush2.xpose.msra.mxu0 0.0
    %2396 = vmatprep.subr.mxu0 0.0
    %2397 = vmatpush2.xpose.msra.mxu0 0.0
    %2398 = vmatprep.subr.mxu0 0.0
    %2399 = vmatpush2.xpose.msra.mxu0 0.0
    %2400 = vmatprep.subr.mxu0 0.0
    %2401 = vmatpush2.xpose.msra.mxu0 0.0
    %2402 = vmatprep.subr.mxu0 0.0
    %2403 = vmatpush2.xpose.msra.mxu0 0.0
    %2404 = vmatprep.subr.mxu0 0.0
    %2405 = vmatpush2.xpose.msra.mxu0 0.0
    %2406 = vmatprep.subr.mxu0 0.0
    %2407 = vmatpush2.xpose.msra.mxu0 0.0
    %2408 = vmatprep.subr.mxu0 0.0
    %2409 = vmatpush2.xpose.msra.mxu0 0.0
    %2410 = vmatprep.subr.mxu0 0.0
    %2411 = vmatpush2.xpose.msra.mxu0 0.0
    %2412 = vmatprep.subr.mxu0 0.0
    %2413 = vmatpush2.xpose.msra.mxu0 0.0
    %2414 = vmatprep.mubr.f32.mxu0 0.0
    %2415 = vmatmul.mubr.f32.gmra.mxu0 %v2345
    %v2416 = vpop.f32.mrf.mxu0
    %v2417 = vadd.f32 0.0, %v2416
    %v2418 = vpop.f32.mrf.mxu0
    %2419 = vdwg.mxu0
    %v2421 = vsel %vm1887, %v676, 0
    %v2424 = vsel %vm1887, %v1280, 0
    %2426 = vmatprep.subr.mxu0 0.0
    %2427 = vmatpush1.xpose.msra.mxu0 0.0
    %2428 = vmatprep.subr.mxu0 0.0
    %2429 = vmatpush1.xpose.msra.mxu0 0.0
    %2430 = vmatprep.subr.mxu0 0.0
    %2431 = vmatpush1.xpose.msra.mxu0 0.0
    %2432 = vmatprep.subr.mxu0 0.0
    %2433 = vmatpush1.xpose.msra.mxu0 0.0
    %2434 = vmatprep.subr.mxu0 0.0
    %2435 = vmatpush1.xpose.msra.mxu0 0.0
    %2436 = vmatprep.subr.mxu0 0.0
    %2437 = vmatpush1.xpose.msra.mxu0 0.0
    %2438 = vmatprep.subr.mxu0 0.0
    %2439 = vmatpush1.xpose.msra.mxu0 0.0
    %2440 = vmatprep.subr.mxu0 0.0
    %2441 = vmatpush1.xpose.msra.mxu0 0.0
    %2442 = vmatprep.subr.mxu0 0.0
    %2443 = vmatpush1.xpose.msra.mxu0 0.0
    %2444 = vmatprep.subr.mxu0 0.0
    %2445 = vmatpush1.xpose.msra.mxu0 0.0
    %2446 = vmatprep.subr.mxu0 0.0
    %2447 = vmatpush1.xpose.msra.mxu0 0.0
    %2448 = vmatprep.subr.mxu0 0.0
    %2449 = vmatpush1.xpose.msra.mxu0 0.0
    %2450 = vmatprep.subr.mxu0 0.0
    %2451 = vmatpush1.xpose.msra.mxu0 0.0
    %2452 = vmatprep.subr.mxu0 0.0
    %2453 = vmatpush1.xpose.msra.mxu0 0.0
    %2454 = vmatprep.subr.mxu0 0.0
    %2455 = vmatpush1.xpose.msra.mxu0 0.0
    %2456 = vmatprep.subr.mxu0 0.0
    %2457 = vmatpush1.xpose.msra.mxu0 %v2424
    %2458 = vmatprep.subr.mxu0 0.0
    %2459 = vmatpush2.xpose.msra.mxu0 0.0
    %2460 = vmatprep.subr.mxu0 0.0
    %2461 = vmatpush2.xpose.msra.mxu0 0.0
    %2462 = vmatprep.subr.mxu0 0.0
    %2463 = vmatpush2.xpose.msra.mxu0 0.0
    %2464 = vmatprep.subr.mxu0 0.0
    %2465 = vmatpush2.xpose.msra.mxu0 0.0
    %2466 = vmatprep.subr.mxu0 0.0
    %2467 = vmatpush2.xpose.msra.mxu0 0.0
    %2468 = vmatprep.subr.mxu0 0.0
    %2469 = vmatpush2.xpose.msra.mxu0 0.0
    %2470 = vmatprep.subr.mxu0 0.0
    %2471 = vmatpush2.xpose.msra.mxu0 0.0
    %2472 = vmatprep.subr.mxu0 0.0
    %2473 = vmatpush2.xpose.msra.mxu0 0.0
    %2474 = vmatprep.subr.mxu0 0.0
    %2475 = vmatpush2.xpose.msra.mxu0 0.0
    %2476 = vmatprep.subr.mxu0 0.0
    %2477 = vmatpush2.xpose.msra.mxu0 0.0
    %2478 = vmatprep.subr.mxu0 0.0
    %2479 = vmatpush2.xpose.msra.mxu0 0.0
    %2480 = vmatprep.subr.mxu0 0.0
    %2481 = vmatpush2.xpose.msra.mxu0 0.0
    %2482 = vmatprep.subr.mxu0 0.0
    %2483 = vmatpush2.xpose.msra.mxu0 0.0
    %2484 = vmatprep.subr.mxu0 0.0
    %2485 = vmatpush2.xpose.msra.mxu0 0.0
    %2486 = vmatprep.subr.mxu0 0.0
    %2487 = vmatpush2.xpose.msra.mxu0 0.0
    %2488 = vmatprep.subr.mxu0 0.0
    %2489 = vmatpush2.xpose.msra.mxu0 0.0
    %2490 = vmatprep.mubr.f32.mxu0 0.0
    %2491 = vmatmul.mubr.f32.gmra.mxu0 %v2421
    %v2492 = vpop.f32.mrf.mxu0
    %v2493 = vadd.f32 0.0, %v2492
    %v2494 = vpop.f32.mrf.mxu0
    %2495 = vdwg.mxu0
    %v2496 = vmul.f32 %v1961, 0.35355338
    %v2497 = vmul.f32 %v2037, 0.35355338
    %v2498 = vmul.f32 %v2113, 0.35355338
    %v2499 = vmul.f32 %v2189, 0.35355338
    %v2500 = vmul.f32 %v2265, 0.35355338
    %v2501 = vmul.f32 %v2341, 0.35355338
    %v2502 = vmul.f32 %v2417, 0.35355338
    %v2503 = vmul.f32 %v2493, 0.35355338
    %v2506 = vlaneseq
    %v2507 = vshrl.u32 %v2506, 7
    %v2508 = vsub.s32 0, %v2507
    %v2509 = vrot.slane %v66, %v2508
    %v2510 = vlaneseq
    %v2511 = vshrl.u32 %v2510, 7
    %v2512 = vsub.s32 0, %v2511
    %v2513 = vrot.slane %v67, %v2512
    %v2516 = vadd.f32 %v2496, %v2509
    %v2517 = vadd.f32 %v2497, %v2509
    %v2518 = vadd.f32 %v2498, %v2509
    %v2519 = vadd.f32 %v2499, %v2509
    %v2520 = vadd.f32 %v2500, %v2513
    %v2521 = vadd.f32 %v2501, %v2513
    %v2522 = vadd.f32 %v2502, %v2513
    %v2523 = vadd.f32 %v2503, %v2513
    %v2524 = vsel %vm1887, %v2516, -inf
    %2525 = vmax.xlane.f32.xlu0 %v2524
    %v2526 = vpop.xlane.xlu0 %2525
    %v2527 = vsel %vm1887, %v2517, -inf
    %2528 = vmax.xlane.f32.xlu0 %v2527
    %v2529 = vpop.xlane.xlu0 %2528
    %v2530 = vsel %vm1887, %v2518, -inf
    %2531 = vmax.xlane.f32.xlu0 %v2530
    %v2532 = vpop.xlane.xlu0 %2531
    %v2533 = vsel %vm1887, %v2519, -inf
    %2534 = vmax.xlane.f32.xlu0 %v2533
    %v2535 = vpop.xlane.xlu0 %2534
    %v2536 = vsel %vm1887, %v2520, -inf
    %2537 = vmax.xlane.f32.xlu0 %v2536
    %v2538 = vpop.xlane.xlu0 %2537
    %v2539 = vsel %vm1887, %v2521, -inf
    %2540 = vmax.xlane.f32.xlu0 %v2539
    %v2541 = vpop.xlane.xlu0 %2540
    %v2542 = vsel %vm1887, %v2522, -inf
    %2543 = vmax.xlane.f32.xlu0 %v2542
    %v2544 = vpop.xlane.xlu0 %2543
    %v2545 = vsel %vm1887, %v2523, -inf
    %2546 = vmax.xlane.f32.xlu0 %v2545
    %v2547 = vpop.xlane.xlu0 %2546
    %v2548 = vsub.f32 %v2516, %v2526
    %v2549 = vsub.f32 %v2517, %v2529
    %v2550 = vsub.f32 %v2518, %v2532
    %v2551 = vsub.f32 %v2519, %v2535
    %v2552 = vsub.f32 %v2520, %v2538
    %v2553 = vsub.f32 %v2521, %v2541
    %v2554 = vsub.f32 %v2522, %v2544
    %v2555 = vsub.f32 %v2523, %v2547
    %v2556 = vmul.f32 %v2548, 1.442695
    %v2557 = vpow.pop %v2556
    %v2558 = vmul.f32 %v2549, 1.442695
    %v2559 = vpow.pop %v2558
    %v2560 = vmul.f32 %v2550, 1.442695
    %v2561 = vpow.pop %v2560
    %v2562 = vmul.f32 %v2551, 1.442695
    %v2563 = vpow.pop %v2562
    %v2564 = vmul.f32 %v2552, 1.442695
    %v2565 = vpow.pop %v2564
    %v2566 = vmul.f32 %v2553, 1.442695
    %v2567 = vpow.pop %v2566
    %v2568 = vmul.f32 %v2554, 1.442695
    %v2569 = vpow.pop %v2568
    %v2570 = vmul.f32 %v2555, 1.442695
    %v2571 = vpow.pop %v2570
    %v2572 = vsel %vm1887, %v2557, 0.0
    %2573 = vadd.xlane.f32.xlu0 %v2572
    %v2574 = vpop.xlane.xlu0 %2573
    %v2575 = vsel %vm1887, %v2559, 0.0
    %2576 = vadd.xlane.f32.xlu0 %v2575
    %v2577 = vpop.xlane.xlu0 %2576
    %v2578 = vsel %vm1887, %v2561, 0.0
    %2579 = vadd.xlane.f32.xlu0 %v2578
    %v2580 = vpop.xlane.xlu0 %2579
    %v2581 = vsel %vm1887, %v2563, 0.0
    %2582 = vadd.xlane.f32.xlu0 %v2581
    %v2583 = vpop.xlane.xlu0 %2582
    %v2584 = vsel %vm1887, %v2565, 0.0
    %2585 = vadd.xlane.f32.xlu0 %v2584
    %v2586 = vpop.xlane.xlu0 %2585
    %v2587 = vsel %vm1887, %v2567, 0.0
    %2588 = vadd.xlane.f32.xlu0 %v2587
    %v2589 = vpop.xlane.xlu0 %2588
    %v2590 = vsel %vm1887, %v2569, 0.0
    %2591 = vadd.xlane.f32.xlu0 %v2590
    %v2592 = vpop.xlane.xlu0 %2591
    %v2593 = vsel %vm1887, %v2571, 0.0
    %2594 = vadd.xlane.f32.xlu0 %v2593
    %v2595 = vpop.xlane.xlu0 %2594
    %v2596 = vrcp.pop %v2574
    %v2597 = vrcp.pop %v2577
    %v2598 = vrcp.pop %v2580
    %v2599 = vrcp.pop %v2583
    %v2600 = vrcp.pop %v2586
    %v2601 = vrcp.pop %v2589
    %v2602 = vrcp.pop %v2592
    %v2603 = vrcp.pop %v2595
    %v2604 = vmul.f32 %v2557, %v2596
    %v2605 = vmul.f32 %v2559, %v2597
    %v2606 = vmul.f32 %v2561, %v2598
    %v2607 = vmul.f32 %v2563, %v2599
    %v2608 = vmul.f32 %v2565, %v2600
    %v2609 = vmul.f32 %v2567, %v2601
    %v2610 = vmul.f32 %v2569, %v2602
    %v2611 = vmul.f32 %v2571, %v2603
    %v2613 = vsel %vm1887, %v2604, 0
    %2615 = vmatprep.subr.mxu0 0.0
    %2616 = vmatpush1.msra.mxu0 0.0
    %2617 = vmatprep.subr.mxu0 0.0
    %2618 = vmatpush1.msra.mxu0 0.0
    %2619 = vmatprep.subr.mxu0 0.0
    %2620 = vmatpush1.msra.mxu0 0.0
    %2621 = vmatprep.subr.mxu0 0.0
    %2622 = vmatpush1.msra.mxu0 0.0
    %2623 = vmatprep.subr.mxu0 0.0
    %2624 = vmatpush1.msra.mxu0 0.0
    %2625 = vmatprep.subr.mxu0 0.0
    %2626 = vmatpush1.msra.mxu0 0.0
    %2627 = vmatprep.subr.mxu0 0.0
    %2628 = vmatpush1.msra.mxu0 0.0
    %2629 = vmatprep.subr.mxu0 0.0
    %2630 = vmatpush1.msra.mxu0 0.0
    %2631 = vmatprep.subr.mxu0 0.0
    %2632 = vmatpush1.msra.mxu0 0.0
    %2633 = vmatprep.subr.mxu0 0.0
    %2634 = vmatpush1.msra.mxu0 0.0
    %2635 = vmatprep.subr.mxu0 0.0
    %2636 = vmatpush1.msra.mxu0 0.0
    %2637 = vmatprep.subr.mxu0 0.0
    %2638 = vmatpush1.msra.mxu0 0.0
    %2639 = vmatprep.subr.mxu0 0.0
    %2640 = vmatpush1.msra.mxu0 0.0
    %2641 = vmatprep.subr.mxu0 0.0
    %2642 = vmatpush1.msra.mxu0 0.0
    %2643 = vmatprep.subr.mxu0 0.0
    %2644 = vmatpush1.msra.mxu0 0.0
    %2645 = vmatprep.subr.mxu0 0.0
    %2646 = vmatpush1.msra.mxu0 %v1394
    %2647 = vmatprep.subr.mxu0 0.0
    %2648 = vmatpush2.msra.mxu0 0.0
    %2649 = vmatprep.subr.mxu0 0.0
    %2650 = vmatpush2.msra.mxu0 0.0
    %2651 = vmatprep.subr.mxu0 0.0
    %2652 = vmatpush2.msra.mxu0 0.0
    %2653 = vmatprep.subr.mxu0 0.0
    %2654 = vmatpush2.msra.mxu0 0.0
    %2655 = vmatprep.subr.mxu0 0.0
    %2656 = vmatpush2.msra.mxu0 0.0
    %2657 = vmatprep.subr.mxu0 0.0
    %2658 = vmatpush2.msra.mxu0 0.0
    %2659 = vmatprep.subr.mxu0 0.0
    %2660 = vmatpush2.msra.mxu0 0.0
    %2661 = vmatprep.subr.mxu0 0.0
    %2662 = vmatpush2.msra.mxu0 0.0
    %2663 = vmatprep.subr.mxu0 0.0
    %2664 = vmatpush2.msra.mxu0 0.0
    %2665 = vmatprep.subr.mxu0 0.0
    %2666 = vmatpush2.msra.mxu0 0.0
    %2667 = vmatprep.subr.mxu0 0.0
    %2668 = vmatpush2.msra.mxu0 0.0
    %2669 = vmatprep.subr.mxu0 0.0
    %2670 = vmatpush2.msra.mxu0 0.0
    %2671 = vmatprep.subr.mxu0 0.0
    %2672 = vmatpush2.msra.mxu0 0.0
    %2673 = vmatprep.subr.mxu0 0.0
    %2674 = vmatpush2.msra.mxu0 0.0
    %2675 = vmatprep.subr.mxu0 0.0
    %2676 = vmatpush2.msra.mxu0 0.0
    %2677 = vmatprep.subr.mxu0 0.0
    %2678 = vmatpush2.msra.mxu0 0.0
    %2679 = vmatprep.mubr.f32.mxu0 0.0
    %2680 = vmatmul.mubr.f32.gmra.mxu0 %v2613
    %v2681 = vpop.f32.mrf.mxu0
    %v2682 = vadd.f32 0.0, %v2681
    %v2683 = vpop.f32.mrf.mxu0
    %2684 = vdwg.mxu0
    %v2686 = vsel %vm1887, %v2605, 0
    %2688 = vmatprep.subr.mxu0 0.0
    %2689 = vmatpush1.msra.mxu0 0.0
    %2690 = vmatprep.subr.mxu0 0.0
    %2691 = vmatpush1.msra.mxu0 0.0
    %2692 = vmatprep.subr.mxu0 0.0
    %2693 = vmatpush1.msra.mxu0 0.0
    %2694 = vmatprep.subr.mxu0 0.0
    %2695 = vmatpush1.msra.mxu0 0.0
    %2696 = vmatprep.subr.mxu0 0.0
    %2697 = vmatpush1.msra.mxu0 0.0
    %2698 = vmatprep.subr.mxu0 0.0
    %2699 = vmatpush1.msra.mxu0 0.0
    %2700 = vmatprep.subr.mxu0 0.0
    %2701 = vmatpush1.msra.mxu0 0.0
    %2702 = vmatprep.subr.mxu0 0.0
    %2703 = vmatpush1.msra.mxu0 0.0
    %2704 = vmatprep.subr.mxu0 0.0
    %2705 = vmatpush1.msra.mxu0 0.0
    %2706 = vmatprep.subr.mxu0 0.0
    %2707 = vmatpush1.msra.mxu0 0.0
    %2708 = vmatprep.subr.mxu0 0.0
    %2709 = vmatpush1.msra.mxu0 0.0
    %2710 = vmatprep.subr.mxu0 0.0
    %2711 = vmatpush1.msra.mxu0 0.0
    %2712 = vmatprep.subr.mxu0 0.0
    %2713 = vmatpush1.msra.mxu0 0.0
    %2714 = vmatprep.subr.mxu0 0.0
    %2715 = vmatpush1.msra.mxu0 0.0
    %2716 = vmatprep.subr.mxu0 0.0
    %2717 = vmatpush1.msra.mxu0 0.0
    %2718 = vmatprep.subr.mxu0 0.0
    %2719 = vmatpush1.msra.mxu0 %v1464
    %2720 = vmatprep.subr.mxu0 0.0
    %2721 = vmatpush2.msra.mxu0 0.0
    %2722 = vmatprep.subr.mxu0 0.0
    %2723 = vmatpush2.msra.mxu0 0.0
    %2724 = vmatprep.subr.mxu0 0.0
    %2725 = vmatpush2.msra.mxu0 0.0
    %2726 = vmatprep.subr.mxu0 0.0
    %2727 = vmatpush2.msra.mxu0 0.0
    %2728 = vmatprep.subr.mxu0 0.0
    %2729 = vmatpush2.msra.mxu0 0.0
    %2730 = vmatprep.subr.mxu0 0.0
    %2731 = vmatpush2.msra.mxu0 0.0
    %2732 = vmatprep.subr.mxu0 0.0
    %2733 = vmatpush2.msra.mxu0 0.0
    %2734 = vmatprep.subr.mxu0 0.0
    %2735 = vmatpush2.msra.mxu0 0.0
    %2736 = vmatprep.subr.mxu0 0.0
    %2737 = vmatpush2.msra.mxu0 0.0
    %2738 = vmatprep.subr.mxu0 0.0
    %2739 = vmatpush2.msra.mxu0 0.0
    %2740 = vmatprep.subr.mxu0 0.0
    %2741 = vmatpush2.msra.mxu0 0.0
    %2742 = vmatprep.subr.mxu0 0.0
    %2743 = vmatpush2.msra.mxu0 0.0
    %2744 = vmatprep.subr.mxu0 0.0
    %2745 = vmatpush2.msra.mxu0 0.0
    %2746 = vmatprep.subr.mxu0 0.0
    %2747 = vmatpush2.msra.mxu0 0.0
    %2748 = vmatprep.subr.mxu0 0.0
    %2749 = vmatpush2.msra.mxu0 0.0
    %2750 = vmatprep.subr.mxu0 0.0
    %2751 = vmatpush2.msra.mxu0 0.0
    %2752 = vmatprep.mubr.f32.mxu0 0.0
    %2753 = vmatmul.mubr.f32.gmra.mxu0 %v2686
    %v2754 = vpop.f32.mrf.mxu0
    %v2755 = vadd.f32 0.0, %v2754
    %v2756 = vpop.f32.mrf.mxu0
    %2757 = vdwg.mxu0
    %v2759 = vsel %vm1887, %v2606, 0
    %2761 = vmatprep.subr.mxu0 0.0
    %2762 = vmatpush1.msra.mxu0 0.0
    %2763 = vmatprep.subr.mxu0 0.0
    %2764 = vmatpush1.msra.mxu0 0.0
    %2765 = vmatprep.subr.mxu0 0.0
    %2766 = vmatpush1.msra.mxu0 0.0
    %2767 = vmatprep.subr.mxu0 0.0
    %2768 = vmatpush1.msra.mxu0 0.0
    %2769 = vmatprep.subr.mxu0 0.0
    %2770 = vmatpush1.msra.mxu0 0.0
    %2771 = vmatprep.subr.mxu0 0.0
    %2772 = vmatpush1.msra.mxu0 0.0
    %2773 = vmatprep.subr.mxu0 0.0
    %2774 = vmatpush1.msra.mxu0 0.0
    %2775 = vmatprep.subr.mxu0 0.0
    %2776 = vmatpush1.msra.mxu0 0.0
    %2777 = vmatprep.subr.mxu0 0.0
    %2778 = vmatpush1.msra.mxu0 0.0
    %2779 = vmatprep.subr.mxu0 0.0
    %2780 = vmatpush1.msra.mxu0 0.0
    %2781 = vmatprep.subr.mxu0 0.0
    %2782 = vmatpush1.msra.mxu0 0.0
    %2783 = vmatprep.subr.mxu0 0.0
    %2784 = vmatpush1.msra.mxu0 0.0
    %2785 = vmatprep.subr.mxu0 0.0
    %2786 = vmatpush1.msra.mxu0 0.0
    %2787 = vmatprep.subr.mxu0 0.0
    %2788 = vmatpush1.msra.mxu0 0.0
    %2789 = vmatprep.subr.mxu0 0.0
    %2790 = vmatpush1.msra.mxu0 0.0
    %2791 = vmatprep.subr.mxu0 0.0
    %2792 = vmatpush1.msra.mxu0 %v1534
    %2793 = vmatprep.subr.mxu0 0.0
    %2794 = vmatpush2.msra.mxu0 0.0
    %2795 = vmatprep.subr.mxu0 0.0
    %2796 = vmatpush2.msra.mxu0 0.0
    %2797 = vmatprep.subr.mxu0 0.0
    %2798 = vmatpush2.msra.mxu0 0.0
    %2799 = vmatprep.subr.mxu0 0.0
    %2800 = vmatpush2.msra.mxu0 0.0
    %2801 = vmatprep.subr.mxu0 0.0
    %2802 = vmatpush2.msra.mxu0 0.0
    %2803 = vmatprep.subr.mxu0 0.0
    %2804 = vmatpush2.msra.mxu0 0.0
    %2805 = vmatprep.subr.mxu0 0.0
    %2806 = vmatpush2.msra.mxu0 0.0
    %2807 = vmatprep.subr.mxu0 0.0
    %2808 = vmatpush2.msra.mxu0 0.0
    %2809 = vmatprep.subr.mxu0 0.0
    %2810 = vmatpush2.msra.mxu0 0.0
    %2811 = vmatprep.subr.mxu0 0.0
    %2812 = vmatpush2.msra.mxu0 0.0
    %2813 = vmatprep.subr.mxu0 0.0
    %2814 = vmatpush2.msra.mxu0 0.0
    %2815 = vmatprep.subr.mxu0 0.0
    %2816 = vmatpush2.msra.mxu0 0.0
    %2817 = vmatprep.subr.mxu0 0.0
    %2818 = vmatpush2.msra.mxu0 0.0
    %2819 = vmatprep.subr.mxu0 0.0
    %2820 = vmatpush2.msra.mxu0 0.0
    %2821 = vmatprep.subr.mxu0 0.0
    %2822 = vmatpush2.msra.mxu0 0.0
    %2823 = vmatprep.subr.mxu0 0.0
    %2824 = vmatpush2.msra.mxu0 0.0
    %2825 = vmatprep.mubr.f32.mxu0 0.0
    %2826 = vmatmul.mubr.f32.gmra.mxu0 %v2759
    %v2827 = vpop.f32.mrf.mxu0
    %v2828 = vadd.f32 0.0, %v2827
    %v2829 = vpop.f32.mrf.mxu0
    %2830 = vdwg.mxu0
    %v2832 = vsel %vm1887, %v2607, 0
    %2834 = vmatprep.subr.mxu0 0.0
    %2835 = vmatpush1.msra.mxu0 0.0
    %2836 = vmatprep.subr.mxu0 0.0
    %2837 = vmatpush1.msra.mxu0 0.0
    %2838 = vmatprep.subr.mxu0 0.0
    %2839 = vmatpush1.msra.mxu0 0.0
    %2840 = vmatprep.subr.mxu0 0.0
    %2841 = vmatpush1.msra.mxu0 0.0
    %2842 = vmatprep.subr.mxu0 0.0
    %2843 = vmatpush1.msra.mxu0 0.0
    %2844 = vmatprep.subr.mxu0 0.0
    %2845 = vmatpush1.msra.mxu0 0.0
    %2846 = vmatprep.subr.mxu0 0.0
    %2847 = vmatpush1.msra.mxu0 0.0
    %2848 = vmatprep.subr.mxu0 0.0
    %2849 = vmatpush1.msra.mxu0 0.0
    %2850 = vmatprep.subr.mxu0 0.0
    %2851 = vmatpush1.msra.mxu0 0.0
    %2852 = vmatprep.subr.mxu0 0.0
    %2853 = vmatpush1.msra.mxu0 0.0
    %2854 = vmatprep.subr.mxu0 0.0
    %2855 = vmatpush1.msra.mxu0 0.0
    %2856 = vmatprep.subr.mxu0 0.0
    %2857 = vmatpush1.msra.mxu0 0.0
    %2858 = vmatprep.subr.mxu0 0.0
    %2859 = vmatpush1.msra.mxu0 0.0
    %2860 = vmatprep.subr.mxu0 0.0
    %2861 = vmatpush1.msra.mxu0 0.0
    %2862 = vmatprep.subr.mxu0 0.0
    %2863 = vmatpush1.msra.mxu0 0.0
    %2864 = vmatprep.subr.mxu0 0.0
    %2865 = vmatpush1.msra.mxu0 %v1604
    %2866 = vmatprep.subr.mxu0 0.0
    %2867 = vmatpush2.msra.mxu0 0.0
    %2868 = vmatprep.subr.mxu0 0.0
    %2869 = vmatpush2.msra.mxu0 0.0
    %2870 = vmatprep.subr.mxu0 0.0
    %2871 = vmatpush2.msra.mxu0 0.0
    %2872 = vmatprep.subr.mxu0 0.0
    %2873 = vmatpush2.msra.mxu0 0.0
    %2874 = vmatprep.subr.mxu0 0.0
    %2875 = vmatpush2.msra.mxu0 0.0
    %2876 = vmatprep.subr.mxu0 0.0
    %2877 = vmatpush2.msra.mxu0 0.0
    %2878 = vmatprep.subr.mxu0 0.0
    %2879 = vmatpush2.msra.mxu0 0.0
    %2880 = vmatprep.subr.mxu0 0.0
    %2881 = vmatpush2.msra.mxu0 0.0
    %2882 = vmatprep.subr.mxu0 0.0
    %2883 = vmatpush2.msra.mxu0 0.0
    %2884 = vmatprep.subr.mxu0 0.0
    %2885 = vmatpush2.msra.mxu0 0.0
    %2886 = vmatprep.subr.mxu0 0.0
    %2887 = vmatpush2.msra.mxu0 0.0
    %2888 = vmatprep.subr.mxu0 0.0
    %2889 = vmatpush2.msra.mxu0 0.0
    %2890 = vmatprep.subr.mxu0 0.0
    %2891 = vmatpush2.msra.mxu0 0.0
    %2892 = vmatprep.subr.mxu0 0.0
    %2893 = vmatpush2.msra.mxu0 0.0
    %2894 = vmatprep.subr.mxu0 0.0
    %2895 = vmatpush2.msra.mxu0 0.0
    %2896 = vmatprep.subr.mxu0 0.0
    %2897 = vmatpush2.msra.mxu0 0.0
    %2898 = vmatprep.mubr.f32.mxu0 0.0
    %2899 = vmatmul.mubr.f32.gmra.mxu0 %v2832
    %v2900 = vpop.f32.mrf.mxu0
    %v2901 = vadd.f32 0.0, %v2900
    %v2902 = vpop.f32.mrf.mxu0
    %2903 = vdwg.mxu0
    %v2905 = vsel %vm1887, %v2608, 0
    %2907 = vmatprep.subr.mxu0 0.0
    %2908 = vmatpush1.msra.mxu0 0.0
    %2909 = vmatprep.subr.mxu0 0.0
    %2910 = vmatpush1.msra.mxu0 0.0
    %2911 = vmatprep.subr.mxu0 0.0
    %2912 = vmatpush1.msra.mxu0 0.0
    %2913 = vmatprep.subr.mxu0 0.0
    %2914 = vmatpush1.msra.mxu0 0.0
    %2915 = vmatprep.subr.mxu0 0.0
    %2916 = vmatpush1.msra.mxu0 0.0
    %2917 = vmatprep.subr.mxu0 0.0
    %2918 = vmatpush1.msra.mxu0 0.0
    %2919 = vmatprep.subr.mxu0 0.0
    %2920 = vmatpush1.msra.mxu0 0.0
    %2921 = vmatprep.subr.mxu0 0.0
    %2922 = vmatpush1.msra.mxu0 0.0
    %2923 = vmatprep.subr.mxu0 0.0
    %2924 = vmatpush1.msra.mxu0 0.0
    %2925 = vmatprep.subr.mxu0 0.0
    %2926 = vmatpush1.msra.mxu0 0.0
    %2927 = vmatprep.subr.mxu0 0.0
    %2928 = vmatpush1.msra.mxu0 0.0
    %2929 = vmatprep.subr.mxu0 0.0
    %2930 = vmatpush1.msra.mxu0 0.0
    %2931 = vmatprep.subr.mxu0 0.0
    %2932 = vmatpush1.msra.mxu0 0.0
    %2933 = vmatprep.subr.mxu0 0.0
    %2934 = vmatpush1.msra.mxu0 0.0
    %2935 = vmatprep.subr.mxu0 0.0
    %2936 = vmatpush1.msra.mxu0 0.0
    %2937 = vmatprep.subr.mxu0 0.0
    %2938 = vmatpush1.msra.mxu0 %v1674
    %2939 = vmatprep.subr.mxu0 0.0
    %2940 = vmatpush2.msra.mxu0 0.0
    %2941 = vmatprep.subr.mxu0 0.0
    %2942 = vmatpush2.msra.mxu0 0.0
    %2943 = vmatprep.subr.mxu0 0.0
    %2944 = vmatpush2.msra.mxu0 0.0
    %2945 = vmatprep.subr.mxu0 0.0
    %2946 = vmatpush2.msra.mxu0 0.0
    %2947 = vmatprep.subr.mxu0 0.0
    %2948 = vmatpush2.msra.mxu0 0.0
    %2949 = vmatprep.subr.mxu0 0.0
    %2950 = vmatpush2.msra.mxu0 0.0
    %2951 = vmatprep.subr.mxu0 0.0
    %2952 = vmatpush2.msra.mxu0 0.0
    %2953 = vmatprep.subr.mxu0 0.0
    %2954 = vmatpush2.msra.mxu0 0.0
    %2955 = vmatprep.subr.mxu0 0.0
    %2956 = vmatpush2.msra.mxu0 0.0
    %2957 = vmatprep.subr.mxu0 0.0
    %2958 = vmatpush2.msra.mxu0 0.0
    %2959 = vmatprep.subr.mxu0 0.0
    %2960 = vmatpush2.msra.mxu0 0.0
    %2961 = vmatprep.subr.mxu0 0.0
    %2962 = vmatpush2.msra.mxu0 0.0
    %2963 = vmatprep.subr.mxu0 0.0
    %2964 = vmatpush2.msra.mxu0 0.0
    %2965 = vmatprep.subr.mxu0 0.0
    %2966 = vmatpush2.msra.mxu0 0.0
    %2967 = vmatprep.subr.mxu0 0.0
    %2968 = vmatpush2.msra.mxu0 0.0
    %2969 = vmatprep.subr.mxu0 0.0
    %2970 = vmatpush2.msra.mxu0 0.0
    %2971 = vmatprep.mubr.f32.mxu0 0.0
    %2972 = vmatmul.mubr.f32.gmra.mxu0 %v2905
    %v2973 = vpop.f32.mrf.mxu0
    %v2974 = vadd.f32 0.0, %v2973
    %v2975 = vpop.f32.mrf.mxu0
    %2976 = vdwg.mxu0
    %v2978 = vsel %vm1887, %v2609, 0
    %2980 = vmatprep.subr.mxu0 0.0
    %2981 = vmatpush1.msra.mxu0 0.0
    %2982 = vmatprep.subr.mxu0 0.0
    %2983 = vmatpush1.msra.mxu0 0.0
    %2984 = vmatprep.subr.mxu0 0.0
    %2985 = vmatpush1.msra.mxu0 0.0
    %2986 = vmatprep.subr.mxu0 0.0
    %2987 = vmatpush1.msra.mxu0 0.0
    %2988 = vmatprep.subr.mxu0 0.0
    %2989 = vmatpush1.msra.mxu0 0.0
    %2990 = vmatprep.subr.mxu0 0.0
    %2991 = vmatpush1.msra.mxu0 0.0
    %2992 = vmatprep.subr.mxu0 0.0
    %2993 = vmatpush1.msra.mxu0 0.0
    %2994 = vmatprep.subr.mxu0 0.0
    %2995 = vmatpush1.msra.mxu0 0.0
    %2996 = vmatprep.subr.mxu0 0.0
    %2997 = vmatpush1.msra.mxu0 0.0
    %2998 = vmatprep.subr.mxu0 0.0
    %2999 = vmatpush1.msra.mxu0 0.0
    %3000 = vmatprep.subr.mxu0 0.0
    %3001 = vmatpush1.msra.mxu0 0.0
    %3002 = vmatprep.subr.mxu0 0.0
    %3003 = vmatpush1.msra.mxu0 0.0
    %3004 = vmatprep.subr.mxu0 0.0
    %3005 = vmatpush1.msra.mxu0 0.0
    %3006 = vmatprep.subr.mxu0 0.0
    %3007 = vmatpush1.msra.mxu0 0.0
    %3008 = vmatprep.subr.mxu0 0.0
    %3009 = vmatpush1.msra.mxu0 0.0
    %3010 = vmatprep.subr.mxu0 0.0
    %3011 = vmatpush1.msra.mxu0 %v1744
    %3012 = vmatprep.subr.mxu0 0.0
    %3013 = vmatpush2.msra.mxu0 0.0
    %3014 = vmatprep.subr.mxu0 0.0
    %3015 = vmatpush2.msra.mxu0 0.0
    %3016 = vmatprep.subr.mxu0 0.0
    %3017 = vmatpush2.msra.mxu0 0.0
    %3018 = vmatprep.subr.mxu0 0.0
    %3019 = vmatpush2.msra.mxu0 0.0
    %3020 = vmatprep.subr.mxu0 0.0
    %3021 = vmatpush2.msra.mxu0 0.0
    %3022 = vmatprep.subr.mxu0 0.0
    %3023 = vmatpush2.msra.mxu0 0.0
    %3024 = vmatprep.subr.mxu0 0.0
    %3025 = vmatpush2.msra.mxu0 0.0
    %3026 = vmatprep.subr.mxu0 0.0
    %3027 = vmatpush2.msra.mxu0 0.0
    %3028 = vmatprep.subr.mxu0 0.0
    %3029 = vmatpush2.msra.mxu0 0.0
    %3030 = vmatprep.subr.mxu0 0.0
    %3031 = vmatpush2.msra.mxu0 0.0
    %3032 = vmatprep.subr.mxu0 0.0
    %3033 = vmatpush2.msra.mxu0 0.0
    %3034 = vmatprep.subr.mxu0 0.0
    %3035 = vmatpush2.msra.mxu0 0.0
    %3036 = vmatprep.subr.mxu0 0.0
    %3037 = vmatpush2.msra.mxu0 0.0
    %3038 = vmatprep.subr.mxu0 0.0
    %3039 = vmatpush2.msra.mxu0 0.0
    %3040 = vmatprep.subr.mxu0 0.0
    %3041 = vmatpush2.msra.mxu0 0.0
    %3042 = vmatprep.subr.mxu0 0.0
    %3043 = vmatpush2.msra.mxu0 0.0
    %3044 = vmatprep.mubr.f32.mxu0 0.0
    %3045 = vmatmul.mubr.f32.gmra.mxu0 %v2978
    %v3046 = vpop.f32.mrf.mxu0
    %v3047 = vadd.f32 0.0, %v3046
    %v3048 = vpop.f32.mrf.mxu0
    %3049 = vdwg.mxu0
    %v3051 = vsel %vm1887, %v2610, 0
    %3053 = vmatprep.subr.mxu0 0.0
    %3054 = vmatpush1.msra.mxu0 0.0
    %3055 = vmatprep.subr.mxu0 0.0
    %3056 = vmatpush1.msra.mxu0 0.0
    %3057 = vmatprep.subr.mxu0 0.0
    %3058 = vmatpush1.msra.mxu0 0.0
    %3059 = vmatprep.subr.mxu0 0.0
    %3060 = vmatpush1.msra.mxu0 0.0
    %3061 = vmatprep.subr.mxu0 0.0
    %3062 = vmatpush1.msra.mxu0 0.0
    %3063 = vmatprep.subr.mxu0 0.0
    %3064 = vmatpush1.msra.mxu0 0.0
    %3065 = vmatprep.subr.mxu0 0.0
    %3066 = vmatpush1.msra.mxu0 0.0
    %3067 = vmatprep.subr.mxu0 0.0
    %3068 = vmatpush1.msra.mxu0 0.0
    %3069 = vmatprep.subr.mxu0 0.0
    %3070 = vmatpush1.msra.mxu0 0.0
    %3071 = vmatprep.subr.mxu0 0.0
    %3072 = vmatpush1.msra.mxu0 0.0
    %3073 = vmatprep.subr.mxu0 0.0
    %3074 = vmatpush1.msra.mxu0 0.0
    %3075 = vmatprep.subr.mxu0 0.0
    %3076 = vmatpush1.msra.mxu0 0.0
    %3077 = vmatprep.subr.mxu0 0.0
    %3078 = vmatpush1.msra.mxu0 0.0
    %3079 = vmatprep.subr.mxu0 0.0
    %3080 = vmatpush1.msra.mxu0 0.0
    %3081 = vmatprep.subr.mxu0 0.0
    %3082 = vmatpush1.msra.mxu0 0.0
    %3083 = vmatprep.subr.mxu0 0.0
    %3084 = vmatpush1.msra.mxu0 %v1814
    %3085 = vmatprep.subr.mxu0 0.0
    %3086 = vmatpush2.msra.mxu0 0.0
    %3087 = vmatprep.subr.mxu0 0.0
    %3088 = vmatpush2.msra.mxu0 0.0
    %3089 = vmatprep.subr.mxu0 0.0
    %3090 = vmatpush2.msra.mxu0 0.0
    %3091 = vmatprep.subr.mxu0 0.0
    %3092 = vmatpush2.msra.mxu0 0.0
    %3093 = vmatprep.subr.mxu0 0.0
    %3094 = vmatpush2.msra.mxu0 0.0
    %3095 = vmatprep.subr.mxu0 0.0
    %3096 = vmatpush2.msra.mxu0 0.0
    %3097 = vmatprep.subr.mxu0 0.0
    %3098 = vmatpush2.msra.mxu0 0.0
    %3099 = vmatprep.subr.mxu0 0.0
    %3100 = vmatpush2.msra.mxu0 0.0
    %3101 = vmatprep.subr.mxu0 0.0
    %3102 = vmatpush2.msra.mxu0 0.0
    %3103 = vmatprep.subr.mxu0 0.0
    %3104 = vmatpush2.msra.mxu0 0.0
    %3105 = vmatprep.subr.mxu0 0.0
    %3106 = vmatpush2.msra.mxu0 0.0
    %3107 = vmatprep.subr.mxu0 0.0
    %3108 = vmatpush2.msra.mxu0 0.0
    %3109 = vmatprep.subr.mxu0 0.0
    %3110 = vmatpush2.msra.mxu0 0.0
    %3111 = vmatprep.subr.mxu0 0.0
    %3112 = vmatpush2.msra.mxu0 0.0
    %3113 = vmatprep.subr.mxu0 0.0
    %3114 = vmatpush2.msra.mxu0 0.0
    %3115 = vmatprep.subr.mxu0 0.0
    %3116 = vmatpush2.msra.mxu0 0.0
    %3117 = vmatprep.mubr.f32.mxu0 0.0
    %3118 = vmatmul.mubr.f32.gmra.mxu0 %v3051
    %v3119 = vpop.f32.mrf.mxu0
    %v3120 = vadd.f32 0.0, %v3119
    %v3121 = vpop.f32.mrf.mxu0
    %3122 = vdwg.mxu0
    %v3124 = vsel %vm1887, %v2611, 0
    %3126 = vmatprep.subr.mxu0 0.0
    %3127 = vmatpush1.msra.mxu0 0.0
    %3128 = vmatprep.subr.mxu0 0.0
    %3129 = vmatpush1.msra.mxu0 0.0
    %3130 = vmatprep.subr.mxu0 0.0
    %3131 = vmatpush1.msra.mxu0 0.0
    %3132 = vmatprep.subr.mxu0 0.0
    %3133 = vmatpush1.msra.mxu0 0.0
    %3134 = vmatprep.subr.mxu0 0.0
    %3135 = vmatpush1.msra.mxu0 0.0
    %3136 = vmatprep.subr.mxu0 0.0
    %3137 = vmatpush1.msra.mxu0 0.0
    %3138 = vmatprep.subr.mxu0 0.0
    %3139 = vmatpush1.msra.mxu0 0.0
    %3140 = vmatprep.subr.mxu0 0.0
    %3141 = vmatpush1.msra.mxu0 0.0
    %3142 = vmatprep.subr.mxu0 0.0
    %3143 = vmatpush1.msra.mxu0 0.0
    %3144 = vmatprep.subr.mxu0 0.0
    %3145 = vmatpush1.msra.mxu0 0.0
    %3146 = vmatprep.subr.mxu0 0.0
    %3147 = vmatpush1.msra.mxu0 0.0
    %3148 = vmatprep.subr.mxu0 0.0
    %3149 = vmatpush1.msra.mxu0 0.0
    %3150 = vmatprep.subr.mxu0 0.0
    %3151 = vmatpush1.msra.mxu0 0.0
    %3152 = vmatprep.subr.mxu0 0.0
    %3153 = vmatpush1.msra.mxu0 0.0
    %3154 = vmatprep.subr.mxu0 0.0
    %3155 = vmatpush1.msra.mxu0 0.0
    %3156 = vmatprep.subr.mxu0 0.0
    %3157 = vmatpush1.msra.mxu0 %v1884
    %3158 = vmatprep.subr.mxu0 0.0
    %3159 = vmatpush2.msra.mxu0 0.0
    %3160 = vmatprep.subr.mxu0 0.0
    %3161 = vmatpush2.msra.mxu0 0.0
    %3162 = vmatprep.subr.mxu0 0.0
    %3163 = vmatpush2.msra.mxu0 0.0
    %3164 = vmatprep.subr.mxu0 0.0
    %3165 = vmatpush2.msra.mxu0 0.0
    %3166 = vmatprep.subr.mxu0 0.0
    %3167 = vmatpush2.msra.mxu0 0.0
    %3168 = vmatprep.subr.mxu0 0.0
    %3169 = vmatpush2.msra.mxu0 0.0
    %3170 = vmatprep.subr.mxu0 0.0
    %3171 = vmatpush2.msra.mxu0 0.0
    %3172 = vmatprep.subr.mxu0 0.0
    %3173 = vmatpush2.msra.mxu0 0.0
    %3174 = vmatprep.subr.mxu0 0.0
    %3175 = vmatpush2.msra.mxu0 0.0
    %3176 = vmatprep.subr.mxu0 0.0
    %3177 = vmatpush2.msra.mxu0 0.0
    %3178 = vmatprep.subr.mxu0 0.0
    %3179 = vmatpush2.msra.mxu0 0.0
    %3180 = vmatprep.subr.mxu0 0.0
    %3181 = vmatpush2.msra.mxu0 0.0
    %3182 = vmatprep.subr.mxu0 0.0
    %3183 = vmatpush2.msra.mxu0 0.0
    %3184 = vmatprep.subr.mxu0 0.0
    %3185 = vmatpush2.msra.mxu0 0.0
    %3186 = vmatprep.subr.mxu0 0.0
    %3187 = vmatpush2.msra.mxu0 0.0
    %3188 = vmatprep.subr.mxu0 0.0
    %3189 = vmatpush2.msra.mxu0 0.0
    %3190 = vmatprep.mubr.f32.mxu0 0.0
    %3191 = vmatmul.mubr.f32.gmra.mxu0 %v3124
    %v3192 = vpop.f32.mrf.mxu0
    %v3193 = vadd.f32 0.0, %v3192
    %v3194 = vpop.f32.mrf.mxu0
    %3195 = vdwg.mxu0
    %v3196 = vld [vmem:[%s8] sm:$0xff]
    %v3197 = vld [vmem:[%s8 + $0x8] sm:$0xff]
    %v3198 = vld [vmem:[%s8 + $0x10] sm:$0xff]
    %v3199 = vld [vmem:[%s8 + $0x18] sm:$0xff]
    %v3201 = vsel %vm1887, %v2682, 0
    %3203 = vmatprep.subr.mxu0 0.0
    %3204 = vmatpush1.msra.mxu0 0.0
    %3205 = vmatprep.subr.mxu0 0.0
    %3206 = vmatpush1.msra.mxu0 0.0
    %3207 = vmatprep.subr.mxu0 0.0
    %3208 = vmatpush1.msra.mxu0 0.0
    %3209 = vmatprep.subr.mxu0 0.0
    %3210 = vmatpush1.msra.mxu0 0.0
    %3211 = vmatprep.subr.mxu0 0.0
    %3212 = vmatpush1.msra.mxu0 0.0
    %3213 = vmatprep.subr.mxu0 0.0
    %3214 = vmatpush1.msra.mxu0 0.0
    %3215 = vmatprep.subr.mxu0 0.0
    %3216 = vmatpush1.msra.mxu0 0.0
    %3217 = vmatprep.subr.mxu0 0.0
    %3218 = vmatpush1.msra.mxu0 0.0
    %3219 = vmatprep.subr.mxu0 0.0
    %3220 = vmatpush1.msra.mxu0 0.0
    %3221 = vmatprep.subr.mxu0 0.0
    %3222 = vmatpush1.msra.mxu0 0.0
    %3223 = vmatprep.subr.mxu0 0.0
    %3224 = vmatpush1.msra.mxu0 0.0
    %3225 = vmatprep.subr.mxu0 0.0
    %3226 = vmatpush1.msra.mxu0 0.0
    %3227 = vmatprep.subr.mxu0 0.0
    %3228 = vmatpush1.msra.mxu0 0.0
    %3229 = vmatprep.subr.mxu0 0.0
    %3230 = vmatpush1.msra.mxu0 0.0
    %3231 = vmatprep.subr.mxu0 0.0
    %3232 = vmatpush1.msra.mxu0 0.0
    %3233 = vmatprep.subr.mxu0 0.0
    %3234 = vmatpush1.msra.mxu0 %v3196
    %3235 = vmatprep.subr.mxu0 0.0
    %3236 = vmatpush2.msra.mxu0 0.0
    %3237 = vmatprep.subr.mxu0 0.0
    %3238 = vmatpush2.msra.mxu0 0.0
    %3239 = vmatprep.subr.mxu0 0.0
    %3240 = vmatpush2.msra.mxu0 0.0
    %3241 = vmatprep.subr.mxu0 0.0
    %3242 = vmatpush2.msra.mxu0 0.0
    %3243 = vmatprep.subr.mxu0 0.0
    %3244 = vmatpush2.msra.mxu0 0.0
    %3245 = vmatprep.subr.mxu0 0.0
    %3246 = vmatpush2.msra.mxu0 0.0
    %3247 = vmatprep.subr.mxu0 0.0
    %3248 = vmatpush2.msra.mxu0 0.0
    %3249 = vmatprep.subr.mxu0 0.0
    %3250 = vmatpush2.msra.mxu0 0.0
    %3251 = vmatprep.subr.mxu0 0.0
    %3252 = vmatpush2.msra.mxu0 0.0
    %3253 = vmatprep.subr.mxu0 0.0
    %3254 = vmatpush2.msra.mxu0 0.0
    %3255 = vmatprep.subr.mxu0 0.0
    %3256 = vmatpush2.msra.mxu0 0.0
    %3257 = vmatprep.subr.mxu0 0.0
    %3258 = vmatpush2.msra.mxu0 0.0
    %3259 = vmatprep.subr.mxu0 0.0
    %3260 = vmatpush2.msra.mxu0 0.0
    %3261 = vmatprep.subr.mxu0 0.0
    %3262 = vmatpush2.msra.mxu0 0.0
    %3263 = vmatprep.subr.mxu0 0.0
    %3264 = vmatpush2.msra.mxu0 0.0
    %3265 = vmatprep.subr.mxu0 0.0
    %3266 = vmatpush2.msra.mxu0 0.0
    %3267 = vmatprep.mubr.f32.mxu0 0.0
    %3268 = vmatmul.mubr.f32.gmra.mxu0 %v3201
    %v3269 = vpop.f32.mrf.mxu0
    %v3270 = vadd.f32 0.0, %v3269
    %v3271 = vpop.f32.mrf.mxu0
    %3272 = vdwg.mxu0
    %v3274 = vsel %vm1887, %v2755, 0
    %3276 = vmatprep.subr.mxu0 0.0
    %3277 = vmatpush1.msra.mxu0 0.0
    %3278 = vmatprep.subr.mxu0 0.0
    %3279 = vmatpush1.msra.mxu0 0.0
    %3280 = vmatprep.subr.mxu0 0.0
    %3281 = vmatpush1.msra.mxu0 0.0
    %3282 = vmatprep.subr.mxu0 0.0
    %3283 = vmatpush1.msra.mxu0 0.0
    %3284 = vmatprep.subr.mxu0 0.0
    %3285 = vmatpush1.msra.mxu0 0.0
    %3286 = vmatprep.subr.mxu0 0.0
    %3287 = vmatpush1.msra.mxu0 0.0
    %3288 = vmatprep.subr.mxu0 0.0
    %3289 = vmatpush1.msra.mxu0 0.0
    %3290 = vmatprep.subr.mxu0 0.0
    %3291 = vmatpush1.msra.mxu0 0.0
    %3292 = vmatprep.subr.mxu0 0.0
    %3293 = vmatpush1.msra.mxu0 0.0
    %3294 = vmatprep.subr.mxu0 0.0
    %3295 = vmatpush1.msra.mxu0 0.0
    %3296 = vmatprep.subr.mxu0 0.0
    %3297 = vmatpush1.msra.mxu0 0.0
    %3298 = vmatprep.subr.mxu0 0.0
    %3299 = vmatpush1.msra.mxu0 0.0
    %3300 = vmatprep.subr.mxu0 0.0
    %3301 = vmatpush1.msra.mxu0 0.0
    %3302 = vmatprep.subr.mxu0 0.0
    %3303 = vmatpush1.msra.mxu0 0.0
    %3304 = vmatprep.subr.mxu0 0.0
    %3305 = vmatpush1.msra.mxu0 0.0
    %3306 = vmatprep.subr.mxu0 0.0
    %3307 = vmatpush1.msra.mxu0 %v3197
    %3308 = vmatprep.subr.mxu0 0.0
    %3309 = vmatpush2.msra.mxu0 0.0
    %3310 = vmatprep.subr.mxu0 0.0
    %3311 = vmatpush2.msra.mxu0 0.0
    %3312 = vmatprep.subr.mxu0 0.0
    %3313 = vmatpush2.msra.mxu0 0.0
    %3314 = vmatprep.subr.mxu0 0.0
    %3315 = vmatpush2.msra.mxu0 0.0
    %3316 = vmatprep.subr.mxu0 0.0
    %3317 = vmatpush2.msra.mxu0 0.0
    %3318 = vmatprep.subr.mxu0 0.0
    %3319 = vmatpush2.msra.mxu0 0.0
    %3320 = vmatprep.subr.mxu0 0.0
    %3321 = vmatpush2.msra.mxu0 0.0
    %3322 = vmatprep.subr.mxu0 0.0
    %3323 = vmatpush2.msra.mxu0 0.0
    %3324 = vmatprep.subr.mxu0 0.0
    %3325 = vmatpush2.msra.mxu0 0.0
    %3326 = vmatprep.subr.mxu0 0.0
    %3327 = vmatpush2.msra.mxu0 0.0
    %3328 = vmatprep.subr.mxu0 0.0
    %3329 = vmatpush2.msra.mxu0 0.0
    %3330 = vmatprep.subr.mxu0 0.0
    %3331 = vmatpush2.msra.mxu0 0.0
    %3332 = vmatprep.subr.mxu0 0.0
    %3333 = vmatpush2.msra.mxu0 0.0
    %3334 = vmatprep.subr.mxu0 0.0
    %3335 = vmatpush2.msra.mxu0 0.0
    %3336 = vmatprep.subr.mxu0 0.0
    %3337 = vmatpush2.msra.mxu0 0.0
    %3338 = vmatprep.subr.mxu0 0.0
    %3339 = vmatpush2.msra.mxu0 0.0
    %3340 = vmatprep.mubr.f32.mxu0 0.0
    %3341 = vmatmul.mubr.f32.gmra.mxu0 %v3274
    %v3342 = vpop.f32.mrf.mxu0
    %v3343 = vadd.f32 0.0, %v3342
    %v3344 = vpop.f32.mrf.mxu0
    %3345 = vdwg.mxu0
    %v3347 = vsel %vm1887, %v2828, 0
    %3349 = vmatprep.subr.mxu0 0.0
    %3350 = vmatpush1.msra.mxu0 0.0
    %3351 = vmatprep.subr.mxu0 0.0
    %3352 = vmatpush1.msra.mxu0 0.0
    %3353 = vmatprep.subr.mxu0 0.0
    %3354 = vmatpush1.msra.mxu0 0.0
    %3355 = vmatprep.subr.mxu0 0.0
    %3356 = vmatpush1.msra.mxu0 0.0
    %3357 = vmatprep.subr.mxu0 0.0
    %3358 = vmatpush1.msra.mxu0 0.0
    %3359 = vmatprep.subr.mxu0 0.0
    %3360 = vmatpush1.msra.mxu0 0.0
    %3361 = vmatprep.subr.mxu0 0.0
    %3362 = vmatpush1.msra.mxu0 0.0
    %3363 = vmatprep.subr.mxu0 0.0
    %3364 = vmatpush1.msra.mxu0 0.0
    %3365 = vmatprep.subr.mxu0 0.0
    %3366 = vmatpush1.msra.mxu0 0.0
    %3367 = vmatprep.subr.mxu0 0.0
    %3368 = vmatpush1.msra.mxu0 0.0
    %3369 = vmatprep.subr.mxu0 0.0
    %3370 = vmatpush1.msra.mxu0 0.0
    %3371 = vmatprep.subr.mxu0 0.0
    %3372 = vmatpush1.msra.mxu0 0.0
    %3373 = vmatprep.subr.mxu0 0.0
    %3374 = vmatpush1.msra.mxu0 0.0
    %3375 = vmatprep.subr.mxu0 0.0
    %3376 = vmatpush1.msra.mxu0 0.0
    %3377 = vmatprep.subr.mxu0 0.0
    %3378 = vmatpush1.msra.mxu0 0.0
    %3379 = vmatprep.subr.mxu0 0.0
    %3380 = vmatpush1.msra.mxu0 %v3198
    %3381 = vmatprep.subr.mxu0 0.0
    %3382 = vmatpush2.msra.mxu0 0.0
    %3383 = vmatprep.subr.mxu0 0.0
    %3384 = vmatpush2.msra.mxu0 0.0
    %3385 = vmatprep.subr.mxu0 0.0
    %3386 = vmatpush2.msra.mxu0 0.0
    %3387 = vmatprep.subr.mxu0 0.0
    %3388 = vmatpush2.msra.mxu0 0.0
    %3389 = vmatprep.subr.mxu0 0.0
    %3390 = vmatpush2.msra.mxu0 0.0
    %3391 = vmatprep.subr.mxu0 0.0
    %3392 = vmatpush2.msra.mxu0 0.0
    %3393 = vmatprep.subr.mxu0 0.0
    %3394 = vmatpush2.msra.mxu0 0.0
    %3395 = vmatprep.subr.mxu0 0.0
    %3396 = vmatpush2.msra.mxu0 0.0
    %3397 = vmatprep.subr.mxu0 0.0
    %3398 = vmatpush2.msra.mxu0 0.0
    %3399 = vmatprep.subr.mxu0 0.0
    %3400 = vmatpush2.msra.mxu0 0.0
    %3401 = vmatprep.subr.mxu0 0.0
    %3402 = vmatpush2.msra.mxu0 0.0
    %3403 = vmatprep.subr.mxu0 0.0
    %3404 = vmatpush2.msra.mxu0 0.0
    %3405 = vmatprep.subr.mxu0 0.0
    %3406 = vmatpush2.msra.mxu0 0.0
    %3407 = vmatprep.subr.mxu0 0.0
    %3408 = vmatpush2.msra.mxu0 0.0
    %3409 = vmatprep.subr.mxu0 0.0
    %3410 = vmatpush2.msra.mxu0 0.0
    %3411 = vmatprep.subr.mxu0 0.0
    %3412 = vmatpush2.msra.mxu0 0.0
    %3413 = vmatprep.mubr.f32.mxu0 0.0
    %3414 = vmatmul.mubr.f32.gmra.mxu0 %v3347
    %v3415 = vpop.f32.mrf.mxu0
    %v3416 = vadd.f32 0.0, %v3415
    %v3417 = vpop.f32.mrf.mxu0
    %3418 = vdwg.mxu0
    %v3420 = vsel %vm1887, %v2901, 0
    %3422 = vmatprep.subr.mxu0 0.0
    %3423 = vmatpush1.msra.mxu0 0.0
    %3424 = vmatprep.subr.mxu0 0.0
    %3425 = vmatpush1.msra.mxu0 0.0
    %3426 = vmatprep.subr.mxu0 0.0
    %3427 = vmatpush1.msra.mxu0 0.0
    %3428 = vmatprep.subr.mxu0 0.0
    %3429 = vmatpush1.msra.mxu0 0.0
    %3430 = vmatprep.subr.mxu0 0.0
    %3431 = vmatpush1.msra.mxu0 0.0
    %3432 = vmatprep.subr.mxu0 0.0
    %3433 = vmatpush1.msra.mxu0 0.0
    %3434 = vmatprep.subr.mxu0 0.0
    %3435 = vmatpush1.msra.mxu0 0.0
    %3436 = vmatprep.subr.mxu0 0.0
    %3437 = vmatpush1.msra.mxu0 0.0
    %3438 = vmatprep.subr.mxu0 0.0
    %3439 = vmatpush1.msra.mxu0 0.0
    %3440 = vmatprep.subr.mxu0 0.0
    %3441 = vmatpush1.msra.mxu0 0.0
    %3442 = vmatprep.subr.mxu0 0.0
    %3443 = vmatpush1.msra.mxu0 0.0
    %3444 = vmatprep.subr.mxu0 0.0
    %3445 = vmatpush1.msra.mxu0 0.0
    %3446 = vmatprep.subr.mxu0 0.0
    %3447 = vmatpush1.msra.mxu0 0.0
    %3448 = vmatprep.subr.mxu0 0.0
    %3449 = vmatpush1.msra.mxu0 0.0
    %3450 = vmatprep.subr.mxu0 0.0
    %3451 = vmatpush1.msra.mxu0 0.0
    %3452 = vmatprep.subr.mxu0 0.0
    %3453 = vmatpush1.msra.mxu0 %v3199
    %3454 = vmatprep.subr.mxu0 0.0
    %3455 = vmatpush2.msra.mxu0 0.0
    %3456 = vmatprep.subr.mxu0 0.0
    %3457 = vmatpush2.msra.mxu0 0.0
    %3458 = vmatprep.subr.mxu0 0.0
    %3459 = vmatpush2.msra.mxu0 0.0
    %3460 = vmatprep.subr.mxu0 0.0
    %3461 = vmatpush2.msra.mxu0 0.0
    %3462 = vmatprep.subr.mxu0 0.0
    %3463 = vmatpush2.msra.mxu0 0.0
    %3464 = vmatprep.subr.mxu0 0.0
    %3465 = vmatpush2.msra.mxu0 0.0
    %3466 = vmatprep.subr.mxu0 0.0
    %3467 = vmatpush2.msra.mxu0 0.0
    %3468 = vmatprep.subr.mxu0 0.0
    %3469 = vmatpush2.msra.mxu0 0.0
    %3470 = vmatprep.subr.mxu0 0.0
    %3471 = vmatpush2.msra.mxu0 0.0
    %3472 = vmatprep.subr.mxu0 0.0
    %3473 = vmatpush2.msra.mxu0 0.0
    %3474 = vmatprep.subr.mxu0 0.0
    %3475 = vmatpush2.msra.mxu0 0.0
    %3476 = vmatprep.subr.mxu0 0.0
    %3477 = vmatpush2.msra.mxu0 0.0
    %3478 = vmatprep.subr.mxu0 0.0
    %3479 = vmatpush2.msra.mxu0 0.0
    %3480 = vmatprep.subr.mxu0 0.0
    %3481 = vmatpush2.msra.mxu0 0.0
    %3482 = vmatprep.subr.mxu0 0.0
    %3483 = vmatpush2.msra.mxu0 0.0
    %3484 = vmatprep.subr.mxu0 0.0
    %3485 = vmatpush2.msra.mxu0 0.0
    %3486 = vmatprep.mubr.f32.mxu0 0.0
    %3487 = vmatmul.mubr.f32.gmra.mxu0 %v3420
    %v3488 = vpop.f32.mrf.mxu0
    %v3489 = vadd.f32 0.0, %v3488
    %v3490 = vpop.f32.mrf.mxu0
    %3491 = vdwg.mxu0
    %v3493 = vsel %vm1887, %v2974, 0
    %3495 = vmatprep.subr.mxu0 0.0
    %3496 = vmatpush1.msra.mxu0 0.0
    %3497 = vmatprep.subr.mxu0 0.0
    %3498 = vmatpush1.msra.mxu0 0.0
    %3499 = vmatprep.subr.mxu0 0.0
    %3500 = vmatpush1.msra.mxu0 0.0
    %3501 = vmatprep.subr.mxu0 0.0
    %3502 = vmatpush1.msra.mxu0 0.0
    %3503 = vmatprep.subr.mxu0 0.0
    %3504 = vmatpush1.msra.mxu0 0.0
    %3505 = vmatprep.subr.mxu0 0.0
    %3506 = vmatpush1.msra.mxu0 0.0
    %3507 = vmatprep.subr.mxu0 0.0
    %3508 = vmatpush1.msra.mxu0 0.0
    %3509 = vmatprep.subr.mxu0 0.0
    %3510 = vmatpush1.msra.mxu0 0.0
    %3511 = vmatprep.subr.mxu0 0.0
    %3512 = vmatpush1.msra.mxu0 0.0
    %3513 = vmatprep.subr.mxu0 0.0
    %3514 = vmatpush1.msra.mxu0 0.0
    %3515 = vmatprep.subr.mxu0 0.0
    %3516 = vmatpush1.msra.mxu0 0.0
    %3517 = vmatprep.subr.mxu0 0.0
    %3518 = vmatpush1.msra.mxu0 0.0
    %3519 = vmatprep.subr.mxu0 0.0
    %3520 = vmatpush1.msra.mxu0 0.0
    %3521 = vmatprep.subr.mxu0 0.0
    %3522 = vmatpush1.msra.mxu0 0.0
    %3523 = vmatprep.subr.mxu0 0.0
    %3524 = vmatpush1.msra.mxu0 0.0
    %3525 = vmatprep.subr.mxu0 0.0
    %3526 = vmatpush1.msra.mxu0 %v3196
    %3527 = vmatprep.subr.mxu0 0.0
    %3528 = vmatpush2.msra.mxu0 0.0
    %3529 = vmatprep.subr.mxu0 0.0
    %3530 = vmatpush2.msra.mxu0 0.0
    %3531 = vmatprep.subr.mxu0 0.0
    %3532 = vmatpush2.msra.mxu0 0.0
    %3533 = vmatprep.subr.mxu0 0.0
    %3534 = vmatpush2.msra.mxu0 0.0
    %3535 = vmatprep.subr.mxu0 0.0
    %3536 = vmatpush2.msra.mxu0 0.0
    %3537 = vmatprep.subr.mxu0 0.0
    %3538 = vmatpush2.msra.mxu0 0.0
    %3539 = vmatprep.subr.mxu0 0.0
    %3540 = vmatpush2.msra.mxu0 0.0
    %3541 = vmatprep.subr.mxu0 0.0
    %3542 = vmatpush2.msra.mxu0 0.0
    %3543 = vmatprep.subr.mxu0 0.0
    %3544 = vmatpush2.msra.mxu0 0.0
    %3545 = vmatprep.subr.mxu0 0.0
    %3546 = vmatpush2.msra.mxu0 0.0
    %3547 = vmatprep.subr.mxu0 0.0
    %3548 = vmatpush2.msra.mxu0 0.0
    %3549 = vmatprep.subr.mxu0 0.0
    %3550 = vmatpush2.msra.mxu0 0.0
    %3551 = vmatprep.subr.mxu0 0.0
    %3552 = vmatpush2.msra.mxu0 0.0
    %3553 = vmatprep.subr.mxu0 0.0
    %3554 = vmatpush2.msra.mxu0 0.0
    %3555 = vmatprep.subr.mxu0 0.0
    %3556 = vmatpush2.msra.mxu0 0.0
    %3557 = vmatprep.subr.mxu0 0.0
    %3558 = vmatpush2.msra.mxu0 0.0
    %3559 = vmatprep.mubr.f32.mxu0 0.0
    %3560 = vmatmul.mubr.f32.gmra.mxu0 %v3493
    %v3561 = vpop.f32.mrf.mxu0
    %v3562 = vadd.f32 0.0, %v3561
    %v3563 = vpop.f32.mrf.mxu0
    %3564 = vdwg.mxu0
    %v3566 = vsel %vm1887, %v3047, 0
    %3568 = vmatprep.subr.mxu0 0.0
    %3569 = vmatpush1.msra.mxu0 0.0
    %3570 = vmatprep.subr.mxu0 0.0
    %3571 = vmatpush1.msra.mxu0 0.0
    %3572 = vmatprep.subr.mxu0 0.0
    %3573 = vmatpush1.msra.mxu0 0.0
    %3574 = vmatprep.subr.mxu0 0.0
    %3575 = vmatpush1.msra.mxu0 0.0
    %3576 = vmatprep.subr.mxu0 0.0
    %3577 = vmatpush1.msra.mxu0 0.0
    %3578 = vmatprep.subr.mxu0 0.0
    %3579 = vmatpush1.msra.mxu0 0.0
    %3580 = vmatprep.subr.mxu0 0.0
    %3581 = vmatpush1.msra.mxu0 0.0
    %3582 = vmatprep.subr.mxu0 0.0
    %3583 = vmatpush1.msra.mxu0 0.0
    %3584 = vmatprep.subr.mxu0 0.0
    %3585 = vmatpush1.msra.mxu0 0.0
    %3586 = vmatprep.subr.mxu0 0.0
    %3587 = vmatpush1.msra.mxu0 0.0
    %3588 = vmatprep.subr.mxu0 0.0
    %3589 = vmatpush1.msra.mxu0 0.0
    %3590 = vmatprep.subr.mxu0 0.0
    %3591 = vmatpush1.msra.mxu0 0.0
    %3592 = vmatprep.subr.mxu0 0.0
    %3593 = vmatpush1.msra.mxu0 0.0
    %3594 = vmatprep.subr.mxu0 0.0
    %3595 = vmatpush1.msra.mxu0 0.0
    %3596 = vmatprep.subr.mxu0 0.0
    %3597 = vmatpush1.msra.mxu0 0.0
    %3598 = vmatprep.subr.mxu0 0.0
    %3599 = vmatpush1.msra.mxu0 %v3197
    %3600 = vmatprep.subr.mxu0 0.0
    %3601 = vmatpush2.msra.mxu0 0.0
    %3602 = vmatprep.subr.mxu0 0.0
    %3603 = vmatpush2.msra.mxu0 0.0
    %3604 = vmatprep.subr.mxu0 0.0
    %3605 = vmatpush2.msra.mxu0 0.0
    %3606 = vmatprep.subr.mxu0 0.0
    %3607 = vmatpush2.msra.mxu0 0.0
    %3608 = vmatprep.subr.mxu0 0.0
    %3609 = vmatpush2.msra.mxu0 0.0
    %3610 = vmatprep.subr.mxu0 0.0
    %3611 = vmatpush2.msra.mxu0 0.0
    %3612 = vmatprep.subr.mxu0 0.0
    %3613 = vmatpush2.msra.mxu0 0.0
    %3614 = vmatprep.subr.mxu0 0.0
    %3615 = vmatpush2.msra.mxu0 0.0
    %3616 = vmatprep.subr.mxu0 0.0
    %3617 = vmatpush2.msra.mxu0 0.0
    %3618 = vmatprep.subr.mxu0 0.0
    %3619 = vmatpush2.msra.mxu0 0.0
    %3620 = vmatprep.subr.mxu0 0.0
    %3621 = vmatpush2.msra.mxu0 0.0
    %3622 = vmatprep.subr.mxu0 0.0
    %3623 = vmatpush2.msra.mxu0 0.0
    %3624 = vmatprep.subr.mxu0 0.0
    %3625 = vmatpush2.msra.mxu0 0.0
    %3626 = vmatprep.subr.mxu0 0.0
    %3627 = vmatpush2.msra.mxu0 0.0
    %3628 = vmatprep.subr.mxu0 0.0
    %3629 = vmatpush2.msra.mxu0 0.0
    %3630 = vmatprep.subr.mxu0 0.0
    %3631 = vmatpush2.msra.mxu0 0.0
    %3632 = vmatprep.mubr.f32.mxu0 0.0
    %3633 = vmatmul.mubr.f32.gmra.mxu0 %v3566
    %v3634 = vpop.f32.mrf.mxu0
    %v3635 = vadd.f32 0.0, %v3634
    %v3636 = vpop.f32.mrf.mxu0
    %3637 = vdwg.mxu0
    %v3639 = vsel %vm1887, %v3120, 0
    %3641 = vmatprep.subr.mxu0 0.0
    %3642 = vmatpush1.msra.mxu0 0.0
    %3643 = vmatprep.subr.mxu0 0.0
    %3644 = vmatpush1.msra.mxu0 0.0
    %3645 = vmatprep.subr.mxu0 0.0
    %3646 = vmatpush1.msra.mxu0 0.0
    %3647 = vmatprep.subr.mxu0 0.0
    %3648 = vmatpush1.msra.mxu0 0.0
    %3649 = vmatprep.subr.mxu0 0.0
    %3650 = vmatpush1.msra.mxu0 0.0
    %3651 = vmatprep.subr.mxu0 0.0
    %3652 = vmatpush1.msra.mxu0 0.0
    %3653 = vmatprep.subr.mxu0 0.0
    %3654 = vmatpush1.msra.mxu0 0.0
    %3655 = vmatprep.subr.mxu0 0.0
    %3656 = vmatpush1.msra.mxu0 0.0
    %3657 = vmatprep.subr.mxu0 0.0
    %3658 = vmatpush1.msra.mxu0 0.0
    %3659 = vmatprep.subr.mxu0 0.0
    %3660 = vmatpush1.msra.mxu0 0.0
    %3661 = vmatprep.subr.mxu0 0.0
    %3662 = vmatpush1.msra.mxu0 0.0
    %3663 = vmatprep.subr.mxu0 0.0
    %3664 = vmatpush1.msra.mxu0 0.0
    %3665 = vmatprep.subr.mxu0 0.0
    %3666 = vmatpush1.msra.mxu0 0.0
    %3667 = vmatprep.subr.mxu0 0.0
    %3668 = vmatpush1.msra.mxu0 0.0
    %3669 = vmatprep.subr.mxu0 0.0
    %3670 = vmatpush1.msra.mxu0 0.0
    %3671 = vmatprep.subr.mxu0 0.0
    %3672 = vmatpush1.msra.mxu0 %v3198
    %3673 = vmatprep.subr.mxu0 0.0
    %3674 = vmatpush2.msra.mxu0 0.0
    %3675 = vmatprep.subr.mxu0 0.0
    %3676 = vmatpush2.msra.mxu0 0.0
    %3677 = vmatprep.subr.mxu0 0.0
    %3678 = vmatpush2.msra.mxu0 0.0
    %3679 = vmatprep.subr.mxu0 0.0
    %3680 = vmatpush2.msra.mxu0 0.0
    %3681 = vmatprep.subr.mxu0 0.0
    %3682 = vmatpush2.msra.mxu0 0.0
    %3683 = vmatprep.subr.mxu0 0.0
    %3684 = vmatpush2.msra.mxu0 0.0
    %3685 = vmatprep.subr.mxu0 0.0
    %3686 = vmatpush2.msra.mxu0 0.0
    %3687 = vmatprep.subr.mxu0 0.0
    %3688 = vmatpush2.msra.mxu0 0.0
    %3689 = vmatprep.subr.mxu0 0.0
    %3690 = vmatpush2.msra.mxu0 0.0
    %3691 = vmatprep.subr.mxu0 0.0
    %3692 = vmatpush2.msra.mxu0 0.0
    %3693 = vmatprep.subr.mxu0 0.0
    %3694 = vmatpush2.msra.mxu0 0.0
    %3695 = vmatprep.subr.mxu0 0.0
    %3696 = vmatpush2.msra.mxu0 0.0
    %3697 = vmatprep.subr.mxu0 0.0
    %3698 = vmatpush2.msra.mxu0 0.0
    %3699 = vmatprep.subr.mxu0 0.0
    %3700 = vmatpush2.msra.mxu0 0.0
    %3701 = vmatprep.subr.mxu0 0.0
    %3702 = vmatpush2.msra.mxu0 0.0
    %3703 = vmatprep.subr.mxu0 0.0
    %3704 = vmatpush2.msra.mxu0 0.0
    %3705 = vmatprep.mubr.f32.mxu0 0.0
    %3706 = vmatmul.mubr.f32.gmra.mxu0 %v3639
    %v3707 = vpop.f32.mrf.mxu0
    %v3708 = vadd.f32 0.0, %v3707
    %v3709 = vpop.f32.mrf.mxu0
    %3710 = vdwg.mxu0
    %v3712 = vsel %vm1887, %v3193, 0
    %3714 = vmatprep.subr.mxu0 0.0
    %3715 = vmatpush1.msra.mxu0 0.0
    %3716 = vmatprep.subr.mxu0 0.0
    %3717 = vmatpush1.msra.mxu0 0.0
    %3718 = vmatprep.subr.mxu0 0.0
    %3719 = vmatpush1.msra.mxu0 0.0
    %3720 = vmatprep.subr.mxu0 0.0
    %3721 = vmatpush1.msra.mxu0 0.0
    %3722 = vmatprep.subr.mxu0 0.0
    %3723 = vmatpush1.msra.mxu0 0.0
    %3724 = vmatprep.subr.mxu0 0.0
    %3725 = vmatpush1.msra.mxu0 0.0
    %3726 = vmatprep.subr.mxu0 0.0
    %3727 = vmatpush1.msra.mxu0 0.0
    %3728 = vmatprep.subr.mxu0 0.0
    %3729 = vmatpush1.msra.mxu0 0.0
    %3730 = vmatprep.subr.mxu0 0.0
    %3731 = vmatpush1.msra.mxu0 0.0
    %3732 = vmatprep.subr.mxu0 0.0
    %3733 = vmatpush1.msra.mxu0 0.0
    %3734 = vmatprep.subr.mxu0 0.0
    %3735 = vmatpush1.msra.mxu0 0.0
    %3736 = vmatprep.subr.mxu0 0.0
    %3737 = vmatpush1.msra.mxu0 0.0
    %3738 = vmatprep.subr.mxu0 0.0
    %3739 = vmatpush1.msra.mxu0 0.0
    %3740 = vmatprep.subr.mxu0 0.0
    %3741 = vmatpush1.msra.mxu0 0.0
    %3742 = vmatprep.subr.mxu0 0.0
    %3743 = vmatpush1.msra.mxu0 0.0
    %3744 = vmatprep.subr.mxu0 0.0
    %3745 = vmatpush1.msra.mxu0 %v3199
    %3746 = vmatprep.subr.mxu0 0.0
    %3747 = vmatpush2.msra.mxu0 0.0
    %3748 = vmatprep.subr.mxu0 0.0
    %3749 = vmatpush2.msra.mxu0 0.0
    %3750 = vmatprep.subr.mxu0 0.0
    %3751 = vmatpush2.msra.mxu0 0.0
    %3752 = vmatprep.subr.mxu0 0.0
    %3753 = vmatpush2.msra.mxu0 0.0
    %3754 = vmatprep.subr.mxu0 0.0
    %3755 = vmatpush2.msra.mxu0 0.0
    %3756 = vmatprep.subr.mxu0 0.0
    %3757 = vmatpush2.msra.mxu0 0.0
    %3758 = vmatprep.subr.mxu0 0.0
    %3759 = vmatpush2.msra.mxu0 0.0
    %3760 = vmatprep.subr.mxu0 0.0
    %3761 = vmatpush2.msra.mxu0 0.0
    %3762 = vmatprep.subr.mxu0 0.0
    %3763 = vmatpush2.msra.mxu0 0.0
    %3764 = vmatprep.subr.mxu0 0.0
    %3765 = vmatpush2.msra.mxu0 0.0
    %3766 = vmatprep.subr.mxu0 0.0
    %3767 = vmatpush2.msra.mxu0 0.0
    %3768 = vmatprep.subr.mxu0 0.0
    %3769 = vmatpush2.msra.mxu0 0.0
    %3770 = vmatprep.subr.mxu0 0.0
    %3771 = vmatpush2.msra.mxu0 0.0
    %3772 = vmatprep.subr.mxu0 0.0
    %3773 = vmatpush2.msra.mxu0 0.0
    %3774 = vmatprep.subr.mxu0 0.0
    %3775 = vmatpush2.msra.mxu0 0.0
    %3776 = vmatprep.subr.mxu0 0.0
    %3777 = vmatpush2.msra.mxu0 0.0
    %3778 = vmatprep.mubr.f32.mxu0 0.0
    %3779 = vmatmul.mubr.f32.gmra.mxu0 %v3712
    %v3780 = vpop.f32.mrf.mxu0
    %v3781 = vadd.f32 0.0, %v3780
    %v3782 = vpop.f32.mrf.mxu0
    %3783 = vdwg.mxu0
    %v3784 = vsel %vm112, %v3270, 0.0
    %v3785 = vsel %vm112, %v3343, 0.0
    %v3786 = vadd.f32 %v3784, %v3785
    %v3787 = vsel %vm112, %v3416, 0.0
    %v3788 = vadd.f32 %v3786, %v3787
    %v3789 = vsel %vm112, %v3489, 0.0
    %v3790 = vadd.f32 %v3788, %v3789
    %v3791 = vsel %vm112, %v3562, 0.0
    %v3792 = vsel %vm112, %v3635, 0.0
    %v3793 = vadd.f32 %v3791, %v3792
    %v3794 = vsel %vm112, %v3708, 0.0
    %v3795 = vadd.f32 %v3793, %v3794
    %v3796 = vsel %vm112, %v3781, 0.0
    %v3797 = vadd.f32 %v3795, %v3796
    %v3798 = vld [vmem:[%s9] sm:$0x1]
    %v3800 = vlaneseq
    %v3801 = vshrl.u32 %v3800, 7
    %v3802 = vsub.s32 0, %v3801
    %v3803 = vrot.slane %v3798, %v3802
    %v3805 = vadd.f32 %v3790, %v3803
    %v3806 = vadd.f32 %v3797, %v3803
    %v3807 = vadd.f32 %v60, %v3805
    %v3808 = vadd.f32 %v61, %v3806
    %v3809 = vsel %vm112, %v3807, 0.0
    %3810 = vadd.xlane.f32.xlu0 %v3809
    %v3811 = vpop.xlane.xlu0 %3810
    %v3812 = vsel %vm112, %v3808, 0.0
    %3813 = vadd.xlane.f32.xlu0 %v3812
    %v3814 = vpop.xlane.xlu0 %3813
    %v3815 = vrcp.pop 32.0
    %v3816 = vmul.f32 %v3811, %v3815
    %v3817 = vmul.f32 %v3814, %v3815
    %v3818 = vsub.f32 %v3807, %v3816
    %v3819 = vsub.f32 %v3808, %v3817
    %v3820 = vmul.f32 %v3818, %v3818
    %v3821 = vmul.f32 %v3819, %v3819
    %v3822 = vsel %vm112, %v3820, 0.0
    %3823 = vadd.xlane.f32.xlu0 %v3822
    %v3824 = vpop.xlane.xlu0 %3823
    %v3825 = vsel %vm112, %v3821, 0.0
    %3826 = vadd.xlane.f32.xlu0 %v3825
    %v3827 = vpop.xlane.xlu0 %3826
    %v3828 = vmul.f32 %v3824, %v3815
    %v3829 = vmul.f32 %v3827, %v3815
    %v3830 = vadd.f32 %v3828, 1e-05
    %v3831 = vadd.f32 %v3829, 1e-05
    %v3832 = vrsqrt.pop %v3830
    %v3833 = vrsqrt.pop %v3831
    %v3834 = vmul.f32 %v3818, %v3832
    %v3835 = vmul.f32 %v3819, %v3833
    %v3836 = vld [vmem:[%s10] sm:$0x1]
    %v3838 = vlaneseq
    %v3839 = vshrl.u32 %v3838, 7
    %v3840 = vsub.s32 0, %v3839
    %v3841 = vrot.slane %v3836, %v3840
    %v3843 = vmul.f32 %v3834, %v3841
    %v3844 = vmul.f32 %v3835, %v3841
    %v3845 = vld [vmem:[%s11] sm:$0x1]
    %v3847 = vlaneseq
    %v3848 = vshrl.u32 %v3847, 7
    %v3849 = vsub.s32 0, %v3848
    %v3850 = vrot.slane %v3845, %v3849
    %v3852 = vadd.f32 %v3843, %v3850
    %v3853 = vadd.f32 %v3844, %v3850
    %v3854 = vld [vmem:[%s14] sm:$0xff]
    %v3855 = vld [vmem:[%s14 + $0x8] sm:$0xff]
    %v3856 = vld [vmem:[%s14 + $0x10] sm:$0xff]
    %v3857 = vld [vmem:[%s14 + $0x18] sm:$0xff]
    %v3858 = vld [vmem:[%s15] sm:$0x1]
    %v3860 = vlaneseq
    %v3861 = vshrl.u32 %v3860, 7
    %v3862 = vsub.s32 0, %v3861
    %v3863 = vrot.slane %v3858, %v3862
    %v3866 = vsel %vm112, %v3852, 0
    %v3869 = vsel %vm112, %v3853, 0
    %3871 = vmatprep.subr.mxu0 0.0
    %3872 = vmatpush1.msra.mxu0 0.0
    %3873 = vmatprep.subr.mxu0 0.0
    %3874 = vmatpush1.msra.mxu0 0.0
    %3875 = vmatprep.subr.mxu0 0.0
    %3876 = vmatpush1.msra.mxu0 0.0
    %3877 = vmatprep.subr.mxu0 0.0
    %3878 = vmatpush1.msra.mxu0 0.0
    %3879 = vmatprep.subr.mxu0 0.0
    %3880 = vmatpush1.msra.mxu0 0.0
    %3881 = vmatprep.subr.mxu0 0.0
    %3882 = vmatpush1.msra.mxu0 0.0
    %3883 = vmatprep.subr.mxu0 0.0
    %3884 = vmatpush1.msra.mxu0 0.0
    %3885 = vmatprep.subr.mxu0 0.0
    %3886 = vmatpush1.msra.mxu0 0.0
    %3887 = vmatprep.subr.mxu0 0.0
    %3888 = vmatpush1.msra.mxu0 0.0
    %3889 = vmatprep.subr.mxu0 0.0
    %3890 = vmatpush1.msra.mxu0 0.0
    %3891 = vmatprep.subr.mxu0 0.0
    %3892 = vmatpush1.msra.mxu0 0.0
    %3893 = vmatprep.subr.mxu0 0.0
    %3894 = vmatpush1.msra.mxu0 0.0
    %3895 = vmatprep.subr.mxu0 0.0
    %3896 = vmatpush1.msra.mxu0 %v3857
    %3897 = vmatprep.subr.mxu0 0.0
    %3898 = vmatpush1.msra.mxu0 %v3856
    %3899 = vmatprep.subr.mxu0 0.0
    %3900 = vmatpush1.msra.mxu0 %v3855
    %3901 = vmatprep.subr.mxu0 0.0
    %3902 = vmatpush1.msra.mxu0 %v3854
    %3903 = vmatprep.subr.mxu0 0.0
    %3904 = vmatpush2.msra.mxu0 0.0
    %3905 = vmatprep.subr.mxu0 0.0
    %3906 = vmatpush2.msra.mxu0 0.0
    %3907 = vmatprep.subr.mxu0 0.0
    %3908 = vmatpush2.msra.mxu0 0.0
    %3909 = vmatprep.subr.mxu0 0.0
    %3910 = vmatpush2.msra.mxu0 0.0
    %3911 = vmatprep.subr.mxu0 0.0
    %3912 = vmatpush2.msra.mxu0 0.0
    %3913 = vmatprep.subr.mxu0 0.0
    %3914 = vmatpush2.msra.mxu0 0.0
    %3915 = vmatprep.subr.mxu0 0.0
    %3916 = vmatpush2.msra.mxu0 0.0
    %3917 = vmatprep.subr.mxu0 0.0
    %3918 = vmatpush2.msra.mxu0 0.0
    %3919 = vmatprep.subr.mxu0 0.0
    %3920 = vmatpush2.msra.mxu0 0.0
    %3921 = vmatprep.subr.mxu0 0.0
    %3922 = vmatpush2.msra.mxu0 0.0
    %3923 = vmatprep.subr.mxu0 0.0
    %3924 = vmatpush2.msra.mxu0 0.0
    %3925 = vmatprep.subr.mxu0 0.0
    %3926 = vmatpush2.msra.mxu0 0.0
    %3927 = vmatprep.subr.mxu0 0.0
    %3928 = vmatpush2.msra.mxu0 0.0
    %3929 = vmatprep.subr.mxu0 0.0
    %3930 = vmatpush2.msra.mxu0 0.0
    %3931 = vmatprep.subr.mxu0 0.0
    %3932 = vmatpush2.msra.mxu0 0.0
    %3933 = vmatprep.subr.mxu0 0.0
    %3934 = vmatpush2.msra.mxu0 0.0
    %3935 = vmatprep.mubr.f32.mxu0 0.0
    %3936 = vmatmul.mubr.f32.gmra.mxu0 %v3866
    %v3937 = vpop.f32.mrf.mxu0
    %v3938 = vadd.f32 %v3863, %v3937
    %v3939 = vpop.f32.mrf.mxu0
    %3940 = vmatprep.mubr.f32.mxu0 0.0
    %3941 = vmatmul.mubr.f32.gmra.mxu0 %v3869
    %v3942 = vpop.f32.mrf.mxu0
    %v3943 = vadd.f32 %v3863, %v3942
    %v3944 = vpop.f32.mrf.mxu0
    %3945 = vdwg.mxu0
    %v3946 = vmax.f32 %v3938, 0.0
    %v3947 = vmax.f32 %v3943, 0.0
    %v3948 = vld [vmem:[%s16] sm:$0xff]
    %v3949 = vld [vmem:[%s16 + $0x8] sm:$0xff]
    %v3950 = vld [vmem:[%s16 + $0x10] sm:$0xff]
    %v3951 = vld [vmem:[%s16 + $0x18] sm:$0xff]
    %v3952 = vld [vmem:[%s16 + $0x20] sm:$0xff]
    %v3953 = vld [vmem:[%s16 + $0x28] sm:$0xff]
    %v3954 = vld [vmem:[%s16 + $0x30] sm:$0xff]
    %v3955 = vld [vmem:[%s16 + $0x38] sm:$0xff]
    %v3956 = vld [vmem:[%s17] sm:$0x1]
    %v3958 = vlaneseq
    %v3959 = vshrl.u32 %v3958, 7
    %v3960 = vsub.s32 0, %v3959
    %v3961 = vrot.slane %v3956, %v3960
    %vm3963 = vcmask 523264
    %v3965 = vsel %vm3963, %v3946, 0
    %v3968 = vsel %vm3963, %v3947, 0
    %3970 = vmatprep.subr.mxu0 0.0
    %3971 = vmatpush1.msra.mxu0 0.0
    %3972 = vmatprep.subr.mxu0 0.0
    %3973 = vmatpush1.msra.mxu0 0.0
    %3974 = vmatprep.subr.mxu0 0.0
    %3975 = vmatpush1.msra.mxu0 0.0
    %3976 = vmatprep.subr.mxu0 0.0
    %3977 = vmatpush1.msra.mxu0 0.0
    %3978 = vmatprep.subr.mxu0 0.0
    %3979 = vmatpush1.msra.mxu0 0.0
    %3980 = vmatprep.subr.mxu0 0.0
    %3981 = vmatpush1.msra.mxu0 0.0
    %3982 = vmatprep.subr.mxu0 0.0
    %3983 = vmatpush1.msra.mxu0 0.0
    %3984 = vmatprep.subr.mxu0 0.0
    %3985 = vmatpush1.msra.mxu0 0.0
    %3986 = vmatprep.subr.mxu0 0.0
    %3987 = vmatpush1.msra.mxu0 %v3955
    %3988 = vmatprep.subr.mxu0 0.0
    %3989 = vmatpush1.msra.mxu0 %v3954
    %3990 = vmatprep.subr.mxu0 0.0
    %3991 = vmatpush1.msra.mxu0 %v3953
    %3992 = vmatprep.subr.mxu0 0.0
    %3993 = vmatpush1.msra.mxu0 %v3952
    %3994 = vmatprep.subr.mxu0 0.0
    %3995 = vmatpush1.msra.mxu0 %v3951
    %3996 = vmatprep.subr.mxu0 0.0
    %3997 = vmatpush1.msra.mxu0 %v3950
    %3998 = vmatprep.subr.mxu0 0.0
    %3999 = vmatpush1.msra.mxu0 %v3949
    %4000 = vmatprep.subr.mxu0 0.0
    %4001 = vmatpush1.msra.mxu0 %v3948
    %4002 = vmatprep.subr.mxu0 0.0
    %4003 = vmatpush2.msra.mxu0 0.0
    %4004 = vmatprep.subr.mxu0 0.0
    %4005 = vmatpush2.msra.mxu0 0.0
    %4006 = vmatprep.subr.mxu0 0.0
    %4007 = vmatpush2.msra.mxu0 0.0
    %4008 = vmatprep.subr.mxu0 0.0
    %4009 = vmatpush2.msra.mxu0 0.0
    %4010 = vmatprep.subr.mxu0 0.0
    %4011 = vmatpush2.msra.mxu0 0.0
    %4012 = vmatprep.subr.mxu0 0.0
    %4013 = vmatpush2.msra.mxu0 0.0
    %4014 = vmatprep.subr.mxu0 0.0
    %4015 = vmatpush2.msra.mxu0 0.0
    %4016 = vmatprep.subr.mxu0 0.0
    %4017 = vmatpush2.msra.mxu0 0.0
    %4018 = vmatprep.subr.mxu0 0.0
    %4019 = vmatpush2.msra.mxu0 0.0
    %4020 = vmatprep.subr.mxu0 0.0
    %4021 = vmatpush2.msra.mxu0 0.0
    %4022 = vmatprep.subr.mxu0 0.0
    %4023 = vmatpush2.msra.mxu0 0.0
    %4024 = vmatprep.subr.mxu0 0.0
    %4025 = vmatpush2.msra.mxu0 0.0
    %4026 = vmatprep.subr.mxu0 0.0
    %4027 = vmatpush2.msra.mxu0 0.0
    %4028 = vmatprep.subr.mxu0 0.0
    %4029 = vmatpush2.msra.mxu0 0.0
    %4030 = vmatprep.subr.mxu0 0.0
    %4031 = vmatpush2.msra.mxu0 0.0
    %4032 = vmatprep.subr.mxu0 0.0
    %4033 = vmatpush2.msra.mxu0 0.0
    %4034 = vmatprep.mubr.f32.mxu0 0.0
    %4035 = vmatmul.mubr.f32.gmra.mxu0 %v3965
    %v4036 = vpop.f32.mrf.mxu0
    %v4037 = vadd.f32 %v3961, %v4036
    %v4038 = vpop.f32.mrf.mxu0
    %4039 = vmatprep.mubr.f32.mxu0 0.0
    %4040 = vmatmul.mubr.f32.gmra.mxu0 %v3968
    %v4041 = vpop.f32.mrf.mxu0
    %v4042 = vadd.f32 %v3961, %v4041
    %v4043 = vpop.f32.mrf.mxu0
    %4044 = vdwg.mxu0
    %v4045 = vadd.f32 %v3852, %v4037
    %v4046 = vadd.f32 %v3853, %v4042
    %v4047 = vsel %vm112, %v4045, 0.0
    %4048 = vadd.xlane.f32.xlu0 %v4047
    %v4049 = vpop.xlane.xlu0 %4048
    %v4050 = vsel %vm112, %v4046, 0.0
    %4051 = vadd.xlane.f32.xlu0 %v4050
    %v4052 = vpop.xlane.xlu0 %4051
    %v4053 = vmul.f32 %v4049, %v3815
    %v4054 = vmul.f32 %v4052, %v3815
    %v4055 = vsub.f32 %v4045, %v4053
    %v4056 = vsub.f32 %v4046, %v4054
    %v4057 = vmul.f32 %v4055, %v4055
    %v4058 = vmul.f32 %v4056, %v4056
    %v4059 = vsel %vm112, %v4057, 0.0
    %4060 = vadd.xlane.f32.xlu0 %v4059
    %v4061 = vpop.xlane.xlu0 %4060
    %v4062 = vsel %vm112, %v4058, 0.0
    %4063 = vadd.xlane.f32.xlu0 %v4062
    %v4064 = vpop.xlane.xlu0 %4063
    %v4065 = vmul.f32 %v4061, %v3815
    %v4066 = vmul.f32 %v4064, %v3815
    %v4067 = vadd.f32 %v4065, 1e-05
    %v4068 = vadd.f32 %v4066, 1e-05
    %v4069 = vrsqrt.pop %v4067
    %v4070 = vrsqrt.pop %v4068
    %v4071 = vmul.f32 %v4055, %v4069
    %v4072 = vmul.f32 %v4056, %v4070
    %v4073 = vld [vmem:[%s12] sm:$0x1]
    %v4075 = vlaneseq
    %v4076 = vshrl.u32 %v4075, 7
    %v4077 = vsub.s32 0, %v4076
    %v4078 = vrot.slane %v4073, %v4077
    %v4080 = vmul.f32 %v4071, %v4078
    %v4081 = vmul.f32 %v4072, %v4078
    %v4082 = vld [vmem:[%s13] sm:$0x1]
    %v4084 = vlaneseq
    %v4085 = vshrl.u32 %v4084, 7
    %v4086 = vsub.s32 0, %v4085
    %v4087 = vrot.slane %v4082, %v4086
    %v4089 = vadd.f32 %v4080, %v4087
    %v4090 = vadd.f32 %v4081, %v4087
    %v4091 = vmax.f32 %v4089, 0.0
    %v4092 = vmax.f32 %v4090, 0.0
    %4093 = vst.msk [vmem:[#allocation2] sm:$0xff] %vm112, %v4091
    %4094 = vst.msk [vmem:[#allocation2 + $0x8] sm:$0xff] %vm112, %v4092
    // Predicated region
    $region74: #{tpu_custom_call.1} parent=1 // pred_check
      _
    $region75: #{tpu_custom_call.1} parent=1 // pred_check_branch
      %4096 = sbr.rel (0) target = $region77
    $region76: #{tpu_custom_call.1} parent=1 // pred_region
      %s4098 = ssub.s32 256, 256
      %4099 = vsyncadd [#allocation3], %s4098
      %s4100 = sshll.u32 [#allocation2], 4
      %s4101 = int_to_ptr.vmem [resolvable:$true] %s4100
      %4106 = dma.vmem_to_hbm [thread:$0]  %s4101, 256, %s18, [#allocation3], 128, 128, 8
    $region77: #{tpu_custom_call.1} parent=1 // pred_fallthru
      _
    // Predicated region
    $region78: #{tpu_custom_call.1} parent=1 // pred_check
      _
    $region79: #{tpu_custom_call.1} parent=1 // pred_check_branch
      %4108 = sbr.rel (0) target = $region81
    $region80: #{tpu_custom_call.1} parent=1 // pred_region
      %4109 = dma.done [#allocation3], 256
    $region81: #{tpu_custom_call.1} parent=1 // pred_fallthru
      _
    %4110 = vsyncpa [#allocation3], 1

</llo_original>
